<compile_context>
chip_gen: v7x
topology: tpu7x:2x2x1
jax: 0.10.0
libtpu: 0.0.40
codegen_flags: <defaults>
</compile_context>

<pallas_src>
import functools

import jax
import jax.numpy as jnp
from jax.experimental import pallas as pl
from jax.experimental.pallas import tpu as pltpu


def _sigmoid_ref(z):
    return 1.0 / (1.0 + jnp.exp(-z))


def _sigmoid_eup(z):
    # sigmoid(z) == 0.5 * tanh(0.5 * z) + 0.5 ; tanh runs on the EUP slot.
    return 0.5 * jnp.tanh(0.5 * z) + 0.5


# ----------------------------------------------------------------------------
# Pallas kernel: one ConvLSTM cell step for one batch element.
# ----------------------------------------------------------------------------
def _convlstm_cell_kernel(xh_ref, c_ref, w_ref, b_ref, wpeep_ref,
                          h_out_ref, c_out_ref, lhs_ref, *, H, W, K, C2, Ch):
    HW = H * W
    xh = xh_ref[0]                      # (H+K-1, W+K-1, Cin+Ch) bf16

    # im2col: write the K*K shifted windows once into the VMEM scratch LHS,
    # column order (tap, [x-channels | h-channels]) matching w_ref's rows.
    for kh in range(K):
        for kw in range(K):
            tap = kh * K + kw
            lhs_ref[:, tap * C2:(tap + 1) * C2] = (
                xh[kh:kh + H, kw:kw + W, :].reshape(HW, C2))

    # Single fused MXU matmul for all 4 gates of both conv paths; bias
    # (x-convs only, matches torch) is added in the same f32 pass.
    acc = jnp.dot(lhs_ref[...], w_ref[...],
                  preferred_element_type=jnp.float32) + b_ref[...]

    gi = acc[:, 0 * Ch:1 * Ch]
    gf = acc[:, 1 * Ch:2 * Ch]
    gc = acc[:, 2 * Ch:3 * Ch]
    go = acc[:, 3 * Ch:4 * Ch]

    c_prev = c_ref[0]                   # (HW, Ch) f32
    wci = wpeep_ref[0]
    wcf = wpeep_ref[1]
    wco = wpeep_ref[2]

    ci = _sigmoid_eup(gi + c_prev * wci)
    cf = _sigmoid_eup(gf + c_prev * wcf)
    cc = cf * c_prev + ci * jnp.tanh(gc)
    co = _sigmoid_eup(go + cc * wco)
    ch = co * jnp.tanh(cc)

    h_out_ref[0] = ch.astype(h_out_ref.dtype)
    c_out_ref[0] = cc.astype(c_out_ref.dtype)


# ----------------------------------------------------------------------------
# Per-layer weight preparation (hoisted out of the per-timestep path).
# ----------------------------------------------------------------------------
def prepare_pallas_params(layer_params):
    wx, wh, b, wpeep = layer_params     # wx:(K*K,Cin,4Ch) wh:(K*K,Ch,4Ch) wpeep:(3,H,W,Ch)
    KK, Cin, C4 = wx.shape
    Ch = wh.shape[1]
    K = int(round(KK ** 0.5))
    # Fused gate weights, rows ordered (tap, [x-channels | h-channels]), bf16.
    w_fused = jnp.concatenate([wx, wh], axis=1).reshape(
        KK * (Cin + Ch), C4).astype(jnp.bfloat16)
    _, Hh, Ww, _ = wpeep.shape
    wpeep_flat = wpeep.reshape(3, Hh * Ww, Ch).astype(jnp.float32)
    return (w_fused, b.astype(jnp.float32), wpeep_flat, K, Cin, Ch)


# ----------------------------------------------------------------------------
# Wrapper: NHWC state in / NHWC state out, single pad + one pallas_call.
# ----------------------------------------------------------------------------
def pallas_cell_step(x, h, c, layer_params):
    """x, h, c: NHWC (B, H, W, C) float32; returns (h_new, c_new) NHWC f32."""
    w_fused, b, wpeep, K, Cin, Ch = layer_params
    p = (K - 1) // 2
    B, H, W, _ = x.shape
    C2 = Cin + Ch
    HW = H * W
    Hp, Wp = H + K - 1, W + K - 1

    # One pad of the concatenated [x, h] (bf16 MXU operands); no per-step
    # NCHW<->NHWC transposes anywhere in the recurrence.
    xh = jnp.concatenate([x, h], axis=-1).astype(jnp.bfloat16)
    xh_pad = jnp.pad(xh, ((0, 0), (p, p), (p, p), (0, 0)))
    c_flat = c.reshape(B, HW, Ch)

    kernel = functools.partial(_convlstm_cell_kernel,
                               H=H, W=W, K=K, C2=C2, Ch=Ch)
    h_new, c_new = pl.pallas_call(
        kernel,
        out_shape=(jax.ShapeDtypeStruct((B, HW, Ch), jnp.float32),
                   jax.ShapeDtypeStruct((B, HW, Ch), jnp.float32)),
        grid_spec=pltpu.PrefetchScalarGridSpec(
            num_scalar_prefetch=0,
            grid=(B,),
            in_specs=[
                pl.BlockSpec((1, Hp, Wp, C2), lambda bb: (bb, 0, 0, 0)),
                pl.BlockSpec((1, HW, Ch), lambda bb: (bb, 0, 0)),
                pl.BlockSpec((K * K * C2, 4 * Ch), lambda bb: (0, 0)),
                pl.BlockSpec((1, 4 * Ch), lambda bb: (0, 0)),
                pl.BlockSpec((3, HW, Ch), lambda bb: (0, 0, 0)),
            ],
            out_specs=[
                pl.BlockSpec((1, HW, Ch), lambda bb: (bb, 0, 0)),
                pl.BlockSpec((1, HW, Ch), lambda bb: (bb, 0, 0)),
            ],
            scratch_shapes=[pltpu.VMEM((HW, K * K * C2), jnp.bfloat16)],
        ),
        input_output_aliases={1: 1},     # reuse c's HBM buffer for c_new
        compiler_params=pltpu.CompilerParams(
            dimension_semantics=("parallel",)),
        # TODO(synk): for production shapes (H,W >= 64, Ch >= 128) add an
        # H-tiled "parallel" grid axis with K-1 halo rows and an explicit
        # vmem_limit_bytes so the plan fits v7x's 64 MiB VMEM / 2 TCs; at
        # these demo sizes a single (B,) axis already fits comfortably.
    )(xh_pad, c_flat, w_fused, b, wpeep)

    return h_new.reshape(B, H, W, Ch), c_new.reshape(B, H, W, Ch)


# ----------------------------------------------------------------------------
# Pure-JAX reference cell (lax.conv, f32 HIGHEST), NHWC.
# ----------------------------------------------------------------------------
def ref_cell_step(x, h, c, layer_params):
    wx, wh, b, wpeep = layer_params
    K = int(round(wx.shape[0] ** 0.5))
    Cin = x.shape[-1]
    Ch = h.shape[-1]
    wx4 = wx.reshape(K, K, Cin, 4 * Ch)
    wh4 = wh.reshape(K, K, Ch, 4 * Ch)

    def conv(inp, w_hwio):
        return jax.lax.conv_general_dilated(
            inp, w_hwio, window_strides=(1, 1), padding='SAME',
            dimension_numbers=('NHWC', 'HWIO', 'NHWC'),
            precision=jax.lax.Precision.HIGHEST)

    def gate(g):
        bx = b[0, g * Ch:(g + 1) * Ch][None, None, None, :]
        return (conv(x, wx4[..., g * Ch:(g + 1) * Ch]) + bx
                + conv(h, wh4[..., g * Ch:(g + 1) * Ch]))

    wci, wcf, wco = wpeep[0][None], wpeep[1][None], wpeep[2][None]
    ci = _sigmoid_ref(gate(0) + c * wci)
    cf = _sigmoid_ref(gate(1) + c * wcf)
    cc = cf * c + ci * jnp.tanh(gate(2))
    co = _sigmoid_ref(gate(3) + cc * wco)
    ch = co * jnp.tanh(cc)
    return ch, cc


# ----------------------------------------------------------------------------
# ConvLSTM.forward equivalent (state kept NHWC across the recurrence).
# ----------------------------------------------------------------------------
def conv_lstm_forward(cell_fn, cells_params, inputs, *, hidden_channels,
                      step, effective_step, height, width):
    # inputs: (T, B, H, W, C_in) NHWC frames.
    # TODO(synk): the external `seq` preprocessor module passed to forward() is
    #             unspecified; it is treated as the identity map.
    # TODO(synk): nn.Dropout(0.7) is stochastic in training mode; implemented
    #             as inference-mode identity.
    T, B = inputs.shape[0], inputs.shape[1]
    num_layers = len(hidden_channels)
    xout = jnp.zeros((T, B, height, width, hidden_channels[0]), jnp.float32)
    internal = [None] * num_layers
    outputs = []
    for s in range(step):
        if s < 2:
            x = inputs[s]                       # seq(x) == x
            xout = xout.at[s].set(x)
        else:
            x = xout[0]
        for i in range(num_layers):
            if s == 0:
                h0 = jnp.zeros((B, height, width, hidden_channels[i]),
                               jnp.float32)
                c0 = jnp.zeros_like(h0)
                internal[i] = (h0, c0)
            h, c = internal[i]
            h_new, c_new = cell_fn(x, h, c, cells_params[i])
            internal[i] = (h_new, c_new)
            x = h_new                           # dropout -> identity (eval)
        if s in effective_step:
            outputs.append(x)
    return outputs, xout


# ----------------------------------------------------------------------------
if __name__ == "__main__":
    key = jax.random.PRNGKey(0)

    # Small, forward-consistent configuration (seq == identity requires
    # input_channels == hidden_channels[0]).
    T, B = 3, 2
    H = W = 16
    input_channels = 8
    hidden_channels = [8, 8]
    K = 3
    step = 3
    effective_step = [1, 2]

    in_chs = [input_channels] + hidden_channels
    params = []
    for i, Ch in enumerate(hidden_channels):
        Cin = in_chs[i]
        key, k1, k2, k3, k4 = jax.random.split(key, 5)
        # Stacked gate weights, gate order [i, f, c, o] along the last axis.
        wx = (0.1 * jax.random.normal(k1, (K * K, Cin, 4 * Ch))).astype(jnp.float32)
        wh = (0.1 * jax.random.normal(k2, (K * K, Ch, 4 * Ch))).astype(jnp.float32)
        b = (0.1 * jax.random.normal(k3, (1, 4 * Ch))).astype(jnp.float32)
        # Peephole weights Wci/Wcf/Wco stored NHWC-style as (3, H, W, Ch).
        wp = (0.1 * jax.random.normal(k4, (3, H, W, Ch))).astype(jnp.float32)
        params.append((wx, wh, b, wp))

    # Per-layer kernel-side weight layout (fused bf16 weights, flat peepholes),
    # computed once, outside the recurrence.
    pallas_params = [prepare_pallas_params(p) for p in params]

    key, kx = jax.random.split(key)
    # torch-style NCHW frames, converted ONCE to NHWC at the model boundary.
    input_seq_nchw = jax.random.normal(kx, (T, B, input_channels, H, W),
                                       dtype=jnp.float32)
    input_seq = jnp.transpose(input_seq_nchw, (0, 1, 3, 4, 2))

    outputs, xout = conv_lstm_forward(
        pallas_cell_step, pallas_params, input_seq,
        hidden_channels=hidden_channels, step=step,
        effective_step=effective_step, height=H, width=W)
    outputs = [jax.block_until_ready(o) for o in outputs]
    xout = jax.block_until_ready(xout)

    # Verify against a pure-JAX (lax.conv, f32) reference of the same forward.
    ref_outputs, ref_xout = conv_lstm_forward(
        ref_cell_step, params, input_seq,
        hidden_channels=hidden_channels, step=step,
        effective_step=effective_step, height=H, width=W)
    # bf16 MXU operands in the Pallas path vs f32 HIGHEST reference -> slightly
    # looser tolerance than a pure f32 comparison.
    for o, r in zip(outputs, ref_outputs):
        assert o.shape == r.shape
        assert jnp.allclose(o, r, atol=3e-2, rtol=3e-2)
    assert jnp.allclose(xout, ref_xout, atol=3e-2, rtol=3e-2)

    print("KERNEL_OK")
</pallas_src>

<mosaic_0001>
module attributes {stable_mosaic.version = 11 : i64} {
  func.func @_convlstm_cell_kernel(%arg0: i32, %arg1: memref<1x18x18x16xbf16, #tpu.memory_space<vmem>>, %arg2: memref<1x256x8xf32, #tpu.memory_space<vmem>>, %arg3: memref<144x32xbf16, #tpu.memory_space<vmem>>, %arg4: memref<1x32xf32, #tpu.memory_space<vmem>>, %arg5: memref<3x256x8xf32, #tpu.memory_space<vmem>>, %arg6: memref<1x256x8xf32, #tpu.memory_space<vmem>>, %arg7: memref<1x256x8xf32, #tpu.memory_space<vmem>>, %arg8: memref<256x144xbf16, #tpu.memory_space<vmem>>) attributes {dimension_semantics = [#tpu.dimension_semantics<parallel>], iteration_bounds = array<i64: 2>, scalar_prefetch = 0 : i64, scratch_operands = 1 : i64, tpu.core_type = #tpu.core_type<tc>, window_params = [{transform_indices = @transform_0, window_bounds = array<i64: 1, 18, 18, 16>}, {transform_indices = @transform_1, window_bounds = array<i64: 1, 256, 8>}, {pipeline_mode = #tpu.pipeline_mode<synchronous>, transform_indices = @transform_2, window_bounds = array<i64: 144, 32>}, {pipeline_mode = #tpu.pipeline_mode<synchronous>, transform_indices = @transform_3, window_bounds = array<i64: 1, 32>}, {pipeline_mode = #tpu.pipeline_mode<synchronous>, transform_indices = @transform_4, window_bounds = array<i64: 3, 256, 8>}, {transform_indices = @transform_5, window_bounds = array<i64: 1, 256, 8>}, {transform_indices = @transform_6, window_bounds = array<i64: 1, 256, 8>}]} {
    %c0 = arith.constant 0 : index
    %c0_0 = arith.constant 0 : index
    %c0_1 = arith.constant 0 : index
    %c0_2 = arith.constant 0 : index
    %0 = vector.load %arg1[%c0, %c0_0, %c0_1, %c0_2] : memref<1x18x18x16xbf16, #tpu.memory_space<vmem>>, vector<1x18x18x16xbf16>
    %1 = vector.shape_cast %0 : vector<1x18x18x16xbf16> to vector<18x18x16xbf16>
    %2 = vector.extract_strided_slice %1 {offsets = [0, 0, 0], sizes = [16, 16, 16], strides = [1, 1, 1]} : vector<18x18x16xbf16> to vector<16x16x16xbf16>
    %3 = vector.shape_cast %2 : vector<16x16x16xbf16> to vector<256x16xbf16>
    %c0_3 = arith.constant 0 : index
    %c0_4 = arith.constant 0 : index
    %4 = vector.load %arg8[%c0_3, %c0_4] : memref<256x144xbf16, #tpu.memory_space<vmem>>, vector<256x16xbf16>
    tpu.vector_store %arg8[%c0_3, %c0_4], %3 {strides = array<i32>} : memref<256x144xbf16, #tpu.memory_space<vmem>>, vector<256x16xbf16>,
    %5 = vector.extract_strided_slice %1 {offsets = [0, 1, 0], sizes = [16, 16, 16], strides = [1, 1, 1]} : vector<18x18x16xbf16> to vector<16x16x16xbf16>
    %6 = vector.shape_cast %5 : vector<16x16x16xbf16> to vector<256x16xbf16>
    %c0_5 = arith.constant 0 : index
    %c16 = arith.constant 16 : index
    %7 = vector.load %arg8[%c0_5, %c16] : memref<256x144xbf16, #tpu.memory_space<vmem>>, vector<256x16xbf16>
    tpu.vector_store %arg8[%c0_5, %c16], %6 {strides = array<i32>} : memref<256x144xbf16, #tpu.memory_space<vmem>>, vector<256x16xbf16>,
    %8 = vector.extract_strided_slice %1 {offsets = [0, 2, 0], sizes = [16, 16, 16], strides = [1, 1, 1]} : vector<18x18x16xbf16> to vector<16x16x16xbf16>
    %9 = vector.shape_cast %8 : vector<16x16x16xbf16> to vector<256x16xbf16>
    %c0_6 = arith.constant 0 : index
    %c32 = arith.constant 32 : index
    %10 = vector.load %arg8[%c0_6, %c32] : memref<256x144xbf16, #tpu.memory_space<vmem>>, vector<256x16xbf16>
    tpu.vector_store %arg8[%c0_6, %c32], %9 {strides = array<i32>} : memref<256x144xbf16, #tpu.memory_space<vmem>>, vector<256x16xbf16>,
    %11 = vector.extract_strided_slice %1 {offsets = [1, 0, 0], sizes = [16, 16, 16], strides = [1, 1, 1]} : vector<18x18x16xbf16> to vector<16x16x16xbf16>
    %12 = vector.shape_cast %11 : vector<16x16x16xbf16> to vector<256x16xbf16>
    %c0_7 = arith.constant 0 : index
    %c48 = arith.constant 48 : index
    %13 = vector.load %arg8[%c0_7, %c48] : memref<256x144xbf16, #tpu.memory_space<vmem>>, vector<256x16xbf16>
    tpu.vector_store %arg8[%c0_7, %c48], %12 {strides = array<i32>} : memref<256x144xbf16, #tpu.memory_space<vmem>>, vector<256x16xbf16>,
    %14 = vector.extract_strided_slice %1 {offsets = [1, 1, 0], sizes = [16, 16, 16], strides = [1, 1, 1]} : vector<18x18x16xbf16> to vector<16x16x16xbf16>
    %15 = vector.shape_cast %14 : vector<16x16x16xbf16> to vector<256x16xbf16>
    %c0_8 = arith.constant 0 : index
    %c64 = arith.constant 64 : index
    %16 = vector.load %arg8[%c0_8, %c64] : memref<256x144xbf16, #tpu.memory_space<vmem>>, vector<256x16xbf16>
    tpu.vector_store %arg8[%c0_8, %c64], %15 {strides = array<i32>} : memref<256x144xbf16, #tpu.memory_space<vmem>>, vector<256x16xbf16>,
    %17 = vector.extract_strided_slice %1 {offsets = [1, 2, 0], sizes = [16, 16, 16], strides = [1, 1, 1]} : vector<18x18x16xbf16> to vector<16x16x16xbf16>
    %18 = vector.shape_cast %17 : vector<16x16x16xbf16> to vector<256x16xbf16>
    %c0_9 = arith.constant 0 : index
    %c80 = arith.constant 80 : index
    %19 = vector.load %arg8[%c0_9, %c80] : memref<256x144xbf16, #tpu.memory_space<vmem>>, vector<256x16xbf16>
    tpu.vector_store %arg8[%c0_9, %c80], %18 {strides = array<i32>} : memref<256x144xbf16, #tpu.memory_space<vmem>>, vector<256x16xbf16>,
    %20 = vector.extract_strided_slice %1 {offsets = [2, 0, 0], sizes = [16, 16, 16], strides = [1, 1, 1]} : vector<18x18x16xbf16> to vector<16x16x16xbf16>
    %21 = vector.shape_cast %20 : vector<16x16x16xbf16> to vector<256x16xbf16>
    %c0_10 = arith.constant 0 : index
    %c96 = arith.constant 96 : index
    %22 = vector.load %arg8[%c0_10, %c96] : memref<256x144xbf16, #tpu.memory_space<vmem>>, vector<256x16xbf16>
    tpu.vector_store %arg8[%c0_10, %c96], %21 {strides = array<i32>} : memref<256x144xbf16, #tpu.memory_space<vmem>>, vector<256x16xbf16>,
    %23 = vector.extract_strided_slice %1 {offsets = [2, 1, 0], sizes = [16, 16, 16], strides = [1, 1, 1]} : vector<18x18x16xbf16> to vector<16x16x16xbf16>
    %24 = vector.shape_cast %23 : vector<16x16x16xbf16> to vector<256x16xbf16>
    %c0_11 = arith.constant 0 : index
    %c112 = arith.constant 112 : index
    %25 = vector.load %arg8[%c0_11, %c112] : memref<256x144xbf16, #tpu.memory_space<vmem>>, vector<256x16xbf16>
    tpu.vector_store %arg8[%c0_11, %c112], %24 {strides = array<i32>} : memref<256x144xbf16, #tpu.memory_space<vmem>>, vector<256x16xbf16>,
    %26 = vector.extract_strided_slice %1 {offsets = [2, 2, 0], sizes = [16, 16, 16], strides = [1, 1, 1]} : vector<18x18x16xbf16> to vector<16x16x16xbf16>
    %27 = vector.shape_cast %26 : vector<16x16x16xbf16> to vector<256x16xbf16>
    %c0_12 = arith.constant 0 : index
    %c128 = arith.constant 128 : index
    %28 = vector.load %arg8[%c0_12, %c128] : memref<256x144xbf16, #tpu.memory_space<vmem>>, vector<256x16xbf16>
    tpu.vector_store %arg8[%c0_12, %c128], %27 {strides = array<i32>} : memref<256x144xbf16, #tpu.memory_space<vmem>>, vector<256x16xbf16>,
    %c0_13 = arith.constant 0 : index
    %c0_14 = arith.constant 0 : index
    %29 = vector.load %arg8[%c0_13, %c0_14] : memref<256x144xbf16, #tpu.memory_space<vmem>>, vector<256x144xbf16>
    %c0_15 = arith.constant 0 : index
    %c0_16 = arith.constant 0 : index
    %30 = vector.load %arg3[%c0_15, %c0_16] : memref<144x32xbf16, #tpu.memory_space<vmem>>, vector<144x32xbf16>
    %cst = arith.constant dense<0.000000e+00> : vector<256x32xf32>
    %31 = tpu.matmul %29, %30, %cst {dimension_numbers = #tpu.dot_dimension_numbers<[1], [0], [0], [1], [0, 0, 1, 1], [], []>} : vector<256x144xbf16>, vector<144x32xbf16>, vector<256x32xf32> -> vector<256x32xf32>
    %c0_17 = arith.constant 0 : index
    %c0_18 = arith.constant 0 : index
    %32 = vector.load %arg4[%c0_17, %c0_18] : memref<1x32xf32, #tpu.memory_space<vmem>>, vector<1x32xf32>
    %33 = vector.broadcast %32 : vector<1x32xf32> to vector<256x32xf32>
    %34 = arith.addf %31, %33 : vector<256x32xf32>
    %35 = vector.extract_strided_slice %34 {offsets = [0, 0], sizes = [256, 8], strides = [1, 1]} : vector<256x32xf32> to vector<256x8xf32>
    %36 = vector.extract_strided_slice %34 {offsets = [0, 8], sizes = [256, 8], strides = [1, 1]} : vector<256x32xf32> to vector<256x8xf32>
    %37 = vector.extract_strided_slice %34 {offsets = [0, 16], sizes = [256, 8], strides = [1, 1]} : vector<256x32xf32> to vector<256x8xf32>
    %38 = vector.extract_strided_slice %34 {offsets = [0, 24], sizes = [256, 8], strides = [1, 1]} : vector<256x32xf32> to vector<256x8xf32>
    %c0_19 = arith.constant 0 : index
    %c0_20 = arith.constant 0 : index
    %c0_21 = arith.constant 0 : index
    %39 = vector.load %arg2[%c0_19, %c0_20, %c0_21] : memref<1x256x8xf32, #tpu.memory_space<vmem>>, vector<1x256x8xf32>
    %40 = vector.shape_cast %39 : vector<1x256x8xf32> to vector<256x8xf32>
    %c0_22 = arith.constant 0 : index
    %c0_23 = arith.constant 0 : index
    %c0_24 = arith.constant 0 : index
    %41 = vector.load %arg5[%c0_22, %c0_23, %c0_24] : memref<3x256x8xf32, #tpu.memory_space<vmem>>, vector<1x256x8xf32>
    %42 = vector.shape_cast %41 : vector<1x256x8xf32> to vector<256x8xf32>
    %c1 = arith.constant 1 : index
    %c0_25 = arith.constant 0 : index
    %c0_26 = arith.constant 0 : index
    %43 = vector.load %arg5[%c1, %c0_25, %c0_26] : memref<3x256x8xf32, #tpu.memory_space<vmem>>, vector<1x256x8xf32>
    %44 = vector.shape_cast %43 : vector<1x256x8xf32> to vector<256x8xf32>
    %c2 = arith.constant 2 : index
    %c0_27 = arith.constant 0 : index
    %c0_28 = arith.constant 0 : index
    %45 = vector.load %arg5[%c2, %c0_27, %c0_28] : memref<3x256x8xf32, #tpu.memory_space<vmem>>, vector<1x256x8xf32>
    %46 = vector.shape_cast %45 : vector<1x256x8xf32> to vector<256x8xf32>
    %47 = arith.mulf %40, %42 : vector<256x8xf32>
    %48 = arith.addf %35, %47 : vector<256x8xf32>
    %cst_29 = arith.constant 5.000000e-01 : f32
    %49 = vector.broadcast %cst_29 : f32 to vector<256x8xf32>
    %50 = arith.mulf %49, %48 : vector<256x8xf32>
    %51 = math.tanh %50 : vector<256x8xf32>
    %cst_30 = arith.constant 5.000000e-01 : f32
    %52 = vector.broadcast %cst_30 : f32 to vector<256x8xf32>
    %53 = arith.mulf %52, %51 : vector<256x8xf32>
    %cst_31 = arith.constant 5.000000e-01 : f32
    %54 = vector.broadcast %cst_31 : f32 to vector<256x8xf32>
    %55 = arith.addf %53, %54 : vector<256x8xf32>
    %56 = arith.mulf %40, %44 : vector<256x8xf32>
    %57 = arith.addf %36, %56 : vector<256x8xf32>
    %cst_32 = arith.constant 5.000000e-01 : f32
    %58 = vector.broadcast %cst_32 : f32 to vector<256x8xf32>
    %59 = arith.mulf %58, %57 : vector<256x8xf32>
    %60 = math.tanh %59 : vector<256x8xf32>
    %cst_33 = arith.constant 5.000000e-01 : f32
    %61 = vector.broadcast %cst_33 : f32 to vector<256x8xf32>
    %62 = arith.mulf %61, %60 : vector<256x8xf32>
    %cst_34 = arith.constant 5.000000e-01 : f32
    %63 = vector.broadcast %cst_34 : f32 to vector<256x8xf32>
    %64 = arith.addf %62, %63 : vector<256x8xf32>
    %65 = arith.mulf %64, %40 : vector<256x8xf32>
    %66 = math.tanh %37 : vector<256x8xf32>
    %67 = arith.mulf %55, %66 : vector<256x8xf32>
    %68 = arith.addf %65, %67 : vector<256x8xf32>
    %69 = arith.mulf %68, %46 : vector<256x8xf32>
    %70 = arith.addf %38, %69 : vector<256x8xf32>
    %cst_35 = arith.constant 5.000000e-01 : f32
    %71 = vector.broadcast %cst_35 : f32 to vector<256x8xf32>
    %72 = arith.mulf %71, %70 : vector<256x8xf32>
    %73 = math.tanh %72 : vector<256x8xf32>
    %cst_36 = arith.constant 5.000000e-01 : f32
    %74 = vector.broadcast %cst_36 : f32 to vector<256x8xf32>
    %75 = arith.mulf %74, %73 : vector<256x8xf32>
    %cst_37 = arith.constant 5.000000e-01 : f32
    %76 = vector.broadcast %cst_37 : f32 to vector<256x8xf32>
    %77 = arith.addf %75, %76 : vector<256x8xf32>
    %78 = math.tanh %68 : vector<256x8xf32>
    %79 = arith.mulf %77, %78 : vector<256x8xf32>
    %c0_38 = arith.constant 0 : index
    %c0_39 = arith.constant 0 : index
    %c0_40 = arith.constant 0 : index
    %80 = vector.load %arg6[%c0_38, %c0_39, %c0_40] : memref<1x256x8xf32, #tpu.memory_space<vmem>>, vector<1x256x8xf32>
    %81 = vector.shape_cast %80 : vector<1x256x8xf32> to vector<256x8xf32>
    %82 = vector.shape_cast %79 : vector<256x8xf32> to vector<1x256x8xf32>
    tpu.vector_store %arg6[%c0_38, %c0_39, %c0_40], %82 {strides = array<i32>} : memref<1x256x8xf32, #tpu.memory_space<vmem>>, vector<1x256x8xf32>,
    %c0_41 = arith.constant 0 : index
    %c0_42 = arith.constant 0 : index
    %c0_43 = arith.constant 0 : index
    %83 = vector.load %arg7[%c0_41, %c0_42, %c0_43] : memref<1x256x8xf32, #tpu.memory_space<vmem>>, vector<1x256x8xf32>
    %84 = vector.shape_cast %83 : vector<1x256x8xf32> to vector<256x8xf32>
    %85 = vector.shape_cast %68 : vector<256x8xf32> to vector<1x256x8xf32>
    tpu.vector_store %arg7[%c0_41, %c0_42, %c0_43], %85 {strides = array<i32>} : memref<1x256x8xf32, #tpu.memory_space<vmem>>, vector<1x256x8xf32>,
    return
  }
  func.func @transform_0(%arg0: i32) -> (i32, i32, i32, i32) {
    %c0_i32 = arith.constant 0 : i32
    %c0_i32_0 = arith.constant 0 : i32
    %c0_i32_1 = arith.constant 0 : i32
    %c0_i32_2 = arith.constant 0 : i32
    return %arg0, %c0_i32, %c0_i32_0, %c0_i32_1 : i32, i32, i32, i32
  }
  func.func @transform_1(%arg0: i32) -> (i32, i32, i32) {
    %c0_i32 = arith.constant 0 : i32
    %c0_i32_0 = arith.constant 0 : i32
    %c0_i32_1 = arith.constant 0 : i32
    return %arg0, %c0_i32, %c0_i32_0 : i32, i32, i32
  }
  func.func @transform_2(%arg0: i32) -> (i32, i32) {
    %c0_i32 = arith.constant 0 : i32
    %c0_i32_0 = arith.constant 0 : i32
    %c0_i32_1 = arith.constant 0 : i32
    return %c0_i32, %c0_i32_0 : i32, i32
  }
  func.func @transform_3(%arg0: i32) -> (i32, i32) {
    %c0_i32 = arith.constant 0 : i32
    %c0_i32_0 = arith.constant 0 : i32
    %c0_i32_1 = arith.constant 0 : i32
    return %c0_i32, %c0_i32_0 : i32, i32
  }
  func.func @transform_4(%arg0: i32) -> (i32, i32, i32) {
    %c0_i32 = arith.constant 0 : i32
    %c0_i32_0 = arith.constant 0 : i32
    %c0_i32_1 = arith.constant 0 : i32
    %c0_i32_2 = arith.constant 0 : i32
    return %c0_i32, %c0_i32_0, %c0_i32_1 : i32, i32, i32
  }
  func.func @transform_5(%arg0: i32) -> (i32, i32, i32) {
    %c0_i32 = arith.constant 0 : i32
    %c0_i32_0 = arith.constant 0 : i32
    %c0_i32_1 = arith.constant 0 : i32
    return %arg0, %c0_i32, %c0_i32_0 : i32, i32, i32
  }
  func.func @transform_6(%arg0: i32) -> (i32, i32, i32) {
    %c0_i32 = arith.constant 0 : i32
    %c0_i32_0 = arith.constant 0 : i32
    %c0_i32_1 = arith.constant 0 : i32
    return %arg0, %c0_i32, %c0_i32_0 : i32, i32, i32
  }
}

</mosaic_0001>

<llo_original>
// kernel: tpu_custom_call.1
$region0: #{tpu_custom_call.1}
  #allocation0 [shape = 'u32[]', space=smem, size = 0x4, offset = 0x4, fixed_abs, tag = 'smem constant byte address 0x4 - core index']
  #allocation1 [shape = 'u32[144,128]{1,0:T(1,128)}', space=vmem, size = 0x12000, scoped, tag = 'internal scratch']
  #allocation2 [shape = 'bf16[256,144]{1,0:T(16,128)(2,1)}', space=vmem, size = 0x20000, scoped, tag = 'scratch operand']
  %s0 = inlined_call_operand.vmem [shape: bf16[2,18,18,16], index: 0, kind: input, shape index: {}]
  %s1 = inlined_call_operand.vmem [shape: f32[2,256,8], index: 1, kind: input, shape index: {}, may-alias: {1,6}]
  %s2 = inlined_call_operand.vmem [shape: bf16[144,32], index: 2, kind: input, shape index: {}]
  %s3 = inlined_call_operand.vmem [shape: f32[1,32], index: 3, kind: input, shape index: {}]
  %s4 = inlined_call_operand.vmem [shape: f32[3,256,8], index: 4, kind: input, shape index: {}]
  %s5 = inlined_call_operand.vmem [shape: f32[2,256,8], index: 5, kind: output, shape index: {0}]
  %s6 = inlined_call_operand.vmem [shape: f32[2,256,8], index: 6, kind: output, shape index: {1}, may-alias: {1,6}]
  %7 = xla_tuple %s5, %s6
  %s8 = sld [smem:[#allocation0]]
  $region61: #{tpu_custom_call.1} parent=0
    _
  %s10 = ssub.s32 1, %s8
  %s11 = scalar_select 0, %s10, %s8
  loop: start=0, step=1, limit=4
  $region2: #{tpu_custom_call.1} parent=0 // loop_pre_header
    _
  $region3: #{tpu_custom_call.1} parent=0 // loop_header
    %s13 = sphi 0, %s17
    %p14 = scmp.ge.s32.totalorder %s13, 4
    %s23 = sphi 0, %s25
    %s26 = sphi 0, %s23
    %s27 = sphi 0, %s26
    %s43 = sphi 0, %s27
    %s49 = sphi 0, %s51
    %s52 = sphi 0, %s49
    %s53 = sphi 0, %s52
    %s69 = sphi 0, %s53
    %s73 = sphi 0, %s73
    %s75 = sphi 0, %s73
    %s76 = sphi 0, %s75
    %s90 = sphi 0, %s76
    %s94 = sphi 0, %s94
    %s96 = sphi 0, %s94
    %s97 = sphi 0, %s96
    %s111 = sphi 0, %s97
    %s115 = sphi 0, %s115
    %s117 = sphi 0, %s115
    %s118 = sphi 0, %s117
    %s132 = sphi 0, %s118
    %s138 = sphi 0, %s140
    %s141 = sphi 0, %s138
    %s142 = sphi 0, %s141
    %s158 = sphi 0, %s142
    %s164 = sphi 0, %s166
    %s167 = sphi 0, %s164
    %s168 = sphi 0, %s167
    %s184 = sphi 0, %s168
  $region4: #{tpu_custom_call.1} parent=0 // loop_header_branch
    %16 = sbr.rel (%p14) target = $region8
  $region5: #{tpu_custom_call.1} parent=0 // loop_body
    %s18 = ssub.s32 %s13, 1
    %s19 = ssub.s32 %s13, 2
    %s20 = sadd.s32 %s13, 1
    %s21 = ssub.s32 %s13, %s20
    %p22 = scmp.eq.s32.totalorder %s21, 0
    %s24 = sadd.s32 %s23, 1
    %s25 = scalar_select %p22, %s23, %s24
    %p28 = pneg %p22
    %p29 = scmp.eq.s32.totalorder %s13, 1
    %p30 = por %p28, %p29
    %p31 = scmp.ne.s32.totalorder %s23, %s26
    %p32 = scmp.eq.s32.totalorder %s13, 0
    %p33 = por %p31, %p32
    %p34 = scmp.ne.s32.totalorder %s23, %s26
    %p35 = scmp.eq.s32.totalorder %s18, 1
    %p36 = por %p34, %p35
    %p37 = scmp.ne.s32.totalorder %s26, %s27
    %p38 = scmp.eq.s32.totalorder %s18, 0
    %p39 = por %p37, %p38
    %p40 = scmp.ne.s32.totalorder %s26, %s27
    %p41 = scmp.eq.s32.totalorder %s19, 1
    %p42 = por %p40, %p41
    %p44 = scmp.ne.s32.totalorder %s27, %s43
    %p45 = scmp.eq.s32.totalorder %s19, 0
    %p46 = por %p44, %p45
    %s47 = ssub.s32 %s13, %s20
    %p48 = scmp.eq.s32.totalorder %s47, 0
    %s50 = sadd.s32 %s49, 1
    %s51 = scalar_select %p48, %s49, %s50
    %p54 = pneg %p48
    %p55 = scmp.eq.s32.totalorder %s13, 1
    %p56 = por %p54, %p55
    %p57 = scmp.ne.s32.totalorder %s49, %s52
    %p58 = scmp.eq.s32.totalorder %s13, 0
    %p59 = por %p57, %p58
    %p60 = scmp.ne.s32.totalorder %s49, %s52
    %p61 = scmp.eq.s32.totalorder %s18, 1
    %p62 = por %p60, %p61
    %p63 = scmp.ne.s32.totalorder %s52, %s53
    %p64 = scmp.eq.s32.totalorder %s18, 0
    %p65 = por %p63, %p64
    %p66 = scmp.ne.s32.totalorder %s52, %s53
    %p67 = scmp.eq.s32.totalorder %s19, 1
    %p68 = por %p66, %p67
    %p70 = scmp.ne.s32.totalorder %s53, %s69
    %p71 = scmp.eq.s32.totalorder %s19, 0
    %p72 = por %p70, %p71
    %s74 = sadd.s32 %s73, 1
    %p77 = scmp.eq.s32.totalorder %s13, 1
    %p78 = scmp.ne.s32.totalorder %s73, %s75
    %p79 = scmp.eq.s32.totalorder %s13, 0
    %p80 = por %p78, %p79
    %p81 = scmp.ne.s32.totalorder %s73, %s75
    %p82 = scmp.eq.s32.totalorder %s18, 1
    %p83 = por %p81, %p82
    %p84 = scmp.ne.s32.totalorder %s75, %s76
    %p85 = scmp.eq.s32.totalorder %s18, 0
    %p86 = por %p84, %p85
    %p87 = scmp.ne.s32.totalorder %s75, %s76
    %p88 = scmp.eq.s32.totalorder %s19, 1
    %p89 = por %p87, %p88
    %p91 = scmp.ne.s32.totalorder %s76, %s90
    %p92 = scmp.eq.s32.totalorder %s19, 0
    %p93 = por %p91, %p92
    %s95 = sadd.s32 %s94, 1
    %p98 = scmp.eq.s32.totalorder %s13, 1
    %p99 = scmp.ne.s32.totalorder %s94, %s96
    %p100 = scmp.eq.s32.totalorder %s13, 0
    %p101 = por %p99, %p100
    %p102 = scmp.ne.s32.totalorder %s94, %s96
    %p103 = scmp.eq.s32.totalorder %s18, 1
    %p104 = por %p102, %p103
    %p105 = scmp.ne.s32.totalorder %s96, %s97
    %p106 = scmp.eq.s32.totalorder %s18, 0
    %p107 = por %p105, %p106
    %p108 = scmp.ne.s32.totalorder %s96, %s97
    %p109 = scmp.eq.s32.totalorder %s19, 1
    %p110 = por %p108, %p109
    %p112 = scmp.ne.s32.totalorder %s97, %s111
    %p113 = scmp.eq.s32.totalorder %s19, 0
    %p114 = por %p112, %p113
    %s116 = sadd.s32 %s115, 1
    %p119 = scmp.eq.s32.totalorder %s13, 1
    %p120 = scmp.ne.s32.totalorder %s115, %s117
    %p121 = scmp.eq.s32.totalorder %s13, 0
    %p122 = por %p120, %p121
    %p123 = scmp.ne.s32.totalorder %s115, %s117
    %p124 = scmp.eq.s32.totalorder %s18, 1
    %p125 = por %p123, %p124
    %p126 = scmp.ne.s32.totalorder %s117, %s118
    %p127 = scmp.eq.s32.totalorder %s18, 0
    %p128 = por %p126, %p127
    %p129 = scmp.ne.s32.totalorder %s117, %s118
    %p130 = scmp.eq.s32.totalorder %s19, 1
    %p131 = por %p129, %p130
    %p133 = scmp.ne.s32.totalorder %s118, %s132
    %p134 = scmp.eq.s32.totalorder %s19, 0
    %p135 = por %p133, %p134
    %s136 = ssub.s32 %s13, %s20
    %p137 = scmp.eq.s32.totalorder %s136, 0
    %s139 = sadd.s32 %s138, 1
    %s140 = scalar_select %p137, %s138, %s139
    %p143 = pneg %p137
    %p144 = scmp.eq.s32.totalorder %s13, 1
    %p145 = por %p143, %p144
    %p146 = scmp.ne.s32.totalorder %s138, %s141
    %p147 = scmp.eq.s32.totalorder %s13, 0
    %p148 = por %p146, %p147
    %p149 = scmp.ne.s32.totalorder %s138, %s141
    %p150 = scmp.eq.s32.totalorder %s18, 1
    %p151 = por %p149, %p150
    %p152 = scmp.ne.s32.totalorder %s141, %s142
    %p153 = scmp.eq.s32.totalorder %s18, 0
    %p154 = por %p152, %p153
    %p155 = scmp.ne.s32.totalorder %s141, %s142
    %p156 = scmp.eq.s32.totalorder %s19, 1
    %p157 = por %p155, %p156
    %p159 = scmp.ne.s32.totalorder %s142, %s158
    %p160 = scmp.eq.s32.totalorder %s19, 0
    %p161 = por %p159, %p160
    %s162 = ssub.s32 %s13, %s20
    %p163 = scmp.eq.s32.totalorder %s162, 0
    %s165 = sadd.s32 %s164, 1
    %s166 = scalar_select %p163, %s164, %s165
    %p169 = pneg %p163
    %p170 = scmp.eq.s32.totalorder %s13, 1
    %p171 = por %p169, %p170
    %p172 = scmp.ne.s32.totalorder %s164, %s167
    %p173 = scmp.eq.s32.totalorder %s13, 0
    %p174 = por %p172, %p173
    %p175 = scmp.ne.s32.totalorder %s164, %s167
    %p176 = scmp.eq.s32.totalorder %s18, 1
    %p177 = por %p175, %p176
    %p178 = scmp.ne.s32.totalorder %s167, %s168
    %p179 = scmp.eq.s32.totalorder %s18, 0
    %p180 = por %p178, %p179
    %p181 = scmp.ne.s32.totalorder %s167, %s168
    %p182 = scmp.eq.s32.totalorder %s19, 1
    %p183 = por %p181, %p182
    %p185 = scmp.ne.s32.totalorder %s168, %s184
    %p186 = scmp.eq.s32.totalorder %s19, 0
    %p187 = por %p185, %p186
    %p188 = scmp.le.s32.totalorder 1, %s13
    %p189 = scmp.lt.s32.totalorder %s13, 3
    %p190 = pnand %p188, %p189
    %p191 = pneg %p190
    // Predicated region
    $region9: #{tpu_custom_call.1} parent=5 // pred_check
      _
    $region10: #{tpu_custom_call.1} parent=5 // pred_check_branch
      %193 = sbr.rel (%p190) target = $region12
    $region11: #{tpu_custom_call.1} parent=5 // pred_region
      %s194 = ssub.s32 %s13, 1
      // Predicated region
      $region13: #{tpu_custom_call.1} parent=11 // pred_check
        %p195 = pneg %p86
      $region14: #{tpu_custom_call.1} parent=11 // pred_check_branch
        %197 = sbr.rel (%p195) target = $region16
      $region15: #{tpu_custom_call.1} parent=11 // pred_region
        _
      $region16: #{tpu_custom_call.1} parent=11 // pred_fallthru
        _
      // Predicated region
      $region17: #{tpu_custom_call.1} parent=11 // pred_check
        %p198 = pneg %p107
      $region18: #{tpu_custom_call.1} parent=11 // pred_check_branch
        %200 = sbr.rel (%p198) target = $region20
      $region19: #{tpu_custom_call.1} parent=11 // pred_region
        _
      $region20: #{tpu_custom_call.1} parent=11 // pred_fallthru
        _
      // Predicated region
      $region21: #{tpu_custom_call.1} parent=11 // pred_check
        %p201 = pneg %p128
      $region22: #{tpu_custom_call.1} parent=11 // pred_check_branch
        %203 = sbr.rel (%p201) target = $region24
      $region23: #{tpu_custom_call.1} parent=11 // pred_region
        _
      $region24: #{tpu_custom_call.1} parent=11 // pred_fallthru
        _
    $region12: #{tpu_custom_call.1} parent=5 // pred_fallthru
      _
    %p204 = scmp.lt.s32.totalorder %s13, 2
    // Predicated region
    $region25: #{tpu_custom_call.1} parent=5 // pred_check
      %p205 = pneg %p204
    $region26: #{tpu_custom_call.1} parent=5 // pred_check_branch
      %207 = sbr.rel (%p205) target = $region28
    $region27: #{tpu_custom_call.1} parent=5 // pred_region
      // Predicated region
      $region29: #{tpu_custom_call.1} parent=27 // pred_check
        %p208 = pneg %p33
      $region30: #{tpu_custom_call.1} parent=27 // pred_check_branch
        %210 = sbr.rel (%p208) target = $region32
      $region31: #{tpu_custom_call.1} parent=27 // pred_region
        %p211 = scmp.lt.s32.totalorder %s13, 1
        %s212 = scalar_select %p211, %s13, 1
        %s213 = smul.addr %s212, 54
        %s214 = smul.addr %s213, 4
        %s215 = scalar_lea.vmem %s0, %s214
      $region32: #{tpu_custom_call.1} parent=27 // pred_fallthru
        _
      // Predicated region
      $region33: #{tpu_custom_call.1} parent=27 // pred_check
        %p216 = pneg %p59
      $region34: #{tpu_custom_call.1} parent=27 // pred_check_branch
        %218 = sbr.rel (%p216) target = $region36
      $region35: #{tpu_custom_call.1} parent=27 // pred_region
        %p219 = scmp.lt.s32.totalorder %s13, 1
        %s220 = scalar_select %p219, %s13, 1
        %s221 = smul.addr %s220, 32
        %s222 = smul.addr %s221, 8
        %s223 = scalar_lea.vmem %s1, %s222
      $region36: #{tpu_custom_call.1} parent=27 // pred_fallthru
        _
    $region28: #{tpu_custom_call.1} parent=5 // pred_fallthru
      _
    %p224 = scmp.le.s32.totalorder 1, %s13
    %p225 = scmp.lt.s32.totalorder %s13, 3
    %p226 = pnand %p224, %p225
    %p227 = pneg %p226
    // Predicated region
    $region37: #{tpu_custom_call.1} parent=5 // pred_check
      _
    $region38: #{tpu_custom_call.1} parent=5 // pred_check_branch
      %229 = sbr.rel (%p226) target = $region40
    $region39: #{tpu_custom_call.1} parent=5 // pred_region
      %s230 = ssub.s32 %s13, 1
      %p231 = scmp.lt.s32.totalorder %s18, 1
      %s232 = scalar_select %p231, %s18, 1
      %s233 = smul.addr %s232, 54
      %s234 = smul.addr %s233, 4
      %s235 = scalar_lea.vmem %s0, %s234
      %p236 = pneg %p39
      %p237 = pneg %p36
      %p238 = scmp.lt.s32.totalorder %s18, 1
      %s239 = scalar_select %p238, %s18, 1
      %s240 = smul.addr %s239, 32
      %s241 = smul.addr %s240, 8
      %s242 = scalar_lea.vmem %s1, %s241
      %p243 = pneg %p65
      %p244 = pneg %p62
      %p245 = pneg %p86
      %p246 = pneg %p83
      %p247 = pneg %p107
      %p248 = pneg %p104
      %p249 = pneg %p128
      %p250 = pneg %p125
      %p251 = pneg %p154
      %p252 = pneg %p151
      %p253 = scmp.lt.s32.totalorder %s18, 1
      %s254 = scalar_select %p253, %s18, 1
      %s255 = smul.addr %s254, 32
      %s256 = smul.addr %s255, 8
      %s257 = scalar_lea.vmem %s5, %s256
      %p258 = pneg %p180
      %p259 = pneg %p177
      %p260 = scmp.lt.s32.totalorder %s18, 1
      %s261 = scalar_select %p260, %s18, 1
      %s262 = smul.addr %s261, 32
      %s263 = smul.addr %s262, 8
      %s264 = scalar_lea.vmem %s6, %s263
      %p265 = scmp.lt.s32.totalorder %s18, 1
      %s266 = scalar_select %p265, %s18, 1
      %s267 = smul.addr %s266, 54
      %s268 = smul.addr %s267, 4
      %s269 = scalar_lea.vmem %s0, %s268
      %p270 = scmp.lt.s32.totalorder %s18, 1
      %s271 = scalar_select %p270, %s18, 1
      %s272 = smul.addr %s271, 32
      %s273 = smul.addr %s272, 8
      %s274 = scalar_lea.vmem %s1, %s273
      %p275 = scmp.lt.s32.totalorder %s18, 1
      %s276 = scalar_select %p275, %s18, 1
      %s277 = smul.addr %s276, 32
      %s278 = smul.addr %s277, 8
      %s279 = scalar_lea.vmem %s5, %s278
      %p280 = scmp.lt.s32.totalorder %s18, 1
      %s281 = scalar_select %p280, %s18, 1
      %s282 = smul.addr %s281, 32
      %s283 = smul.addr %s282, 8
      %s284 = scalar_lea.vmem %s6, %s283
      %v286 = vld [vmem:[%s269] sm:$0xf]
      %v287 = vld [vmem:[%s269 + $0x4] sm:$0xf]
      %v288 = vld [vmem:[%s269 + $0x8] sm:$0x1]
      %v289 = vld [vmem:[%s269 + $0xc] sm:$0xf]
      %v290 = vld [vmem:[%s269 + $0x10] sm:$0xf]
      %v291 = vld [vmem:[%s269 + $0x14] sm:$0x1]
      %v292 = vld [vmem:[%s269 + $0x18] sm:$0xf]
      %v293 = vld [vmem:[%s269 + $0x1c] sm:$0xf]
      %v294 = vld [vmem:[%s269 + $0x20] sm:$0x1]
      %v295 = vld [vmem:[%s269 + $0x24] sm:$0xf]
      %v296 = vld [vmem:[%s269 + $0x28] sm:$0xf]
      %v297 = vld [vmem:[%s269 + $0x2c] sm:$0x1]
      %v298 = vld [vmem:[%s269 + $0x30] sm:$0xf]
      %v299 = vld [vmem:[%s269 + $0x34] sm:$0xf]
      %v300 = vld [vmem:[%s269 + $0x38] sm:$0x1]
      %v301 = vld [vmem:[%s269 + $0x3c] sm:$0xf]
      %v302 = vld [vmem:[%s269 + $0x40] sm:$0xf]
      %v303 = vld [vmem:[%s269 + $0x44] sm:$0x1]
      %v304 = vld [vmem:[%s269 + $0x48] sm:$0xf]
      %v305 = vld [vmem:[%s269 + $0x4c] sm:$0xf]
      %v306 = vld [vmem:[%s269 + $0x50] sm:$0x1]
      %v307 = vld [vmem:[%s269 + $0x54] sm:$0xf]
      %v308 = vld [vmem:[%s269 + $0x58] sm:$0xf]
      %v309 = vld [vmem:[%s269 + $0x5c] sm:$0x1]
      %v310 = vld [vmem:[%s269 + $0x60] sm:$0xf]
      %v311 = vld [vmem:[%s269 + $0x64] sm:$0xf]
      %v312 = vld [vmem:[%s269 + $0x68] sm:$0x1]
      %v313 = vld [vmem:[%s269 + $0x6c] sm:$0xf]
      %v314 = vld [vmem:[%s269 + $0x70] sm:$0xf]
      %v315 = vld [vmem:[%s269 + $0x74] sm:$0x1]
      %v316 = vld [vmem:[%s269 + $0x78] sm:$0xf]
      %v317 = vld [vmem:[%s269 + $0x7c] sm:$0xf]
      %v318 = vld [vmem:[%s269 + $0x80] sm:$0x1]
      %v319 = vld [vmem:[%s269 + $0x84] sm:$0xf]
      %v320 = vld [vmem:[%s269 + $0x88] sm:$0xf]
      %v321 = vld [vmem:[%s269 + $0x8c] sm:$0x1]
      %v322 = vld [vmem:[%s269 + $0x90] sm:$0xf]
      %v323 = vld [vmem:[%s269 + $0x94] sm:$0xf]
      %v324 = vld [vmem:[%s269 + $0x98] sm:$0x1]
      %v325 = vld [vmem:[%s269 + $0x9c] sm:$0xf]
      %v326 = vld [vmem:[%s269 + $0xa0] sm:$0xf]
      %v327 = vld [vmem:[%s269 + $0xa4] sm:$0x1]
      %v328 = vld [vmem:[%s269 + $0xa8] sm:$0xf]
      %v329 = vld [vmem:[%s269 + $0xac] sm:$0xf]
      %v330 = vld [vmem:[%s269 + $0xb0] sm:$0x1]
      %v331 = vld [vmem:[%s269 + $0xb4] sm:$0xf]
      %v332 = vld [vmem:[%s269 + $0xb8] sm:$0xf]
      %v333 = vld [vmem:[%s269 + $0xbc] sm:$0x1]
      %v334 = vld [vmem:[%s269 + $0xc0] sm:$0xf]
      %v335 = vld [vmem:[%s269 + $0xc4] sm:$0xf]
      %v336 = vld [vmem:[%s269 + $0xc8] sm:$0x1]
      %v337 = vld [vmem:[%s269 + $0xcc] sm:$0xf]
      %v338 = vld [vmem:[%s269 + $0xd0] sm:$0xf]
      %v339 = vld [vmem:[%s269 + $0xd4] sm:$0x1]
      %v372 = vunpack.c.l.b16 %v286
      %v373 = vunpack.c.l.b16 %v287
      %v374 = vunpack.c.l.b16 %v289
      %v375 = vunpack.c.l.b16 %v290
      %v376 = vunpack.c.l.b16 %v292
      %v377 = vunpack.c.l.b16 %v293
      %v378 = vunpack.c.l.b16 %v295
      %v379 = vunpack.c.l.b16 %v296
      %v380 = vunpack.c.l.b16 %v298
      %v381 = vunpack.c.l.b16 %v299
      %v382 = vunpack.c.l.b16 %v301
      %v383 = vunpack.c.l.b16 %v302
      %v384 = vunpack.c.l.b16 %v304
      %v385 = vunpack.c.l.b16 %v305
      %v386 = vunpack.c.l.b16 %v307
      %v387 = vunpack.c.l.b16 %v308
      %v388 = vunpack.c.l.b16 %v310
      %v389 = vunpack.c.l.b16 %v311
      %v390 = vunpack.c.l.b16 %v313
      %v391 = vunpack.c.l.b16 %v314
      %v392 = vunpack.c.l.b16 %v316
      %v393 = vunpack.c.l.b16 %v317
      %v394 = vunpack.c.l.b16 %v319
      %v395 = vunpack.c.l.b16 %v320
      %v396 = vunpack.c.l.b16 %v322
      %v397 = vunpack.c.l.b16 %v323
      %v398 = vunpack.c.l.b16 %v325
      %v399 = vunpack.c.l.b16 %v326
      %v400 = vunpack.c.l.b16 %v328
      %v401 = vunpack.c.l.b16 %v329
      %v402 = vunpack.c.l.b16 %v331
      %v403 = vunpack.c.l.b16 %v332
      %v404 = vpack.c.b16 %v373, %v372
      %v405 = vpack.c.b16 %v375, %v374
      %v406 = vpack.c.b16 %v377, %v376
      %v407 = vpack.c.b16 %v379, %v378
      %v408 = vpack.c.b16 %v381, %v380
      %v409 = vpack.c.b16 %v383, %v382
      %v410 = vpack.c.b16 %v385, %v384
      %v411 = vpack.c.b16 %v387, %v386
      %v412 = vpack.c.b16 %v389, %v388
      %v413 = vpack.c.b16 %v391, %v390
      %v414 = vpack.c.b16 %v393, %v392
      %v415 = vpack.c.b16 %v395, %v394
      %v416 = vpack.c.b16 %v397, %v396
      %v417 = vpack.c.b16 %v399, %v398
      %v418 = vpack.c.b16 %v401, %v400
      %v419 = vpack.c.b16 %v403, %v402
      %vm436 = vcmask 130048
      %437 = vst.msk [vmem:[#allocation2] sm:$0xff] %vm436, %v404
      %438 = vst.msk [vmem:[#allocation2 + $0x10] sm:$0xff] %vm436, %v405
      %439 = vst.msk [vmem:[#allocation2 + $0x20] sm:$0xff] %vm436, %v406
      %440 = vst.msk [vmem:[#allocation2 + $0x30] sm:$0xff] %vm436, %v407
      %441 = vst.msk [vmem:[#allocation2 + $0x40] sm:$0xff] %vm436, %v408
      %442 = vst.msk [vmem:[#allocation2 + $0x50] sm:$0xff] %vm436, %v409
      %443 = vst.msk [vmem:[#allocation2 + $0x60] sm:$0xff] %vm436, %v410
      %444 = vst.msk [vmem:[#allocation2 + $0x70] sm:$0xff] %vm436, %v411
      %445 = vst.msk [vmem:[#allocation2 + $0x80] sm:$0xff] %vm436, %v412
      %446 = vst.msk [vmem:[#allocation2 + $0x90] sm:$0xff] %vm436, %v413
      %447 = vst.msk [vmem:[#allocation2 + $0xa0] sm:$0xff] %vm436, %v414
      %448 = vst.msk [vmem:[#allocation2 + $0xb0] sm:$0xff] %vm436, %v415
      %449 = vst.msk [vmem:[#allocation2 + $0xc0] sm:$0xff] %vm436, %v416
      %450 = vst.msk [vmem:[#allocation2 + $0xd0] sm:$0xff] %vm436, %v417
      %451 = vst.msk [vmem:[#allocation2 + $0xe0] sm:$0xff] %vm436, %v418
      %452 = vst.msk [vmem:[#allocation2 + $0xf0] sm:$0xff] %vm436, %v419
      %vm453 = vsmask.f32 3328
      %vm454 = vsmask.f32 7440
      %vm455 = vmor %vm453, %vm454
      %v457 = vshrl.u32 %v286, 16
      %v459 = vrot.slane %v457, 4
      %v460 = vshll.u32 %v286, 16
      %v462 = vrot.slane %v460, 5
      %v463 = vor.u32 %v459, %v462
      %v464 = vrot.slane %v463, 4
      %v466 = vshll.u32 %v287, 16
      %v468 = vrot.slane %v466, 5
      %v469 = vsel %vm455, %v464, %v468
      %v470 = vshrl.u32 %v287, 16
      %v472 = vrot.slane %v470, 4
      %v473 = vor.u32 %v472, %v468
      %v474 = vrot.slane %v473, 4
      %v476 = vshll.u32 %v288, 16
      %v478 = vrot.slane %v476, 5
      %v479 = vsel %vm455, %v474, %v478
      %v481 = vshrl.u32 %v289, 16
      %v483 = vrot.slane %v481, 4
      %v484 = vshll.u32 %v289, 16
      %v486 = vrot.slane %v484, 5
      %v487 = vor.u32 %v483, %v486
      %v488 = vrot.slane %v487, 4
      %v490 = vshll.u32 %v290, 16
      %v492 = vrot.slane %v490, 5
      %v493 = vsel %vm455, %v488, %v492
      %v494 = vshrl.u32 %v290, 16
      %v496 = vrot.slane %v494, 4
      %v497 = vor.u32 %v496, %v492
      %v498 = vrot.slane %v497, 4
      %v500 = vshll.u32 %v291, 16
      %v502 = vrot.slane %v500, 5
      %v503 = vsel %vm455, %v498, %v502
      %v505 = vshrl.u32 %v292, 16
      %v507 = vrot.slane %v505, 4
      %v508 = vshll.u32 %v292, 16
      %v510 = vrot.slane %v508, 5
      %v511 = vor.u32 %v507, %v510
      %v512 = vrot.slane %v511, 4
      %v514 = vshll.u32 %v293, 16
      %v516 = vrot.slane %v514, 5
      %v517 = vsel %vm455, %v512, %v516
      %v518 = vshrl.u32 %v293, 16
      %v520 = vrot.slane %v518, 4
      %v521 = vor.u32 %v520, %v516
      %v522 = vrot.slane %v521, 4
      %v524 = vshll.u32 %v294, 16
      %v526 = vrot.slane %v524, 5
      %v527 = vsel %vm455, %v522, %v526
      %v529 = vshrl.u32 %v295, 16
      %v531 = vrot.slane %v529, 4
      %v532 = vshll.u32 %v295, 16
      %v534 = vrot.slane %v532, 5
      %v535 = vor.u32 %v531, %v534
      %v536 = vrot.slane %v535, 4
      %v538 = vshll.u32 %v296, 16
      %v540 = vrot.slane %v538, 5
      %v541 = vsel %vm455, %v536, %v540
      %v542 = vshrl.u32 %v296, 16
      %v544 = vrot.slane %v542, 4
      %v545 = vor.u32 %v544, %v540
      %v546 = vrot.slane %v545, 4
      %v548 = vshll.u32 %v297, 16
      %v550 = vrot.slane %v548, 5
      %v551 = vsel %vm455, %v546, %v550
      %v553 = vshrl.u32 %v298, 16
      %v555 = vrot.slane %v553, 4
      %v556 = vshll.u32 %v298, 16
      %v558 = vrot.slane %v556, 5
      %v559 = vor.u32 %v555, %v558
      %v560 = vrot.slane %v559, 4
      %v562 = vshll.u32 %v299, 16
      %v564 = vrot.slane %v562, 5
      %v565 = vsel %vm455, %v560, %v564
      %v566 = vshrl.u32 %v299, 16
      %v568 = vrot.slane %v566, 4
      %v569 = vor.u32 %v568, %v564
      %v570 = vrot.slane %v569, 4
      %v572 = vshll.u32 %v300, 16
      %v574 = vrot.slane %v572, 5
      %v575 = vsel %vm455, %v570, %v574
      %v577 = vshrl.u32 %v301, 16
      %v579 = vrot.slane %v577, 4
      %v580 = vshll.u32 %v301, 16
      %v582 = vrot.slane %v580, 5
      %v583 = vor.u32 %v579, %v582
      %v584 = vrot.slane %v583, 4
      %v586 = vshll.u32 %v302, 16
      %v588 = vrot.slane %v586, 5
      %v589 = vsel %vm455, %v584, %v588
      %v590 = vshrl.u32 %v302, 16
      %v592 = vrot.slane %v590, 4
      %v593 = vor.u32 %v592, %v588
      %v594 = vrot.slane %v593, 4
      %v596 = vshll.u32 %v303, 16
      %v598 = vrot.slane %v596, 5
      %v599 = vsel %vm455, %v594, %v598
      %v601 = vshrl.u32 %v304, 16
      %v603 = vrot.slane %v601, 4
      %v604 = vshll.u32 %v304, 16
      %v606 = vrot.slane %v604, 5
      %v607 = vor.u32 %v603, %v606
      %v608 = vrot.slane %v607, 4
      %v610 = vshll.u32 %v305, 16
      %v612 = vrot.slane %v610, 5
      %v613 = vsel %vm455, %v608, %v612
      %v614 = vshrl.u32 %v305, 16
      %v616 = vrot.slane %v614, 4
      %v617 = vor.u32 %v616, %v612
      %v618 = vrot.slane %v617, 4
      %v620 = vshll.u32 %v306, 16
      %v622 = vrot.slane %v620, 5
      %v623 = vsel %vm455, %v618, %v622
      %v625 = vshrl.u32 %v307, 16
      %v627 = vrot.slane %v625, 4
      %v628 = vshll.u32 %v307, 16
      %v630 = vrot.slane %v628, 5
      %v631 = vor.u32 %v627, %v630
      %v632 = vrot.slane %v631, 4
      %v634 = vshll.u32 %v308, 16
      %v636 = vrot.slane %v634, 5
      %v637 = vsel %vm455, %v632, %v636
      %v638 = vshrl.u32 %v308, 16
      %v640 = vrot.slane %v638, 4
      %v641 = vor.u32 %v640, %v636
      %v642 = vrot.slane %v641, 4
      %v644 = vshll.u32 %v309, 16
      %v646 = vrot.slane %v644, 5
      %v647 = vsel %vm455, %v642, %v646
      %v649 = vshrl.u32 %v310, 16
      %v651 = vrot.slane %v649, 4
      %v652 = vshll.u32 %v310, 16
      %v654 = vrot.slane %v652, 5
      %v655 = vor.u32 %v651, %v654
      %v656 = vrot.slane %v655, 4
      %v658 = vshll.u32 %v311, 16
      %v660 = vrot.slane %v658, 5
      %v661 = vsel %vm455, %v656, %v660
      %v662 = vshrl.u32 %v311, 16
      %v664 = vrot.slane %v662, 4
      %v665 = vor.u32 %v664, %v660
      %v666 = vrot.slane %v665, 4
      %v668 = vshll.u32 %v312, 16
      %v670 = vrot.slane %v668, 5
      %v671 = vsel %vm455, %v666, %v670
      %v673 = vshrl.u32 %v313, 16
      %v675 = vrot.slane %v673, 4
      %v676 = vshll.u32 %v313, 16
      %v678 = vrot.slane %v676, 5
      %v679 = vor.u32 %v675, %v678
      %v680 = vrot.slane %v679, 4
      %v682 = vshll.u32 %v314, 16
      %v684 = vrot.slane %v682, 5
      %v685 = vsel %vm455, %v680, %v684
      %v686 = vshrl.u32 %v314, 16
      %v688 = vrot.slane %v686, 4
      %v689 = vor.u32 %v688, %v684
      %v690 = vrot.slane %v689, 4
      %v692 = vshll.u32 %v315, 16
      %v694 = vrot.slane %v692, 5
      %v695 = vsel %vm455, %v690, %v694
      %v697 = vshrl.u32 %v316, 16
      %v699 = vrot.slane %v697, 4
      %v700 = vshll.u32 %v316, 16
      %v702 = vrot.slane %v700, 5
      %v703 = vor.u32 %v699, %v702
      %v704 = vrot.slane %v703, 4
      %v706 = vshll.u32 %v317, 16
      %v708 = vrot.slane %v706, 5
      %v709 = vsel %vm455, %v704, %v708
      %v710 = vshrl.u32 %v317, 16
      %v712 = vrot.slane %v710, 4
      %v713 = vor.u32 %v712, %v708
      %v714 = vrot.slane %v713, 4
      %v716 = vshll.u32 %v318, 16
      %v718 = vrot.slane %v716, 5
      %v719 = vsel %vm455, %v714, %v718
      %v721 = vshrl.u32 %v319, 16
      %v723 = vrot.slane %v721, 4
      %v724 = vshll.u32 %v319, 16
      %v726 = vrot.slane %v724, 5
      %v727 = vor.u32 %v723, %v726
      %v728 = vrot.slane %v727, 4
      %v730 = vshll.u32 %v320, 16
      %v732 = vrot.slane %v730, 5
      %v733 = vsel %vm455, %v728, %v732
      %v734 = vshrl.u32 %v320, 16
      %v736 = vrot.slane %v734, 4
      %v737 = vor.u32 %v736, %v732
      %v738 = vrot.slane %v737, 4
      %v740 = vshll.u32 %v321, 16
      %v742 = vrot.slane %v740, 5
      %v743 = vsel %vm455, %v738, %v742
      %v745 = vshrl.u32 %v322, 16
      %v747 = vrot.slane %v745, 4
      %v748 = vshll.u32 %v322, 16
      %v750 = vrot.slane %v748, 5
      %v751 = vor.u32 %v747, %v750
      %v752 = vrot.slane %v751, 4
      %v754 = vshll.u32 %v323, 16
      %v756 = vrot.slane %v754, 5
      %v757 = vsel %vm455, %v752, %v756
      %v758 = vshrl.u32 %v323, 16
      %v760 = vrot.slane %v758, 4
      %v761 = vor.u32 %v760, %v756
      %v762 = vrot.slane %v761, 4
      %v764 = vshll.u32 %v324, 16
      %v766 = vrot.slane %v764, 5
      %v767 = vsel %vm455, %v762, %v766
      %v769 = vshrl.u32 %v325, 16
      %v771 = vrot.slane %v769, 4
      %v772 = vshll.u32 %v325, 16
      %v774 = vrot.slane %v772, 5
      %v775 = vor.u32 %v771, %v774
      %v776 = vrot.slane %v775, 4
      %v778 = vshll.u32 %v326, 16
      %v780 = vrot.slane %v778, 5
      %v781 = vsel %vm455, %v776, %v780
      %v782 = vshrl.u32 %v326, 16
      %v784 = vrot.slane %v782, 4
      %v785 = vor.u32 %v784, %v780
      %v786 = vrot.slane %v785, 4
      %v788 = vshll.u32 %v327, 16
      %v790 = vrot.slane %v788, 5
      %v791 = vsel %vm455, %v786, %v790
      %v793 = vshrl.u32 %v328, 16
      %v795 = vrot.slane %v793, 4
      %v796 = vshll.u32 %v328, 16
      %v798 = vrot.slane %v796, 5
      %v799 = vor.u32 %v795, %v798
      %v800 = vrot.slane %v799, 4
      %v802 = vshll.u32 %v329, 16
      %v804 = vrot.slane %v802, 5
      %v805 = vsel %vm455, %v800, %v804
      %v806 = vshrl.u32 %v329, 16
      %v808 = vrot.slane %v806, 4
      %v809 = vor.u32 %v808, %v804
      %v810 = vrot.slane %v809, 4
      %v812 = vshll.u32 %v330, 16
      %v814 = vrot.slane %v812, 5
      %v815 = vsel %vm455, %v810, %v814
      %v817 = vshrl.u32 %v331, 16
      %v819 = vrot.slane %v817, 4
      %v820 = vshll.u32 %v331, 16
      %v822 = vrot.slane %v820, 5
      %v823 = vor.u32 %v819, %v822
      %v824 = vrot.slane %v823, 4
      %v826 = vshll.u32 %v332, 16
      %v828 = vrot.slane %v826, 5
      %v829 = vsel %vm455, %v824, %v828
      %v830 = vshrl.u32 %v332, 16
      %v832 = vrot.slane %v830, 4
      %v833 = vor.u32 %v832, %v828
      %v834 = vrot.slane %v833, 4
      %v836 = vshll.u32 %v333, 16
      %v838 = vrot.slane %v836, 5
      %v839 = vsel %vm455, %v834, %v838
      %v840 = vunpack.c.l.b16 %v469
      %v841 = vunpack.c.l.b16 %v479
      %v842 = vunpack.c.l.b16 %v493
      %v843 = vunpack.c.l.b16 %v503
      %v844 = vunpack.c.l.b16 %v517
      %v845 = vunpack.c.l.b16 %v527
      %v846 = vunpack.c.l.b16 %v541
      %v847 = vunpack.c.l.b16 %v551
      %v848 = vunpack.c.l.b16 %v565
      %v849 = vunpack.c.l.b16 %v575
      %v850 = vunpack.c.l.b16 %v589
      %v851 = vunpack.c.l.b16 %v599
      %v852 = vunpack.c.l.b16 %v613
      %v853 = vunpack.c.l.b16 %v623
      %v854 = vunpack.c.l.b16 %v637
      %v855 = vunpack.c.l.b16 %v647
      %v856 = vunpack.c.l.b16 %v661
      %v857 = vunpack.c.l.b16 %v671
      %v858 = vunpack.c.l.b16 %v685
      %v859 = vunpack.c.l.b16 %v695
      %v860 = vunpack.c.l.b16 %v709
      %v861 = vunpack.c.l.b16 %v719
      %v862 = vunpack.c.l.b16 %v733
      %v863 = vunpack.c.l.b16 %v743
      %v864 = vunpack.c.l.b16 %v757
      %v865 = vunpack.c.l.b16 %v767
      %v866 = vunpack.c.l.b16 %v781
      %v867 = vunpack.c.l.b16 %v791
      %v868 = vunpack.c.l.b16 %v805
      %v869 = vunpack.c.l.b16 %v815
      %v870 = vunpack.c.l.b16 %v829
      %v871 = vunpack.c.l.b16 %v839
      %v872 = vpack.c.b16 %v841, %v840
      %v873 = vpack.c.b16 %v843, %v842
      %v874 = vpack.c.b16 %v845, %v844
      %v875 = vpack.c.b16 %v847, %v846
      %v876 = vpack.c.b16 %v849, %v848
      %v877 = vpack.c.b16 %v851, %v850
      %v878 = vpack.c.b16 %v853, %v852
      %v879 = vpack.c.b16 %v855, %v854
      %v880 = vpack.c.b16 %v857, %v856
      %v881 = vpack.c.b16 %v859, %v858
      %v882 = vpack.c.b16 %v861, %v860
      %v883 = vpack.c.b16 %v863, %v862
      %v884 = vpack.c.b16 %v865, %v864
      %v885 = vpack.c.b16 %v867, %v866
      %v886 = vpack.c.b16 %v869, %v868
      %v887 = vpack.c.b16 %v871, %v870
      %888 = vrot.lane.b32.xlu0 %v872, 16
      %v889 = vpop.permute.xlu0 %888
      %890 = vrot.lane.b32.xlu0 %v873, 16
      %v891 = vpop.permute.xlu0 %890
      %892 = vrot.lane.b32.xlu0 %v874, 16
      %v893 = vpop.permute.xlu0 %892
      %894 = vrot.lane.b32.xlu0 %v875, 16
      %v895 = vpop.permute.xlu0 %894
      %896 = vrot.lane.b32.xlu0 %v876, 16
      %v897 = vpop.permute.xlu0 %896
      %898 = vrot.lane.b32.xlu0 %v877, 16
      %v899 = vpop.permute.xlu0 %898
      %900 = vrot.lane.b32.xlu0 %v878, 16
      %v901 = vpop.permute.xlu0 %900
      %902 = vrot.lane.b32.xlu0 %v879, 16
      %v903 = vpop.permute.xlu0 %902
      %904 = vrot.lane.b32.xlu0 %v880, 16
      %v905 = vpop.permute.xlu0 %904
      %906 = vrot.lane.b32.xlu0 %v881, 16
      %v907 = vpop.permute.xlu0 %906
      %908 = vrot.lane.b32.xlu0 %v882, 16
      %v909 = vpop.permute.xlu0 %908
      %910 = vrot.lane.b32.xlu0 %v883, 16
      %v911 = vpop.permute.xlu0 %910
      %912 = vrot.lane.b32.xlu0 %v884, 16
      %v913 = vpop.permute.xlu0 %912
      %914 = vrot.lane.b32.xlu0 %v885, 16
      %v915 = vpop.permute.xlu0 %914
      %916 = vrot.lane.b32.xlu0 %v886, 16
      %v917 = vpop.permute.xlu0 %916
      %918 = vrot.lane.b32.xlu0 %v887, 16
      %v919 = vpop.permute.xlu0 %918
      %vm936 = vcmask 261248
      %937 = vst.msk [vmem:[#allocation2] sm:$0xff] %vm936, %v889
      %938 = vst.msk [vmem:[#allocation2 + $0x10] sm:$0xff] %vm936, %v891
      %939 = vst.msk [vmem:[#allocation2 + $0x20] sm:$0xff] %vm936, %v893
      %940 = vst.msk [vmem:[#allocation2 + $0x30] sm:$0xff] %vm936, %v895
      %941 = vst.msk [vmem:[#allocation2 + $0x40] sm:$0xff] %vm936, %v897
      %942 = vst.msk [vmem:[#allocation2 + $0x50] sm:$0xff] %vm936, %v899
      %943 = vst.msk [vmem:[#allocation2 + $0x60] sm:$0xff] %vm936, %v901
      %944 = vst.msk [vmem:[#allocation2 + $0x70] sm:$0xff] %vm936, %v903
      %945 = vst.msk [vmem:[#allocation2 + $0x80] sm:$0xff] %vm936, %v905
      %946 = vst.msk [vmem:[#allocation2 + $0x90] sm:$0xff] %vm936, %v907
      %947 = vst.msk [vmem:[#allocation2 + $0xa0] sm:$0xff] %vm936, %v909
      %948 = vst.msk [vmem:[#allocation2 + $0xb0] sm:$0xff] %vm936, %v911
      %949 = vst.msk [vmem:[#allocation2 + $0xc0] sm:$0xff] %vm936, %v913
      %950 = vst.msk [vmem:[#allocation2 + $0xd0] sm:$0xff] %vm936, %v915
      %951 = vst.msk [vmem:[#allocation2 + $0xe0] sm:$0xff] %vm936, %v917
      %952 = vst.msk [vmem:[#allocation2 + $0xf0] sm:$0xff] %vm936, %v919
      %vm969 = vcmask 1042432
      %vm970 = vcmask 1046532
      %vm971 = vmor %vm969, %vm970
      %v972 = vrot.slane %v286, 5
      %v973 = vrot.slane %v972, 4
      %v974 = vrot.slane %v287, 5
      %v975 = vsel %vm971, %v973, %v974
      %v976 = vrot.slane %v974, 4
      %v977 = vrot.slane %v288, 5
      %v978 = vsel %vm971, %v976, %v977
      %v979 = vrot.slane %v289, 5
      %v980 = vrot.slane %v979, 4
      %v981 = vrot.slane %v290, 5
      %v982 = vsel %vm971, %v980, %v981
      %v983 = vrot.slane %v981, 4
      %v984 = vrot.slane %v291, 5
      %v985 = vsel %vm971, %v983, %v984
      %v986 = vrot.slane %v292, 5
      %v987 = vrot.slane %v986, 4
      %v988 = vrot.slane %v293, 5
      %v989 = vsel %vm971, %v987, %v988
      %v990 = vrot.slane %v988, 4
      %v991 = vrot.slane %v294, 5
      %v992 = vsel %vm971, %v990, %v991
      %v993 = vrot.slane %v295, 5
      %v994 = vrot.slane %v993, 4
      %v995 = vrot.slane %v296, 5
      %v996 = vsel %vm971, %v994, %v995
      %v997 = vrot.slane %v995, 4
      %v998 = vrot.slane %v297, 5
      %v999 = vsel %vm971, %v997, %v998
      %v1000 = vrot.slane %v298, 5
      %v1001 = vrot.slane %v1000, 4
      %v1002 = vrot.slane %v299, 5
      %v1003 = vsel %vm971, %v1001, %v1002
      %v1004 = vrot.slane %v1002, 4
      %v1005 = vrot.slane %v300, 5
      %v1006 = vsel %vm971, %v1004, %v1005
      %v1007 = vrot.slane %v301, 5
      %v1008 = vrot.slane %v1007, 4
      %v1009 = vrot.slane %v302, 5
      %v1010 = vsel %vm971, %v1008, %v1009
      %v1011 = vrot.slane %v1009, 4
      %v1012 = vrot.slane %v303, 5
      %v1013 = vsel %vm971, %v1011, %v1012
      %v1014 = vrot.slane %v304, 5
      %v1015 = vrot.slane %v1014, 4
      %v1016 = vrot.slane %v305, 5
      %v1017 = vsel %vm971, %v1015, %v1016
      %v1018 = vrot.slane %v1016, 4
      %v1019 = vrot.slane %v306, 5
      %v1020 = vsel %vm971, %v1018, %v1019
      %v1021 = vrot.slane %v307, 5
      %v1022 = vrot.slane %v1021, 4
      %v1023 = vrot.slane %v308, 5
      %v1024 = vsel %vm971, %v1022, %v1023
      %v1025 = vrot.slane %v1023, 4
      %v1026 = vrot.slane %v309, 5
      %v1027 = vsel %vm971, %v1025, %v1026
      %v1028 = vrot.slane %v310, 5
      %v1029 = vrot.slane %v1028, 4
      %v1030 = vrot.slane %v311, 5
      %v1031 = vsel %vm971, %v1029, %v1030
      %v1032 = vrot.slane %v1030, 4
      %v1033 = vrot.slane %v312, 5
      %v1034 = vsel %vm971, %v1032, %v1033
      %v1035 = vrot.slane %v313, 5
      %v1036 = vrot.slane %v1035, 4
      %v1037 = vrot.slane %v314, 5
      %v1038 = vsel %vm971, %v1036, %v1037
      %v1039 = vrot.slane %v1037, 4
      %v1040 = vrot.slane %v315, 5
      %v1041 = vsel %vm971, %v1039, %v1040
      %v1042 = vrot.slane %v316, 5
      %v1043 = vrot.slane %v1042, 4
      %v1044 = vrot.slane %v317, 5
      %v1045 = vsel %vm971, %v1043, %v1044
      %v1046 = vrot.slane %v1044, 4
      %v1047 = vrot.slane %v318, 5
      %v1048 = vsel %vm971, %v1046, %v1047
      %v1049 = vrot.slane %v319, 5
      %v1050 = vrot.slane %v1049, 4
      %v1051 = vrot.slane %v320, 5
      %v1052 = vsel %vm971, %v1050, %v1051
      %v1053 = vrot.slane %v1051, 4
      %v1054 = vrot.slane %v321, 5
      %v1055 = vsel %vm971, %v1053, %v1054
      %v1056 = vrot.slane %v322, 5
      %v1057 = vrot.slane %v1056, 4
      %v1058 = vrot.slane %v323, 5
      %v1059 = vsel %vm971, %v1057, %v1058
      %v1060 = vrot.slane %v1058, 4
      %v1061 = vrot.slane %v324, 5
      %v1062 = vsel %vm971, %v1060, %v1061
      %v1063 = vrot.slane %v325, 5
      %v1064 = vrot.slane %v1063, 4
      %v1065 = vrot.slane %v326, 5
      %v1066 = vsel %vm971, %v1064, %v1065
      %v1067 = vrot.slane %v1065, 4
      %v1068 = vrot.slane %v327, 5
      %v1069 = vsel %vm971, %v1067, %v1068
      %v1070 = vrot.slane %v328, 5
      %v1071 = vrot.slane %v1070, 4
      %v1072 = vrot.slane %v329, 5
      %v1073 = vsel %vm971, %v1071, %v1072
      %v1074 = vrot.slane %v1072, 4
      %v1075 = vrot.slane %v330, 5
      %v1076 = vsel %vm971, %v1074, %v1075
      %v1077 = vrot.slane %v331, 5
      %v1078 = vrot.slane %v1077, 4
      %v1079 = vrot.slane %v332, 5
      %v1080 = vsel %vm971, %v1078, %v1079
      %v1081 = vrot.slane %v1079, 4
      %v1082 = vrot.slane %v333, 5
      %v1083 = vsel %vm971, %v1081, %v1082
      %v1084 = vunpack.c.l.b16 %v975
      %v1085 = vunpack.c.l.b16 %v978
      %v1086 = vunpack.c.l.b16 %v982
      %v1087 = vunpack.c.l.b16 %v985
      %v1088 = vunpack.c.l.b16 %v989
      %v1089 = vunpack.c.l.b16 %v992
      %v1090 = vunpack.c.l.b16 %v996
      %v1091 = vunpack.c.l.b16 %v999
      %v1092 = vunpack.c.l.b16 %v1003
      %v1093 = vunpack.c.l.b16 %v1006
      %v1094 = vunpack.c.l.b16 %v1010
      %v1095 = vunpack.c.l.b16 %v1013
      %v1096 = vunpack.c.l.b16 %v1017
      %v1097 = vunpack.c.l.b16 %v1020
      %v1098 = vunpack.c.l.b16 %v1024
      %v1099 = vunpack.c.l.b16 %v1027
      %v1100 = vunpack.c.l.b16 %v1031
      %v1101 = vunpack.c.l.b16 %v1034
      %v1102 = vunpack.c.l.b16 %v1038
      %v1103 = vunpack.c.l.b16 %v1041
      %v1104 = vunpack.c.l.b16 %v1045
      %v1105 = vunpack.c.l.b16 %v1048
      %v1106 = vunpack.c.l.b16 %v1052
      %v1107 = vunpack.c.l.b16 %v1055
      %v1108 = vunpack.c.l.b16 %v1059
      %v1109 = vunpack.c.l.b16 %v1062
      %v1110 = vunpack.c.l.b16 %v1066
      %v1111 = vunpack.c.l.b16 %v1069
      %v1112 = vunpack.c.l.b16 %v1073
      %v1113 = vunpack.c.l.b16 %v1076
      %v1114 = vunpack.c.l.b16 %v1080
      %v1115 = vunpack.c.l.b16 %v1083
      %v1116 = vpack.c.b16 %v1085, %v1084
      %v1117 = vpack.c.b16 %v1087, %v1086
      %v1118 = vpack.c.b16 %v1089, %v1088
      %v1119 = vpack.c.b16 %v1091, %v1090
      %v1120 = vpack.c.b16 %v1093, %v1092
      %v1121 = vpack.c.b16 %v1095, %v1094
      %v1122 = vpack.c.b16 %v1097, %v1096
      %v1123 = vpack.c.b16 %v1099, %v1098
      %v1124 = vpack.c.b16 %v1101, %v1100
      %v1125 = vpack.c.b16 %v1103, %v1102
      %v1126 = vpack.c.b16 %v1105, %v1104
      %v1127 = vpack.c.b16 %v1107, %v1106
      %v1128 = vpack.c.b16 %v1109, %v1108
      %v1129 = vpack.c.b16 %v1111, %v1110
      %v1130 = vpack.c.b16 %v1113, %v1112
      %v1131 = vpack.c.b16 %v1115, %v1114
      %1132 = vrot.lane.b32.xlu0 %v1116, 32
      %v1133 = vpop.permute.xlu0 %1132
      %1134 = vrot.lane.b32.xlu0 %v1117, 32
      %v1135 = vpop.permute.xlu0 %1134
      %1136 = vrot.lane.b32.xlu0 %v1118, 32
      %v1137 = vpop.permute.xlu0 %1136
      %1138 = vrot.lane.b32.xlu0 %v1119, 32
      %v1139 = vpop.permute.xlu0 %1138
      %1140 = vrot.lane.b32.xlu0 %v1120, 32
      %v1141 = vpop.permute.xlu0 %1140
      %1142 = vrot.lane.b32.xlu0 %v1121, 32
      %v1143 = vpop.permute.xlu0 %1142
      %1144 = vrot.lane.b32.xlu0 %v1122, 32
      %v1145 = vpop.permute.xlu0 %1144
      %1146 = vrot.lane.b32.xlu0 %v1123, 32
      %v1147 = vpop.permute.xlu0 %1146
      %1148 = vrot.lane.b32.xlu0 %v1124, 32
      %v1149 = vpop.permute.xlu0 %1148
      %1150 = vrot.lane.b32.xlu0 %v1125, 32
      %v1151 = vpop.permute.xlu0 %1150
      %1152 = vrot.lane.b32.xlu0 %v1126, 32
      %v1153 = vpop.permute.xlu0 %1152
      %1154 = vrot.lane.b32.xlu0 %v1127, 32
      %v1155 = vpop.permute.xlu0 %1154
      %1156 = vrot.lane.b32.xlu0 %v1128, 32
      %v1157 = vpop.permute.xlu0 %1156
      %1158 = vrot.lane.b32.xlu0 %v1129, 32
      %v1159 = vpop.permute.xlu0 %1158
      %1160 = vrot.lane.b32.xlu0 %v1130, 32
      %v1161 = vpop.permute.xlu0 %1160
      %1162 = vrot.lane.b32.xlu0 %v1131, 32
      %v1163 = vpop.permute.xlu0 %1162
      %vm1180 = vcmask 392448
      %1181 = vst.msk [vmem:[#allocation2] sm:$0xff] %vm1180, %v1133
      %1182 = vst.msk [vmem:[#allocation2 + $0x10] sm:$0xff] %vm1180, %v1135
      %1183 = vst.msk [vmem:[#allocation2 + $0x20] sm:$0xff] %vm1180, %v1137
      %1184 = vst.msk [vmem:[#allocation2 + $0x30] sm:$0xff] %vm1180, %v1139
      %1185 = vst.msk [vmem:[#allocation2 + $0x40] sm:$0xff] %vm1180, %v1141
      %1186 = vst.msk [vmem:[#allocation2 + $0x50] sm:$0xff] %vm1180, %v1143
      %1187 = vst.msk [vmem:[#allocation2 + $0x60] sm:$0xff] %vm1180, %v1145
      %1188 = vst.msk [vmem:[#allocation2 + $0x70] sm:$0xff] %vm1180, %v1147
      %1189 = vst.msk [vmem:[#allocation2 + $0x80] sm:$0xff] %vm1180, %v1149
      %1190 = vst.msk [vmem:[#allocation2 + $0x90] sm:$0xff] %vm1180, %v1151
      %1191 = vst.msk [vmem:[#allocation2 + $0xa0] sm:$0xff] %vm1180, %v1153
      %1192 = vst.msk [vmem:[#allocation2 + $0xb0] sm:$0xff] %vm1180, %v1155
      %1193 = vst.msk [vmem:[#allocation2 + $0xc0] sm:$0xff] %vm1180, %v1157
      %1194 = vst.msk [vmem:[#allocation2 + $0xd0] sm:$0xff] %vm1180, %v1159
      %1195 = vst.msk [vmem:[#allocation2 + $0xe0] sm:$0xff] %vm1180, %v1161
      %1196 = vst.msk [vmem:[#allocation2 + $0xf0] sm:$0xff] %vm1180, %v1163
      %v1199 = vunpack.c.l.b16 %v334
      %v1200 = vunpack.c.l.b16 %v335
      %v1201 = vpack.c.b16 %v1200, %v1199
      %1202 = vrot.lane.b32.xlu0 %v405, 48
      %v1203 = vpop.permute.xlu0 %1202
      %1204 = vrot.lane.b32.xlu0 %v406, 48
      %v1205 = vpop.permute.xlu0 %1204
      %1206 = vrot.lane.b32.xlu0 %v407, 48
      %v1207 = vpop.permute.xlu0 %1206
      %1208 = vrot.lane.b32.xlu0 %v408, 48
      %v1209 = vpop.permute.xlu0 %1208
      %1210 = vrot.lane.b32.xlu0 %v409, 48
      %v1211 = vpop.permute.xlu0 %1210
      %1212 = vrot.lane.b32.xlu0 %v410, 48
      %v1213 = vpop.permute.xlu0 %1212
      %1214 = vrot.lane.b32.xlu0 %v411, 48
      %v1215 = vpop.permute.xlu0 %1214
      %1216 = vrot.lane.b32.xlu0 %v412, 48
      %v1217 = vpop.permute.xlu0 %1216
      %1218 = vrot.lane.b32.xlu0 %v413, 48
      %v1219 = vpop.permute.xlu0 %1218
      %1220 = vrot.lane.b32.xlu0 %v414, 48
      %v1221 = vpop.permute.xlu0 %1220
      %1222 = vrot.lane.b32.xlu0 %v415, 48
      %v1223 = vpop.permute.xlu0 %1222
      %1224 = vrot.lane.b32.xlu0 %v416, 48
      %v1225 = vpop.permute.xlu0 %1224
      %1226 = vrot.lane.b32.xlu0 %v417, 48
      %v1227 = vpop.permute.xlu0 %1226
      %1228 = vrot.lane.b32.xlu0 %v418, 48
      %v1229 = vpop.permute.xlu0 %1228
      %1230 = vrot.lane.b32.xlu0 %v419, 48
      %v1231 = vpop.permute.xlu0 %1230
      %1232 = vrot.lane.b32.xlu0 %v1201, 48
      %v1233 = vpop.permute.xlu0 %1232
      %vm1250 = vcmask 523648
      %1251 = vst.msk [vmem:[#allocation2] sm:$0xff] %vm1250, %v1203
      %1252 = vst.msk [vmem:[#allocation2 + $0x10] sm:$0xff] %vm1250, %v1205
      %1253 = vst.msk [vmem:[#allocation2 + $0x20] sm:$0xff] %vm1250, %v1207
      %1254 = vst.msk [vmem:[#allocation2 + $0x30] sm:$0xff] %vm1250, %v1209
      %1255 = vst.msk [vmem:[#allocation2 + $0x40] sm:$0xff] %vm1250, %v1211
      %1256 = vst.msk [vmem:[#allocation2 + $0x50] sm:$0xff] %vm1250, %v1213
      %1257 = vst.msk [vmem:[#allocation2 + $0x60] sm:$0xff] %vm1250, %v1215
      %1258 = vst.msk [vmem:[#allocation2 + $0x70] sm:$0xff] %vm1250, %v1217
      %1259 = vst.msk [vmem:[#allocation2 + $0x80] sm:$0xff] %vm1250, %v1219
      %1260 = vst.msk [vmem:[#allocation2 + $0x90] sm:$0xff] %vm1250, %v1221
      %1261 = vst.msk [vmem:[#allocation2 + $0xa0] sm:$0xff] %vm1250, %v1223
      %1262 = vst.msk [vmem:[#allocation2 + $0xb0] sm:$0xff] %vm1250, %v1225
      %1263 = vst.msk [vmem:[#allocation2 + $0xc0] sm:$0xff] %vm1250, %v1227
      %1264 = vst.msk [vmem:[#allocation2 + $0xd0] sm:$0xff] %vm1250, %v1229
      %1265 = vst.msk [vmem:[#allocation2 + $0xe0] sm:$0xff] %vm1250, %v1231
      %1266 = vst.msk [vmem:[#allocation2 + $0xf0] sm:$0xff] %vm1250, %v1233
      %v1268 = vshrl.u32 %v334, 16
      %v1270 = vrot.slane %v1268, 4
      %v1271 = vshll.u32 %v334, 16
      %v1273 = vrot.slane %v1271, 5
      %v1274 = vor.u32 %v1270, %v1273
      %v1275 = vrot.slane %v1274, 4
      %v1277 = vshll.u32 %v335, 16
      %v1279 = vrot.slane %v1277, 5
      %v1280 = vsel %vm455, %v1275, %v1279
      %v1281 = vshrl.u32 %v335, 16
      %v1283 = vrot.slane %v1281, 4
      %v1284 = vor.u32 %v1283, %v1279
      %v1285 = vrot.slane %v1284, 4
      %v1287 = vshll.u32 %v336, 16
      %v1289 = vrot.slane %v1287, 5
      %v1290 = vsel %vm455, %v1285, %v1289
      %v1291 = vunpack.c.l.b16 %v1280
      %v1292 = vunpack.c.l.b16 %v1290
      %v1293 = vpack.c.b16 %v1292, %v1291
      %1294 = vrot.lane.b32.xlu0 %v873, 64
      %v1295 = vpop.permute.xlu0 %1294
      %1296 = vrot.lane.b32.xlu0 %v874, 64
      %v1297 = vpop.permute.xlu0 %1296
      %1298 = vrot.lane.b32.xlu0 %v875, 64
      %v1299 = vpop.permute.xlu0 %1298
      %1300 = vrot.lane.b32.xlu0 %v876, 64
      %v1301 = vpop.permute.xlu0 %1300
      %1302 = vrot.lane.b32.xlu0 %v877, 64
      %v1303 = vpop.permute.xlu0 %1302
      %1304 = vrot.lane.b32.xlu0 %v878, 64
      %v1305 = vpop.permute.xlu0 %1304
      %1306 = vrot.lane.b32.xlu0 %v879, 64
      %v1307 = vpop.permute.xlu0 %1306
      %1308 = vrot.lane.b32.xlu0 %v880, 64
      %v1309 = vpop.permute.xlu0 %1308
      %1310 = vrot.lane.b32.xlu0 %v881, 64
      %v1311 = vpop.permute.xlu0 %1310
      %1312 = vrot.lane.b32.xlu0 %v882, 64
      %v1313 = vpop.permute.xlu0 %1312
      %1314 = vrot.lane.b32.xlu0 %v883, 64
      %v1315 = vpop.permute.xlu0 %1314
      %1316 = vrot.lane.b32.xlu0 %v884, 64
      %v1317 = vpop.permute.xlu0 %1316
      %1318 = vrot.lane.b32.xlu0 %v885, 64
      %v1319 = vpop.permute.xlu0 %1318
      %1320 = vrot.lane.b32.xlu0 %v886, 64
      %v1321 = vpop.permute.xlu0 %1320
      %1322 = vrot.lane.b32.xlu0 %v887, 64
      %v1323 = vpop.permute.xlu0 %1322
      %1324 = vrot.lane.b32.xlu0 %v1293, 64
      %v1325 = vpop.permute.xlu0 %1324
      %vm1342 = vcmask 654848
      %1343 = vst.msk [vmem:[#allocation2] sm:$0xff] %vm1342, %v1295
      %1344 = vst.msk [vmem:[#allocation2 + $0x10] sm:$0xff] %vm1342, %v1297
      %1345 = vst.msk [vmem:[#allocation2 + $0x20] sm:$0xff] %vm1342, %v1299
      %1346 = vst.msk [vmem:[#allocation2 + $0x30] sm:$0xff] %vm1342, %v1301
      %1347 = vst.msk [vmem:[#allocation2 + $0x40] sm:$0xff] %vm1342, %v1303
      %1348 = vst.msk [vmem:[#allocation2 + $0x50] sm:$0xff] %vm1342, %v1305
      %1349 = vst.msk [vmem:[#allocation2 + $0x60] sm:$0xff] %vm1342, %v1307
      %1350 = vst.msk [vmem:[#allocation2 + $0x70] sm:$0xff] %vm1342, %v1309
      %1351 = vst.msk [vmem:[#allocation2 + $0x80] sm:$0xff] %vm1342, %v1311
      %1352 = vst.msk [vmem:[#allocation2 + $0x90] sm:$0xff] %vm1342, %v1313
      %1353 = vst.msk [vmem:[#allocation2 + $0xa0] sm:$0xff] %vm1342, %v1315
      %1354 = vst.msk [vmem:[#allocation2 + $0xb0] sm:$0xff] %vm1342, %v1317
      %1355 = vst.msk [vmem:[#allocation2 + $0xc0] sm:$0xff] %vm1342, %v1319
      %1356 = vst.msk [vmem:[#allocation2 + $0xd0] sm:$0xff] %vm1342, %v1321
      %1357 = vst.msk [vmem:[#allocation2 + $0xe0] sm:$0xff] %vm1342, %v1323
      %1358 = vst.msk [vmem:[#allocation2 + $0xf0] sm:$0xff] %vm1342, %v1325
      %v1360 = vrot.slane %v334, 5
      %v1361 = vrot.slane %v1360, 4
      %v1362 = vrot.slane %v335, 5
      %v1363 = vsel %vm971, %v1361, %v1362
      %v1364 = vrot.slane %v1362, 4
      %v1365 = vrot.slane %v336, 5
      %v1366 = vsel %vm971, %v1364, %v1365
      %v1367 = vunpack.c.l.b16 %v1363
      %v1368 = vunpack.c.l.b16 %v1366
      %v1369 = vpack.c.b16 %v1368, %v1367
      %1370 = vrot.lane.b32.xlu0 %v1117, 80
      %v1371 = vpop.permute.xlu0 %1370
      %1372 = vrot.lane.b32.xlu0 %v1118, 80
      %v1373 = vpop.permute.xlu0 %1372
      %1374 = vrot.lane.b32.xlu0 %v1119, 80
      %v1375 = vpop.permute.xlu0 %1374
      %1376 = vrot.lane.b32.xlu0 %v1120, 80
      %v1377 = vpop.permute.xlu0 %1376
      %1378 = vrot.lane.b32.xlu0 %v1121, 80
      %v1379 = vpop.permute.xlu0 %1378
      %1380 = vrot.lane.b32.xlu0 %v1122, 80
      %v1381 = vpop.permute.xlu0 %1380
      %1382 = vrot.lane.b32.xlu0 %v1123, 80
      %v1383 = vpop.permute.xlu0 %1382
      %1384 = vrot.lane.b32.xlu0 %v1124, 80
      %v1385 = vpop.permute.xlu0 %1384
      %1386 = vrot.lane.b32.xlu0 %v1125, 80
      %v1387 = vpop.permute.xlu0 %1386
      %1388 = vrot.lane.b32.xlu0 %v1126, 80
      %v1389 = vpop.permute.xlu0 %1388
      %1390 = vrot.lane.b32.xlu0 %v1127, 80
      %v1391 = vpop.permute.xlu0 %1390
      %1392 = vrot.lane.b32.xlu0 %v1128, 80
      %v1393 = vpop.permute.xlu0 %1392
      %1394 = vrot.lane.b32.xlu0 %v1129, 80
      %v1395 = vpop.permute.xlu0 %1394
      %1396 = vrot.lane.b32.xlu0 %v1130, 80
      %v1397 = vpop.permute.xlu0 %1396
      %1398 = vrot.lane.b32.xlu0 %v1131, 80
      %v1399 = vpop.permute.xlu0 %1398
      %1400 = vrot.lane.b32.xlu0 %v1369, 80
      %v1401 = vpop.permute.xlu0 %1400
      %vm1418 = vcmask 786048
      %1419 = vst.msk [vmem:[#allocation2] sm:$0xff] %vm1418, %v1371
      %1420 = vst.msk [vmem:[#allocation2 + $0x10] sm:$0xff] %vm1418, %v1373
      %1421 = vst.msk [vmem:[#allocation2 + $0x20] sm:$0xff] %vm1418, %v1375
      %1422 = vst.msk [vmem:[#allocation2 + $0x30] sm:$0xff] %vm1418, %v1377
      %1423 = vst.msk [vmem:[#allocation2 + $0x40] sm:$0xff] %vm1418, %v1379
      %1424 = vst.msk [vmem:[#allocation2 + $0x50] sm:$0xff] %vm1418, %v1381
      %1425 = vst.msk [vmem:[#allocation2 + $0x60] sm:$0xff] %vm1418, %v1383
      %1426 = vst.msk [vmem:[#allocation2 + $0x70] sm:$0xff] %vm1418, %v1385
      %1427 = vst.msk [vmem:[#allocation2 + $0x80] sm:$0xff] %vm1418, %v1387
      %1428 = vst.msk [vmem:[#allocation2 + $0x90] sm:$0xff] %vm1418, %v1389
      %1429 = vst.msk [vmem:[#allocation2 + $0xa0] sm:$0xff] %vm1418, %v1391
      %1430 = vst.msk [vmem:[#allocation2 + $0xb0] sm:$0xff] %vm1418, %v1393
      %1431 = vst.msk [vmem:[#allocation2 + $0xc0] sm:$0xff] %vm1418, %v1395
      %1432 = vst.msk [vmem:[#allocation2 + $0xd0] sm:$0xff] %vm1418, %v1397
      %1433 = vst.msk [vmem:[#allocation2 + $0xe0] sm:$0xff] %vm1418, %v1399
      %1434 = vst.msk [vmem:[#allocation2 + $0xf0] sm:$0xff] %vm1418, %v1401
      %v1437 = vunpack.c.l.b16 %v337
      %v1438 = vunpack.c.l.b16 %v338
      %v1439 = vpack.c.b16 %v1438, %v1437
      %1440 = vrot.lane.b32.xlu0 %v406, 96
      %v1441 = vpop.permute.xlu0 %1440
      %1442 = vrot.lane.b32.xlu0 %v407, 96
      %v1443 = vpop.permute.xlu0 %1442
      %1444 = vrot.lane.b32.xlu0 %v408, 96
      %v1445 = vpop.permute.xlu0 %1444
      %1446 = vrot.lane.b32.xlu0 %v409, 96
      %v1447 = vpop.permute.xlu0 %1446
      %1448 = vrot.lane.b32.xlu0 %v410, 96
      %v1449 = vpop.permute.xlu0 %1448
      %1450 = vrot.lane.b32.xlu0 %v411, 96
      %v1451 = vpop.permute.xlu0 %1450
      %1452 = vrot.lane.b32.xlu0 %v412, 96
      %v1453 = vpop.permute.xlu0 %1452
      %1454 = vrot.lane.b32.xlu0 %v413, 96
      %v1455 = vpop.permute.xlu0 %1454
      %1456 = vrot.lane.b32.xlu0 %v414, 96
      %v1457 = vpop.permute.xlu0 %1456
      %1458 = vrot.lane.b32.xlu0 %v415, 96
      %v1459 = vpop.permute.xlu0 %1458
      %1460 = vrot.lane.b32.xlu0 %v416, 96
      %v1461 = vpop.permute.xlu0 %1460
      %1462 = vrot.lane.b32.xlu0 %v417, 96
      %v1463 = vpop.permute.xlu0 %1462
      %1464 = vrot.lane.b32.xlu0 %v418, 96
      %v1465 = vpop.permute.xlu0 %1464
      %1466 = vrot.lane.b32.xlu0 %v419, 96
      %v1467 = vpop.permute.xlu0 %1466
      %1468 = vrot.lane.b32.xlu0 %v1201, 96
      %v1469 = vpop.permute.xlu0 %1468
      %1470 = vrot.lane.b32.xlu0 %v1439, 96
      %v1471 = vpop.permute.xlu0 %1470
      %vm1488 = vcmask 917248
      %1489 = vst.msk [vmem:[#allocation2] sm:$0xff] %vm1488, %v1441
      %1490 = vst.msk [vmem:[#allocation2 + $0x10] sm:$0xff] %vm1488, %v1443
      %1491 = vst.msk [vmem:[#allocation2 + $0x20] sm:$0xff] %vm1488, %v1445
      %1492 = vst.msk [vmem:[#allocation2 + $0x30] sm:$0xff] %vm1488, %v1447
      %1493 = vst.msk [vmem:[#allocation2 + $0x40] sm:$0xff] %vm1488, %v1449
      %1494 = vst.msk [vmem:[#allocation2 + $0x50] sm:$0xff] %vm1488, %v1451
      %1495 = vst.msk [vmem:[#allocation2 + $0x60] sm:$0xff] %vm1488, %v1453
      %1496 = vst.msk [vmem:[#allocation2 + $0x70] sm:$0xff] %vm1488, %v1455
      %1497 = vst.msk [vmem:[#allocation2 + $0x80] sm:$0xff] %vm1488, %v1457
      %1498 = vst.msk [vmem:[#allocation2 + $0x90] sm:$0xff] %vm1488, %v1459
      %1499 = vst.msk [vmem:[#allocation2 + $0xa0] sm:$0xff] %vm1488, %v1461
      %1500 = vst.msk [vmem:[#allocation2 + $0xb0] sm:$0xff] %vm1488, %v1463
      %1501 = vst.msk [vmem:[#allocation2 + $0xc0] sm:$0xff] %vm1488, %v1465
      %1502 = vst.msk [vmem:[#allocation2 + $0xd0] sm:$0xff] %vm1488, %v1467
      %1503 = vst.msk [vmem:[#allocation2 + $0xe0] sm:$0xff] %vm1488, %v1469
      %1504 = vst.msk [vmem:[#allocation2 + $0xf0] sm:$0xff] %vm1488, %v1471
      %v1506 = vshrl.u32 %v337, 16
      %v1508 = vrot.slane %v1506, 4
      %v1509 = vshll.u32 %v337, 16
      %v1511 = vrot.slane %v1509, 5
      %v1512 = vor.u32 %v1508, %v1511
      %v1513 = vrot.slane %v1512, 4
      %v1515 = vshll.u32 %v338, 16
      %v1517 = vrot.slane %v1515, 5
      %v1518 = vsel %vm455, %v1513, %v1517
      %v1519 = vshrl.u32 %v338, 16
      %v1521 = vrot.slane %v1519, 4
      %v1522 = vor.u32 %v1521, %v1517
      %v1523 = vrot.slane %v1522, 4
      %v1525 = vshll.u32 %v339, 16
      %v1527 = vrot.slane %v1525, 5
      %v1528 = vsel %vm455, %v1523, %v1527
      %v1529 = vunpack.c.l.b16 %v1518
      %v1530 = vunpack.c.l.b16 %v1528
      %v1531 = vpack.c.b16 %v1530, %v1529
      %1532 = vrot.lane.b32.xlu0 %v874, 112
      %v1533 = vpop.permute.xlu0 %1532
      %1534 = vrot.lane.b32.xlu0 %v875, 112
      %v1535 = vpop.permute.xlu0 %1534
      %1536 = vrot.lane.b32.xlu0 %v876, 112
      %v1537 = vpop.permute.xlu0 %1536
      %1538 = vrot.lane.b32.xlu0 %v877, 112
      %v1539 = vpop.permute.xlu0 %1538
      %1540 = vrot.lane.b32.xlu0 %v878, 112
      %v1541 = vpop.permute.xlu0 %1540
      %1542 = vrot.lane.b32.xlu0 %v879, 112
      %v1543 = vpop.permute.xlu0 %1542
      %1544 = vrot.lane.b32.xlu0 %v880, 112
      %v1545 = vpop.permute.xlu0 %1544
      %1546 = vrot.lane.b32.xlu0 %v881, 112
      %v1547 = vpop.permute.xlu0 %1546
      %1548 = vrot.lane.b32.xlu0 %v882, 112
      %v1549 = vpop.permute.xlu0 %1548
      %1550 = vrot.lane.b32.xlu0 %v883, 112
      %v1551 = vpop.permute.xlu0 %1550
      %1552 = vrot.lane.b32.xlu0 %v884, 112
      %v1553 = vpop.permute.xlu0 %1552
      %1554 = vrot.lane.b32.xlu0 %v885, 112
      %v1555 = vpop.permute.xlu0 %1554
      %1556 = vrot.lane.b32.xlu0 %v886, 112
      %v1557 = vpop.permute.xlu0 %1556
      %1558 = vrot.lane.b32.xlu0 %v887, 112
      %v1559 = vpop.permute.xlu0 %1558
      %1560 = vrot.lane.b32.xlu0 %v1293, 112
      %v1561 = vpop.permute.xlu0 %1560
      %1562 = vrot.lane.b32.xlu0 %v1531, 112
      %v1563 = vpop.permute.xlu0 %1562
      %vm1580 = vcmask 1048448
      %1581 = vst.msk [vmem:[#allocation2] sm:$0xff] %vm1580, %v1533
      %1582 = vst.msk [vmem:[#allocation2 + $0x10] sm:$0xff] %vm1580, %v1535
      %1583 = vst.msk [vmem:[#allocation2 + $0x20] sm:$0xff] %vm1580, %v1537
      %1584 = vst.msk [vmem:[#allocation2 + $0x30] sm:$0xff] %vm1580, %v1539
      %1585 = vst.msk [vmem:[#allocation2 + $0x40] sm:$0xff] %vm1580, %v1541
      %1586 = vst.msk [vmem:[#allocation2 + $0x50] sm:$0xff] %vm1580, %v1543
      %1587 = vst.msk [vmem:[#allocation2 + $0x60] sm:$0xff] %vm1580, %v1545
      %1588 = vst.msk [vmem:[#allocation2 + $0x70] sm:$0xff] %vm1580, %v1547
      %1589 = vst.msk [vmem:[#allocation2 + $0x80] sm:$0xff] %vm1580, %v1549
      %1590 = vst.msk [vmem:[#allocation2 + $0x90] sm:$0xff] %vm1580, %v1551
      %1591 = vst.msk [vmem:[#allocation2 + $0xa0] sm:$0xff] %vm1580, %v1553
      %1592 = vst.msk [vmem:[#allocation2 + $0xb0] sm:$0xff] %vm1580, %v1555
      %1593 = vst.msk [vmem:[#allocation2 + $0xc0] sm:$0xff] %vm1580, %v1557
      %1594 = vst.msk [vmem:[#allocation2 + $0xd0] sm:$0xff] %vm1580, %v1559
      %1595 = vst.msk [vmem:[#allocation2 + $0xe0] sm:$0xff] %vm1580, %v1561
      %1596 = vst.msk [vmem:[#allocation2 + $0xf0] sm:$0xff] %vm1580, %v1563
      %v1598 = vrot.slane %v337, 5
      %v1599 = vrot.slane %v1598, 4
      %v1600 = vrot.slane %v338, 5
      %v1601 = vsel %vm971, %v1599, %v1600
      %v1602 = vrot.slane %v1600, 4
      %v1603 = vrot.slane %v339, 5
      %v1604 = vsel %vm971, %v1602, %v1603
      %v1605 = vunpack.c.l.b16 %v1601
      %v1606 = vunpack.c.l.b16 %v1604
      %v1607 = vpack.c.b16 %v1606, %v1605
      %1624 = vst.msk [vmem:[#allocation2 + $0x8] sm:$0xff] %vm436, %v1118
      %1625 = vst.msk [vmem:[#allocation2 + $0x18] sm:$0xff] %vm436, %v1119
      %1626 = vst.msk [vmem:[#allocation2 + $0x28] sm:$0xff] %vm436, %v1120
      %1627 = vst.msk [vmem:[#allocation2 + $0x38] sm:$0xff] %vm436, %v1121
      %1628 = vst.msk [vmem:[#allocation2 + $0x48] sm:$0xff] %vm436, %v1122
      %1629 = vst.msk [vmem:[#allocation2 + $0x58] sm:$0xff] %vm436, %v1123
      %1630 = vst.msk [vmem:[#allocation2 + $0x68] sm:$0xff] %vm436, %v1124
      %1631 = vst.msk [vmem:[#allocation2 + $0x78] sm:$0xff] %vm436, %v1125
      %1632 = vst.msk [vmem:[#allocation2 + $0x88] sm:$0xff] %vm436, %v1126
      %1633 = vst.msk [vmem:[#allocation2 + $0x98] sm:$0xff] %vm436, %v1127
      %1634 = vst.msk [vmem:[#allocation2 + $0xa8] sm:$0xff] %vm436, %v1128
      %1635 = vst.msk [vmem:[#allocation2 + $0xb8] sm:$0xff] %vm436, %v1129
      %1636 = vst.msk [vmem:[#allocation2 + $0xc8] sm:$0xff] %vm436, %v1130
      %1637 = vst.msk [vmem:[#allocation2 + $0xd8] sm:$0xff] %vm436, %v1131
      %1638 = vst.msk [vmem:[#allocation2 + $0xe8] sm:$0xff] %vm436, %v1369
      %1639 = vst.msk [vmem:[#allocation2 + $0xf8] sm:$0xff] %vm436, %v1607
      %v1640 = vld [vmem:[#allocation2] sm:$0xff]
      %v1641 = vld [vmem:[#allocation2 + $0x8] sm:$0xff]
      %v1642 = vld [vmem:[#allocation2 + $0x10] sm:$0xff]
      %v1643 = vld [vmem:[#allocation2 + $0x18] sm:$0xff]
      %v1644 = vld [vmem:[#allocation2 + $0x20] sm:$0xff]
      %v1645 = vld [vmem:[#allocation2 + $0x28] sm:$0xff]
      %v1646 = vld [vmem:[#allocation2 + $0x30] sm:$0xff]
      %v1647 = vld [vmem:[#allocation2 + $0x38] sm:$0xff]
      %v1648 = vld [vmem:[#allocation2 + $0x40] sm:$0xff]
      %v1649 = vld [vmem:[#allocation2 + $0x48] sm:$0xff]
      %v1650 = vld [vmem:[#allocation2 + $0x50] sm:$0xff]
      %v1651 = vld [vmem:[#allocation2 + $0x58] sm:$0xff]
      %v1652 = vld [vmem:[#allocation2 + $0x60] sm:$0xff]
      %v1653 = vld [vmem:[#allocation2 + $0x68] sm:$0xff]
      %v1654 = vld [vmem:[#allocation2 + $0x70] sm:$0xff]
      %v1655 = vld [vmem:[#allocation2 + $0x78] sm:$0xff]
      %v1656 = vld [vmem:[#allocation2 + $0x80] sm:$0xff]
      %v1657 = vld [vmem:[#allocation2 + $0x88] sm:$0xff]
      %v1658 = vld [vmem:[#allocation2 + $0x90] sm:$0xff]
      %v1659 = vld [vmem:[#allocation2 + $0x98] sm:$0xff]
      %v1660 = vld [vmem:[#allocation2 + $0xa0] sm:$0xff]
      %v1661 = vld [vmem:[#allocation2 + $0xa8] sm:$0xff]
      %v1662 = vld [vmem:[#allocation2 + $0xb0] sm:$0xff]
      %v1663 = vld [vmem:[#allocation2 + $0xb8] sm:$0xff]
      %v1664 = vld [vmem:[#allocation2 + $0xc0] sm:$0xff]
      %v1665 = vld [vmem:[#allocation2 + $0xc8] sm:$0xff]
      %v1666 = vld [vmem:[#allocation2 + $0xd0] sm:$0xff]
      %v1667 = vld [vmem:[#allocation2 + $0xd8] sm:$0xff]
      %v1668 = vld [vmem:[#allocation2 + $0xe0] sm:$0xff]
      %v1669 = vld [vmem:[#allocation2 + $0xe8] sm:$0xff]
      %v1670 = vld [vmem:[#allocation2 + $0xf0] sm:$0xff]
      %v1671 = vld [vmem:[#allocation2 + $0xf8] sm:$0xff]
      %v1672 = vld [vmem:[%s2] sm:$0xf]
      %v1673 = vld [vmem:[%s2 + $0x4] sm:$0xf]
      %v1674 = vld [vmem:[%s2 + $0x8] sm:$0xf]
      %v1675 = vld [vmem:[%s2 + $0xc] sm:$0xf]
      %v1676 = vld [vmem:[%s2 + $0x10] sm:$0xf]
      %v1677 = vld [vmem:[%s2 + $0x14] sm:$0xf]
      %v1678 = vld [vmem:[%s2 + $0x18] sm:$0xf]
      %v1679 = vld [vmem:[%s2 + $0x1c] sm:$0xf]
      %v1680 = vld [vmem:[%s2 + $0x20] sm:$0xf]
      %v1681 = vld [vmem:[%s2 + $0x24] sm:$0xf]
      %v1682 = vld [vmem:[%s2 + $0x28] sm:$0xf]
      %v1683 = vld [vmem:[%s2 + $0x2c] sm:$0xf]
      %v1684 = vld [vmem:[%s2 + $0x30] sm:$0xf]
      %v1685 = vld [vmem:[%s2 + $0x34] sm:$0xf]
      %v1686 = vld [vmem:[%s2 + $0x38] sm:$0xf]
      %v1687 = vld [vmem:[%s2 + $0x3c] sm:$0xf]
      %v1688 = vld [vmem:[%s2 + $0x40] sm:$0xf]
      %v1689 = vld [vmem:[%s2 + $0x44] sm:$0xf]
      %v1690 = vld [vmem:[%s3] sm:$0x1]
      %v1692 = vlaneseq
      %v1693 = vshrl.u32 %v1692, 7
      %v1694 = vsub.s32 0, %v1693
      %v1695 = vrot.slane %v1690, %v1694
      %v1715 = vunpack.c.l.b16 %v1672
      %v1716 = vunpack.c.l.b16 %v1673
      %v1717 = vunpack.c.l.b16 %v1674
      %v1718 = vunpack.c.l.b16 %v1675
      %v1719 = vunpack.c.l.b16 %v1676
      %v1720 = vunpack.c.l.b16 %v1677
      %v1721 = vunpack.c.l.b16 %v1678
      %v1722 = vunpack.c.l.b16 %v1679
      %v1723 = vunpack.c.l.b16 %v1680
      %v1724 = vunpack.c.l.b16 %v1681
      %v1725 = vunpack.c.l.b16 %v1682
      %v1726 = vunpack.c.l.b16 %v1683
      %v1727 = vunpack.c.l.b16 %v1684
      %v1728 = vunpack.c.l.b16 %v1685
      %v1729 = vunpack.c.l.b16 %v1686
      %v1730 = vunpack.c.l.b16 %v1687
      %v1731 = vunpack.c.l.b16 %v1688
      %v1732 = vunpack.c.l.b16 %v1689
      %v1733 = vpack.c.b16 %v1716, %v1715
      %v1734 = vpack.c.b16 %v1718, %v1717
      %v1735 = vpack.c.b16 %v1720, %v1719
      %v1736 = vpack.c.b16 %v1722, %v1721
      %v1737 = vpack.c.b16 %v1724, %v1723
      %v1738 = vpack.c.b16 %v1726, %v1725
      %v1739 = vpack.c.b16 %v1728, %v1727
      %v1740 = vpack.c.b16 %v1730, %v1729
      %v1741 = vpack.c.b16 %v1732, %v1731
      %v1752 = vsel %vm436, %v1641, 0
      %v1755 = vsel %vm436, %v1643, 0
      %v1758 = vsel %vm436, %v1645, 0
      %v1761 = vsel %vm436, %v1647, 0
      %v1764 = vsel %vm436, %v1649, 0
      %v1767 = vsel %vm436, %v1651, 0
      %v1770 = vsel %vm436, %v1653, 0
      %v1773 = vsel %vm436, %v1655, 0
      %v1776 = vsel %vm436, %v1657, 0
      %v1779 = vsel %vm436, %v1659, 0
      %v1782 = vsel %vm436, %v1661, 0
      %v1785 = vsel %vm436, %v1663, 0
      %v1788 = vsel %vm436, %v1665, 0
      %v1791 = vsel %vm436, %v1667, 0
      %v1794 = vsel %vm436, %v1669, 0
      %v1797 = vsel %vm436, %v1671, 0
      %1799 = vmatprep.subr.bf16.mxu0 0
      %1800 = vmatpush1.bf16.msra.mxu0 %v1733
      %1801 = vmatprep.subr.bf16.mxu0 0
      %1802 = vmatpush1.bf16.msra.mxu0 %v1734
      %1803 = vmatprep.subr.bf16.mxu0 0
      %1804 = vmatpush1.bf16.msra.mxu0 %v1735
      %1805 = vmatprep.subr.bf16.mxu0 0
      %1806 = vmatpush1.bf16.msra.mxu0 %v1736
      %1807 = vmatprep.subr.bf16.mxu0 0
      %1808 = vmatpush1.bf16.msra.mxu0 %v1737
      %1809 = vmatprep.subr.bf16.mxu0 0
      %1810 = vmatpush1.bf16.msra.mxu0 %v1738
      %1811 = vmatprep.subr.bf16.mxu0 0
      %1812 = vmatpush1.bf16.msra.mxu0 %v1739
      %1813 = vmatprep.subr.bf16.mxu0 0
      %1814 = vmatpush1.bf16.msra.mxu0 %v1740
      %1815 = vmatprep.subr.bf16.mxu0 0
      %1816 = vmatpush1.bf16.msra.mxu0 %v1741
      %1817 = vmatprep.subr.bf16.mxu0 0
      %1818 = vmatpush1.bf16.msra.mxu0 0
      %1819 = vmatprep.subr.bf16.mxu0 0
      %1820 = vmatpush1.bf16.msra.mxu0 0
      %1821 = vmatprep.subr.bf16.mxu0 0
      %1822 = vmatpush1.bf16.msra.mxu0 0
      %1823 = vmatprep.subr.bf16.mxu0 0
      %1824 = vmatpush1.bf16.msra.mxu0 0
      %1825 = vmatprep.subr.bf16.mxu0 0
      %1826 = vmatpush1.bf16.msra.mxu0 0
      %1827 = vmatprep.subr.bf16.mxu0 0
      %1828 = vmatpush1.bf16.msra.mxu0 0
      %1829 = vmatprep.subr.bf16.mxu0 0
      %1830 = vmatpush1.bf16.msra.mxu0 0
      %1831 = vmatprep.mubr.bf16.mxu0 %v1752
      %1832 = vmatmul.mubr.bf16.gmra.mrb[0].mxu0 %v1640
      %v1833 = vpop.f32.mrb[0].mxu0
      %v1834 = vadd.f32 %v1695, %v1833
      %v1835 = vpop.f32.mrb[0].mxu0
      %v1836 = vpop.f32.mrb[0].mxu0
      %v1837 = vadd.f32 %v1695, %v1836
      %v1838 = vpop.f32.mrb[0].mxu0
      %1839 = vmatprep.mubr.bf16.mxu0 %v1755
      %1840 = vmatmul.mubr.bf16.gmra.mrb[0].mxu0 %v1642
      %v1841 = vpop.f32.mrb[0].mxu0
      %v1842 = vadd.f32 %v1695, %v1841
      %v1843 = vpop.f32.mrb[0].mxu0
      %v1844 = vpop.f32.mrb[0].mxu0
      %v1845 = vadd.f32 %v1695, %v1844
      %v1846 = vpop.f32.mrb[0].mxu0
      %1847 = vmatprep.mubr.bf16.mxu0 %v1758
      %1848 = vmatmul.mubr.bf16.gmra.mrb[0].mxu0 %v1644
      %v1849 = vpop.f32.mrb[0].mxu0
      %v1850 = vadd.f32 %v1695, %v1849
      %v1851 = vpop.f32.mrb[0].mxu0
      %v1852 = vpop.f32.mrb[0].mxu0
      %v1853 = vadd.f32 %v1695, %v1852
      %v1854 = vpop.f32.mrb[0].mxu0
      %1855 = vmatprep.mubr.bf16.mxu0 %v1761
      %1856 = vmatmul.mubr.bf16.gmra.mrb[0].mxu0 %v1646
      %v1857 = vpop.f32.mrb[0].mxu0
      %v1858 = vadd.f32 %v1695, %v1857
      %v1859 = vpop.f32.mrb[0].mxu0
      %v1860 = vpop.f32.mrb[0].mxu0
      %v1861 = vadd.f32 %v1695, %v1860
      %v1862 = vpop.f32.mrb[0].mxu0
      %1863 = vmatprep.mubr.bf16.mxu0 %v1764
      %1864 = vmatmul.mubr.bf16.gmra.mrb[0].mxu0 %v1648
      %v1865 = vpop.f32.mrb[0].mxu0
      %v1866 = vadd.f32 %v1695, %v1865
      %v1867 = vpop.f32.mrb[0].mxu0
      %v1868 = vpop.f32.mrb[0].mxu0
      %v1869 = vadd.f32 %v1695, %v1868
      %v1870 = vpop.f32.mrb[0].mxu0
      %1871 = vmatprep.mubr.bf16.mxu0 %v1767
      %1872 = vmatmul.mubr.bf16.gmra.mrb[0].mxu0 %v1650
      %v1873 = vpop.f32.mrb[0].mxu0
      %v1874 = vadd.f32 %v1695, %v1873
      %v1875 = vpop.f32.mrb[0].mxu0
      %v1876 = vpop.f32.mrb[0].mxu0
      %v1877 = vadd.f32 %v1695, %v1876
      %v1878 = vpop.f32.mrb[0].mxu0
      %1879 = vmatprep.mubr.bf16.mxu0 %v1770
      %1880 = vmatmul.mubr.bf16.gmra.mrb[0].mxu0 %v1652
      %v1881 = vpop.f32.mrb[0].mxu0
      %v1882 = vadd.f32 %v1695, %v1881
      %v1883 = vpop.f32.mrb[0].mxu0
      %v1884 = vpop.f32.mrb[0].mxu0
      %v1885 = vadd.f32 %v1695, %v1884
      %v1886 = vpop.f32.mrb[0].mxu0
      %1887 = vmatprep.mubr.bf16.mxu0 %v1773
      %1888 = vmatmul.mubr.bf16.gmra.mrb[0].mxu0 %v1654
      %v1889 = vpop.f32.mrb[0].mxu0
      %v1890 = vadd.f32 %v1695, %v1889
      %v1891 = vpop.f32.mrb[0].mxu0
      %v1892 = vpop.f32.mrb[0].mxu0
      %v1893 = vadd.f32 %v1695, %v1892
      %v1894 = vpop.f32.mrb[0].mxu0
      %1895 = vmatprep.mubr.bf16.mxu0 %v1776
      %1896 = vmatmul.mubr.bf16.gmra.mrb[0].mxu0 %v1656
      %v1897 = vpop.f32.mrb[0].mxu0
      %v1898 = vadd.f32 %v1695, %v1897
      %v1899 = vpop.f32.mrb[0].mxu0
      %v1900 = vpop.f32.mrb[0].mxu0
      %v1901 = vadd.f32 %v1695, %v1900
      %v1902 = vpop.f32.mrb[0].mxu0
      %1903 = vmatprep.mubr.bf16.mxu0 %v1779
      %1904 = vmatmul.mubr.bf16.gmra.mrb[0].mxu0 %v1658
      %v1905 = vpop.f32.mrb[0].mxu0
      %v1906 = vadd.f32 %v1695, %v1905
      %v1907 = vpop.f32.mrb[0].mxu0
      %v1908 = vpop.f32.mrb[0].mxu0
      %v1909 = vadd.f32 %v1695, %v1908
      %v1910 = vpop.f32.mrb[0].mxu0
      %1911 = vmatprep.mubr.bf16.mxu0 %v1782
      %1912 = vmatmul.mubr.bf16.gmra.mrb[0].mxu0 %v1660
      %v1913 = vpop.f32.mrb[0].mxu0
      %v1914 = vadd.f32 %v1695, %v1913
      %v1915 = vpop.f32.mrb[0].mxu0
      %v1916 = vpop.f32.mrb[0].mxu0
      %v1917 = vadd.f32 %v1695, %v1916
      %v1918 = vpop.f32.mrb[0].mxu0
      %1919 = vmatprep.mubr.bf16.mxu0 %v1785
      %1920 = vmatmul.mubr.bf16.gmra.mrb[0].mxu0 %v1662
      %v1921 = vpop.f32.mrb[0].mxu0
      %v1922 = vadd.f32 %v1695, %v1921
      %v1923 = vpop.f32.mrb[0].mxu0
      %v1924 = vpop.f32.mrb[0].mxu0
      %v1925 = vadd.f32 %v1695, %v1924
      %v1926 = vpop.f32.mrb[0].mxu0
      %1927 = vmatprep.mubr.bf16.mxu0 %v1788
      %1928 = vmatmul.mubr.bf16.gmra.mrb[0].mxu0 %v1664
      %v1929 = vpop.f32.mrb[0].mxu0
      %v1930 = vadd.f32 %v1695, %v1929
      %v1931 = vpop.f32.mrb[0].mxu0
      %v1932 = vpop.f32.mrb[0].mxu0
      %v1933 = vadd.f32 %v1695, %v1932
      %v1934 = vpop.f32.mrb[0].mxu0
      %1935 = vmatprep.mubr.bf16.mxu0 %v1791
      %1936 = vmatmul.mubr.bf16.gmra.mrb[0].mxu0 %v1666
      %v1937 = vpop.f32.mrb[0].mxu0
      %v1938 = vadd.f32 %v1695, %v1937
      %v1939 = vpop.f32.mrb[0].mxu0
      %v1940 = vpop.f32.mrb[0].mxu0
      %v1941 = vadd.f32 %v1695, %v1940
      %v1942 = vpop.f32.mrb[0].mxu0
      %1943 = vmatprep.mubr.bf16.mxu0 %v1794
      %1944 = vmatmul.mubr.bf16.gmra.mrb[0].mxu0 %v1668
      %v1945 = vpop.f32.mrb[0].mxu0
      %v1946 = vadd.f32 %v1695, %v1945
      %v1947 = vpop.f32.mrb[0].mxu0
      %v1948 = vpop.f32.mrb[0].mxu0
      %v1949 = vadd.f32 %v1695, %v1948
      %v1950 = vpop.f32.mrb[0].mxu0
      %1951 = vmatprep.mubr.bf16.mxu0 %v1797
      %1952 = vmatmul.mubr.bf16.gmra.mrb[0].mxu0 %v1670
      %v1953 = vpop.f32.mrb[0].mxu0
      %v1954 = vadd.f32 %v1695, %v1953
      %v1955 = vpop.f32.mrb[0].mxu0
      %v1956 = vpop.f32.mrb[0].mxu0
      %v1957 = vadd.f32 %v1695, %v1956
      %v1958 = vpop.f32.mrb[0].mxu0
      %1959 = vdwg.mxu0
      %v1960 = vld [vmem:[%s274] sm:$0xff]
      %v1961 = vld [vmem:[%s274 + $0x8] sm:$0xff]
      %v1962 = vld [vmem:[%s274 + $0x10] sm:$0xff]
      %v1963 = vld [vmem:[%s274 + $0x18] sm:$0xff]
      %v1964 = vld [vmem:[%s274 + $0x20] sm:$0xff]
      %v1965 = vld [vmem:[%s274 + $0x28] sm:$0xff]
      %v1966 = vld [vmem:[%s274 + $0x30] sm:$0xff]
      %v1967 = vld [vmem:[%s274 + $0x38] sm:$0xff]
      %v1968 = vld [vmem:[%s274 + $0x40] sm:$0xff]
      %v1969 = vld [vmem:[%s274 + $0x48] sm:$0xff]
      %v1970 = vld [vmem:[%s274 + $0x50] sm:$0xff]
      %v1971 = vld [vmem:[%s274 + $0x58] sm:$0xff]
      %v1972 = vld [vmem:[%s274 + $0x60] sm:$0xff]
      %v1973 = vld [vmem:[%s274 + $0x68] sm:$0xff]
      %v1974 = vld [vmem:[%s274 + $0x70] sm:$0xff]
      %v1975 = vld [vmem:[%s274 + $0x78] sm:$0xff]
      %v1976 = vld [vmem:[%s274 + $0x80] sm:$0xff]
      %v1977 = vld [vmem:[%s274 + $0x88] sm:$0xff]
      %v1978 = vld [vmem:[%s274 + $0x90] sm:$0xff]
      %v1979 = vld [vmem:[%s274 + $0x98] sm:$0xff]
      %v1980 = vld [vmem:[%s274 + $0xa0] sm:$0xff]
      %v1981 = vld [vmem:[%s274 + $0xa8] sm:$0xff]
      %v1982 = vld [vmem:[%s274 + $0xb0] sm:$0xff]
      %v1983 = vld [vmem:[%s274 + $0xb8] sm:$0xff]
      %v1984 = vld [vmem:[%s274 + $0xc0] sm:$0xff]
      %v1985 = vld [vmem:[%s274 + $0xc8] sm:$0xff]
      %v1986 = vld [vmem:[%s274 + $0xd0] sm:$0xff]
      %v1987 = vld [vmem:[%s274 + $0xd8] sm:$0xff]
      %v1988 = vld [vmem:[%s274 + $0xe0] sm:$0xff]
      %v1989 = vld [vmem:[%s274 + $0xe8] sm:$0xff]
      %v1990 = vld [vmem:[%s274 + $0xf0] sm:$0xff]
      %v1991 = vld [vmem:[%s274 + $0xf8] sm:$0xff]
      %v1992 = vld [vmem:[%s4] sm:$0xff]
      %v1993 = vld [vmem:[%s4 + $0x8] sm:$0xff]
      %v1994 = vld [vmem:[%s4 + $0x10] sm:$0xff]
      %v1995 = vld [vmem:[%s4 + $0x18] sm:$0xff]
      %v1996 = vld [vmem:[%s4 + $0x20] sm:$0xff]
      %v1997 = vld [vmem:[%s4 + $0x28] sm:$0xff]
      %v1998 = vld [vmem:[%s4 + $0x30] sm:$0xff]
      %v1999 = vld [vmem:[%s4 + $0x38] sm:$0xff]
      %v2000 = vld [vmem:[%s4 + $0x40] sm:$0xff]
      %v2001 = vld [vmem:[%s4 + $0x48] sm:$0xff]
      %v2002 = vld [vmem:[%s4 + $0x50] sm:$0xff]
      %v2003 = vld [vmem:[%s4 + $0x58] sm:$0xff]
      %v2004 = vld [vmem:[%s4 + $0x60] sm:$0xff]
      %v2005 = vld [vmem:[%s4 + $0x68] sm:$0xff]
      %v2006 = vld [vmem:[%s4 + $0x70] sm:$0xff]
      %v2007 = vld [vmem:[%s4 + $0x78] sm:$0xff]
      %v2008 = vld [vmem:[%s4 + $0x80] sm:$0xff]
      %v2009 = vld [vmem:[%s4 + $0x88] sm:$0xff]
      %v2010 = vld [vmem:[%s4 + $0x90] sm:$0xff]
      %v2011 = vld [vmem:[%s4 + $0x98] sm:$0xff]
      %v2012 = vld [vmem:[%s4 + $0xa0] sm:$0xff]
      %v2013 = vld [vmem:[%s4 + $0xa8] sm:$0xff]
      %v2014 = vld [vmem:[%s4 + $0xb0] sm:$0xff]
      %v2015 = vld [vmem:[%s4 + $0xb8] sm:$0xff]
      %v2016 = vld [vmem:[%s4 + $0xc0] sm:$0xff]
      %v2017 = vld [vmem:[%s4 + $0xc8] sm:$0xff]
      %v2018 = vld [vmem:[%s4 + $0xd0] sm:$0xff]
      %v2019 = vld [vmem:[%s4 + $0xd8] sm:$0xff]
      %v2020 = vld [vmem:[%s4 + $0xe0] sm:$0xff]
      %v2021 = vld [vmem:[%s4 + $0xe8] sm:$0xff]
      %v2022 = vld [vmem:[%s4 + $0xf0] sm:$0xff]
      %v2023 = vld [vmem:[%s4 + $0xf8] sm:$0xff]
      %s2024 = scalar_lea.vmem %s4, 256
      %v2025 = vld [vmem:[%s2024] sm:$0xff]
      %v2026 = vld [vmem:[%s2024 + $0x8] sm:$0xff]
      %v2027 = vld [vmem:[%s2024 + $0x10] sm:$0xff]
      %v2028 = vld [vmem:[%s2024 + $0x18] sm:$0xff]
      %v2029 = vld [vmem:[%s2024 + $0x20] sm:$0xff]
      %v2030 = vld [vmem:[%s2024 + $0x28] sm:$0xff]
      %v2031 = vld [vmem:[%s2024 + $0x30] sm:$0xff]
      %v2032 = vld [vmem:[%s2024 + $0x38] sm:$0xff]
      %v2033 = vld [vmem:[%s2024 + $0x40] sm:$0xff]
      %v2034 = vld [vmem:[%s2024 + $0x48] sm:$0xff]
      %v2035 = vld [vmem:[%s2024 + $0x50] sm:$0xff]
      %v2036 = vld [vmem:[%s2024 + $0x58] sm:$0xff]
      %v2037 = vld [vmem:[%s2024 + $0x60] sm:$0xff]
      %v2038 = vld [vmem:[%s2024 + $0x68] sm:$0xff]
      %v2039 = vld [vmem:[%s2024 + $0x70] sm:$0xff]
      %v2040 = vld [vmem:[%s2024 + $0x78] sm:$0xff]
      %v2041 = vld [vmem:[%s2024 + $0x80] sm:$0xff]
      %v2042 = vld [vmem:[%s2024 + $0x88] sm:$0xff]
      %v2043 = vld [vmem:[%s2024 + $0x90] sm:$0xff]
      %v2044 = vld [vmem:[%s2024 + $0x98] sm:$0xff]
      %v2045 = vld [vmem:[%s2024 + $0xa0] sm:$0xff]
      %v2046 = vld [vmem:[%s2024 + $0xa8] sm:$0xff]
      %v2047 = vld [vmem:[%s2024 + $0xb0] sm:$0xff]
      %v2048 = vld [vmem:[%s2024 + $0xb8] sm:$0xff]
      %v2049 = vld [vmem:[%s2024 + $0xc0] sm:$0xff]
      %v2050 = vld [vmem:[%s2024 + $0xc8] sm:$0xff]
      %v2051 = vld [vmem:[%s2024 + $0xd0] sm:$0xff]
      %v2052 = vld [vmem:[%s2024 + $0xd8] sm:$0xff]
      %v2053 = vld [vmem:[%s2024 + $0xe0] sm:$0xff]
      %v2054 = vld [vmem:[%s2024 + $0xe8] sm:$0xff]
      %v2055 = vld [vmem:[%s2024 + $0xf0] sm:$0xff]
      %v2056 = vld [vmem:[%s2024 + $0xf8] sm:$0xff]
      %s2057 = scalar_lea.vmem %s4, 512
      %v2058 = vld [vmem:[%s2057] sm:$0xff]
      %v2059 = vld [vmem:[%s2057 + $0x8] sm:$0xff]
      %v2060 = vld [vmem:[%s2057 + $0x10] sm:$0xff]
      %v2061 = vld [vmem:[%s2057 + $0x18] sm:$0xff]
      %v2062 = vld [vmem:[%s2057 + $0x20] sm:$0xff]
      %v2063 = vld [vmem:[%s2057 + $0x28] sm:$0xff]
      %v2064 = vld [vmem:[%s2057 + $0x30] sm:$0xff]
      %v2065 = vld [vmem:[%s2057 + $0x38] sm:$0xff]
      %v2066 = vld [vmem:[%s2057 + $0x40] sm:$0xff]
      %v2067 = vld [vmem:[%s2057 + $0x48] sm:$0xff]
      %v2068 = vld [vmem:[%s2057 + $0x50] sm:$0xff]
      %v2069 = vld [vmem:[%s2057 + $0x58] sm:$0xff]
      %v2070 = vld [vmem:[%s2057 + $0x60] sm:$0xff]
      %v2071 = vld [vmem:[%s2057 + $0x68] sm:$0xff]
      %v2072 = vld [vmem:[%s2057 + $0x70] sm:$0xff]
      %v2073 = vld [vmem:[%s2057 + $0x78] sm:$0xff]
      %v2074 = vld [vmem:[%s2057 + $0x80] sm:$0xff]
      %v2075 = vld [vmem:[%s2057 + $0x88] sm:$0xff]
      %v2076 = vld [vmem:[%s2057 + $0x90] sm:$0xff]
      %v2077 = vld [vmem:[%s2057 + $0x98] sm:$0xff]
      %v2078 = vld [vmem:[%s2057 + $0xa0] sm:$0xff]
      %v2079 = vld [vmem:[%s2057 + $0xa8] sm:$0xff]
      %v2080 = vld [vmem:[%s2057 + $0xb0] sm:$0xff]
      %v2081 = vld [vmem:[%s2057 + $0xb8] sm:$0xff]
      %v2082 = vld [vmem:[%s2057 + $0xc0] sm:$0xff]
      %v2083 = vld [vmem:[%s2057 + $0xc8] sm:$0xff]
      %v2084 = vld [vmem:[%s2057 + $0xd0] sm:$0xff]
      %v2085 = vld [vmem:[%s2057 + $0xd8] sm:$0xff]
      %v2086 = vld [vmem:[%s2057 + $0xe0] sm:$0xff]
      %v2087 = vld [vmem:[%s2057 + $0xe8] sm:$0xff]
      %v2088 = vld [vmem:[%s2057 + $0xf0] sm:$0xff]
      %v2089 = vld [vmem:[%s2057 + $0xf8] sm:$0xff]
      %v2090 = vmul.f32 %v1960, %v1992
      %v2091 = vmul.f32 %v1961, %v1993
      %v2092 = vmul.f32 %v1962, %v1994
      %v2093 = vmul.f32 %v1963, %v1995
      %v2094 = vmul.f32 %v1964, %v1996
      %v2095 = vmul.f32 %v1965, %v1997
      %v2096 = vmul.f32 %v1966, %v1998
      %v2097 = vmul.f32 %v1967, %v1999
      %v2098 = vmul.f32 %v1968, %v2000
      %v2099 = vmul.f32 %v1969, %v2001
      %v2100 = vmul.f32 %v1970, %v2002
      %v2101 = vmul.f32 %v1971, %v2003
      %v2102 = vmul.f32 %v1972, %v2004
      %v2103 = vmul.f32 %v1973, %v2005
      %v2104 = vmul.f32 %v1974, %v2006
      %v2105 = vmul.f32 %v1975, %v2007
      %v2106 = vmul.f32 %v1976, %v2008
      %v2107 = vmul.f32 %v1977, %v2009
      %v2108 = vmul.f32 %v1978, %v2010
      %v2109 = vmul.f32 %v1979, %v2011
      %v2110 = vmul.f32 %v1980, %v2012
      %v2111 = vmul.f32 %v1981, %v2013
      %v2112 = vmul.f32 %v1982, %v2014
      %v2113 = vmul.f32 %v1983, %v2015
      %v2114 = vmul.f32 %v1984, %v2016
      %v2115 = vmul.f32 %v1985, %v2017
      %v2116 = vmul.f32 %v1986, %v2018
      %v2117 = vmul.f32 %v1987, %v2019
      %v2118 = vmul.f32 %v1988, %v2020
      %v2119 = vmul.f32 %v1989, %v2021
      %v2120 = vmul.f32 %v1990, %v2022
      %v2121 = vmul.f32 %v1991, %v2023
      %v2122 = vadd.f32 %v1834, %v2090
      %v2123 = vadd.f32 %v1837, %v2091
      %v2124 = vadd.f32 %v1842, %v2092
      %v2125 = vadd.f32 %v1845, %v2093
      %v2126 = vadd.f32 %v1850, %v2094
      %v2127 = vadd.f32 %v1853, %v2095
      %v2128 = vadd.f32 %v1858, %v2096
      %v2129 = vadd.f32 %v1861, %v2097
      %v2130 = vadd.f32 %v1866, %v2098
      %v2131 = vadd.f32 %v1869, %v2099
      %v2132 = vadd.f32 %v1874, %v2100
      %v2133 = vadd.f32 %v1877, %v2101
      %v2134 = vadd.f32 %v1882, %v2102
      %v2135 = vadd.f32 %v1885, %v2103
      %v2136 = vadd.f32 %v1890, %v2104
      %v2137 = vadd.f32 %v1893, %v2105
      %v2138 = vadd.f32 %v1898, %v2106
      %v2139 = vadd.f32 %v1901, %v2107
      %v2140 = vadd.f32 %v1906, %v2108
      %v2141 = vadd.f32 %v1909, %v2109
      %v2142 = vadd.f32 %v1914, %v2110
      %v2143 = vadd.f32 %v1917, %v2111
      %v2144 = vadd.f32 %v1922, %v2112
      %v2145 = vadd.f32 %v1925, %v2113
      %v2146 = vadd.f32 %v1930, %v2114
      %v2147 = vadd.f32 %v1933, %v2115
      %v2148 = vadd.f32 %v1938, %v2116
      %v2149 = vadd.f32 %v1941, %v2117
      %v2150 = vadd.f32 %v1946, %v2118
      %v2151 = vadd.f32 %v1949, %v2119
      %v2152 = vadd.f32 %v1954, %v2120
      %v2153 = vadd.f32 %v1957, %v2121
      %v2154 = vmul.f32 %v2122, 0.5
      %v2155 = vmul.f32 %v2123, 0.5
      %v2156 = vmul.f32 %v2124, 0.5
      %v2157 = vmul.f32 %v2125, 0.5
      %v2158 = vmul.f32 %v2126, 0.5
      %v2159 = vmul.f32 %v2127, 0.5
      %v2160 = vmul.f32 %v2128, 0.5
      %v2161 = vmul.f32 %v2129, 0.5
      %v2162 = vmul.f32 %v2130, 0.5
      %v2163 = vmul.f32 %v2131, 0.5
      %v2164 = vmul.f32 %v2132, 0.5
      %v2165 = vmul.f32 %v2133, 0.5
      %v2166 = vmul.f32 %v2134, 0.5
      %v2167 = vmul.f32 %v2135, 0.5
      %v2168 = vmul.f32 %v2136, 0.5
      %v2169 = vmul.f32 %v2137, 0.5
      %v2170 = vmul.f32 %v2138, 0.5
      %v2171 = vmul.f32 %v2139, 0.5
      %v2172 = vmul.f32 %v2140, 0.5
      %v2173 = vmul.f32 %v2141, 0.5
      %v2174 = vmul.f32 %v2142, 0.5
      %v2175 = vmul.f32 %v2143, 0.5
      %v2176 = vmul.f32 %v2144, 0.5
      %v2177 = vmul.f32 %v2145, 0.5
      %v2178 = vmul.f32 %v2146, 0.5
      %v2179 = vmul.f32 %v2147, 0.5
      %v2180 = vmul.f32 %v2148, 0.5
      %v2181 = vmul.f32 %v2149, 0.5
      %v2182 = vmul.f32 %v2150, 0.5
      %v2183 = vmul.f32 %v2151, 0.5
      %v2184 = vmul.f32 %v2152, 0.5
      %v2185 = vmul.f32 %v2153, 0.5
      %v2186 = vtanh.pop %v2154
      %v2187 = vtanh.pop %v2155
      %v2188 = vtanh.pop %v2156
      %v2189 = vtanh.pop %v2157
      %v2190 = vtanh.pop %v2158
      %v2191 = vtanh.pop %v2159
      %v2192 = vtanh.pop %v2160
      %v2193 = vtanh.pop %v2161
      %v2194 = vtanh.pop %v2162
      %v2195 = vtanh.pop %v2163
      %v2196 = vtanh.pop %v2164
      %v2197 = vtanh.pop %v2165
      %v2198 = vtanh.pop %v2166
      %v2199 = vtanh.pop %v2167
      %v2200 = vtanh.pop %v2168
      %v2201 = vtanh.pop %v2169
      %v2202 = vtanh.pop %v2170
      %v2203 = vtanh.pop %v2171
      %v2204 = vtanh.pop %v2172
      %v2205 = vtanh.pop %v2173
      %v2206 = vtanh.pop %v2174
      %v2207 = vtanh.pop %v2175
      %v2208 = vtanh.pop %v2176
      %v2209 = vtanh.pop %v2177
      %v2210 = vtanh.pop %v2178
      %v2211 = vtanh.pop %v2179
      %v2212 = vtanh.pop %v2180
      %v2213 = vtanh.pop %v2181
      %v2214 = vtanh.pop %v2182
      %v2215 = vtanh.pop %v2183
      %v2216 = vtanh.pop %v2184
      %v2217 = vtanh.pop %v2185
      %v2218 = vmul.f32 %v2186, 0.5
      %v2219 = vmul.f32 %v2187, 0.5
      %v2220 = vmul.f32 %v2188, 0.5
      %v2221 = vmul.f32 %v2189, 0.5
      %v2222 = vmul.f32 %v2190, 0.5
      %v2223 = vmul.f32 %v2191, 0.5
      %v2224 = vmul.f32 %v2192, 0.5
      %v2225 = vmul.f32 %v2193, 0.5
      %v2226 = vmul.f32 %v2194, 0.5
      %v2227 = vmul.f32 %v2195, 0.5
      %v2228 = vmul.f32 %v2196, 0.5
      %v2229 = vmul.f32 %v2197, 0.5
      %v2230 = vmul.f32 %v2198, 0.5
      %v2231 = vmul.f32 %v2199, 0.5
      %v2232 = vmul.f32 %v2200, 0.5
      %v2233 = vmul.f32 %v2201, 0.5
      %v2234 = vmul.f32 %v2202, 0.5
      %v2235 = vmul.f32 %v2203, 0.5
      %v2236 = vmul.f32 %v2204, 0.5
      %v2237 = vmul.f32 %v2205, 0.5
      %v2238 = vmul.f32 %v2206, 0.5
      %v2239 = vmul.f32 %v2207, 0.5
      %v2240 = vmul.f32 %v2208, 0.5
      %v2241 = vmul.f32 %v2209, 0.5
      %v2242 = vmul.f32 %v2210, 0.5
      %v2243 = vmul.f32 %v2211, 0.5
      %v2244 = vmul.f32 %v2212, 0.5
      %v2245 = vmul.f32 %v2213, 0.5
      %v2246 = vmul.f32 %v2214, 0.5
      %v2247 = vmul.f32 %v2215, 0.5
      %v2248 = vmul.f32 %v2216, 0.5
      %v2249 = vmul.f32 %v2217, 0.5
      %v2250 = vadd.f32 %v2218, 0.5
      %v2251 = vadd.f32 %v2219, 0.5
      %v2252 = vadd.f32 %v2220, 0.5
      %v2253 = vadd.f32 %v2221, 0.5
      %v2254 = vadd.f32 %v2222, 0.5
      %v2255 = vadd.f32 %v2223, 0.5
      %v2256 = vadd.f32 %v2224, 0.5
      %v2257 = vadd.f32 %v2225, 0.5
      %v2258 = vadd.f32 %v2226, 0.5
      %v2259 = vadd.f32 %v2227, 0.5
      %v2260 = vadd.f32 %v2228, 0.5
      %v2261 = vadd.f32 %v2229, 0.5
      %v2262 = vadd.f32 %v2230, 0.5
      %v2263 = vadd.f32 %v2231, 0.5
      %v2264 = vadd.f32 %v2232, 0.5
      %v2265 = vadd.f32 %v2233, 0.5
      %v2266 = vadd.f32 %v2234, 0.5
      %v2267 = vadd.f32 %v2235, 0.5
      %v2268 = vadd.f32 %v2236, 0.5
      %v2269 = vadd.f32 %v2237, 0.5
      %v2270 = vadd.f32 %v2238, 0.5
      %v2271 = vadd.f32 %v2239, 0.5
      %v2272 = vadd.f32 %v2240, 0.5
      %v2273 = vadd.f32 %v2241, 0.5
      %v2274 = vadd.f32 %v2242, 0.5
      %v2275 = vadd.f32 %v2243, 0.5
      %v2276 = vadd.f32 %v2244, 0.5
      %v2277 = vadd.f32 %v2245, 0.5
      %v2278 = vadd.f32 %v2246, 0.5
      %v2279 = vadd.f32 %v2247, 0.5
      %v2280 = vadd.f32 %v2248, 0.5
      %v2281 = vadd.f32 %v2249, 0.5
      %v2282 = vmul.f32 %v1960, %v2025
      %v2283 = vmul.f32 %v1961, %v2026
      %v2284 = vmul.f32 %v1962, %v2027
      %v2285 = vmul.f32 %v1963, %v2028
      %v2286 = vmul.f32 %v1964, %v2029
      %v2287 = vmul.f32 %v1965, %v2030
      %v2288 = vmul.f32 %v1966, %v2031
      %v2289 = vmul.f32 %v1967, %v2032
      %v2290 = vmul.f32 %v1968, %v2033
      %v2291 = vmul.f32 %v1969, %v2034
      %v2292 = vmul.f32 %v1970, %v2035
      %v2293 = vmul.f32 %v1971, %v2036
      %v2294 = vmul.f32 %v1972, %v2037
      %v2295 = vmul.f32 %v1973, %v2038
      %v2296 = vmul.f32 %v1974, %v2039
      %v2297 = vmul.f32 %v1975, %v2040
      %v2298 = vmul.f32 %v1976, %v2041
      %v2299 = vmul.f32 %v1977, %v2042
      %v2300 = vmul.f32 %v1978, %v2043
      %v2301 = vmul.f32 %v1979, %v2044
      %v2302 = vmul.f32 %v1980, %v2045
      %v2303 = vmul.f32 %v1981, %v2046
      %v2304 = vmul.f32 %v1982, %v2047
      %v2305 = vmul.f32 %v1983, %v2048
      %v2306 = vmul.f32 %v1984, %v2049
      %v2307 = vmul.f32 %v1985, %v2050
      %v2308 = vmul.f32 %v1986, %v2051
      %v2309 = vmul.f32 %v1987, %v2052
      %v2310 = vmul.f32 %v1988, %v2053
      %v2311 = vmul.f32 %v1989, %v2054
      %v2312 = vmul.f32 %v1990, %v2055
      %v2313 = vmul.f32 %v1991, %v2056
      %2346 = vrot.lane.b32.xlu0 %v2282, 8
      %v2347 = vpop.permute.xlu0 %2346
      %2348 = vrot.lane.b32.xlu0 %v2283, 8
      %v2349 = vpop.permute.xlu0 %2348
      %2350 = vrot.lane.b32.xlu0 %v2284, 8
      %v2351 = vpop.permute.xlu0 %2350
      %2352 = vrot.lane.b32.xlu0 %v2285, 8
      %v2353 = vpop.permute.xlu0 %2352
      %2354 = vrot.lane.b32.xlu0 %v2286, 8
      %v2355 = vpop.permute.xlu0 %2354
      %2356 = vrot.lane.b32.xlu0 %v2287, 8
      %v2357 = vpop.permute.xlu0 %2356
      %2358 = vrot.lane.b32.xlu0 %v2288, 8
      %v2359 = vpop.permute.xlu0 %2358
      %2360 = vrot.lane.b32.xlu0 %v2289, 8
      %v2361 = vpop.permute.xlu0 %2360
      %2362 = vrot.lane.b32.xlu0 %v2290, 8
      %v2363 = vpop.permute.xlu0 %2362
      %2364 = vrot.lane.b32.xlu0 %v2291, 8
      %v2365 = vpop.permute.xlu0 %2364
      %2366 = vrot.lane.b32.xlu0 %v2292, 8
      %v2367 = vpop.permute.xlu0 %2366
      %2368 = vrot.lane.b32.xlu0 %v2293, 8
      %v2369 = vpop.permute.xlu0 %2368
      %2370 = vrot.lane.b32.xlu0 %v2294, 8
      %v2371 = vpop.permute.xlu0 %2370
      %2372 = vrot.lane.b32.xlu0 %v2295, 8
      %v2373 = vpop.permute.xlu0 %2372
      %2374 = vrot.lane.b32.xlu0 %v2296, 8
      %v2375 = vpop.permute.xlu0 %2374
      %2376 = vrot.lane.b32.xlu0 %v2297, 8
      %v2377 = vpop.permute.xlu0 %2376
      %2378 = vrot.lane.b32.xlu0 %v2298, 8
      %v2379 = vpop.permute.xlu0 %2378
      %2380 = vrot.lane.b32.xlu0 %v2299, 8
      %v2381 = vpop.permute.xlu0 %2380
      %2382 = vrot.lane.b32.xlu0 %v2300, 8
      %v2383 = vpop.permute.xlu0 %2382
      %2384 = vrot.lane.b32.xlu0 %v2301, 8
      %v2385 = vpop.permute.xlu0 %2384
      %2386 = vrot.lane.b32.xlu0 %v2302, 8
      %v2387 = vpop.permute.xlu0 %2386
      %2388 = vrot.lane.b32.xlu0 %v2303, 8
      %v2389 = vpop.permute.xlu0 %2388
      %2390 = vrot.lane.b32.xlu0 %v2304, 8
      %v2391 = vpop.permute.xlu0 %2390
      %2392 = vrot.lane.b32.xlu0 %v2305, 8
      %v2393 = vpop.permute.xlu0 %2392
      %2394 = vrot.lane.b32.xlu0 %v2306, 8
      %v2395 = vpop.permute.xlu0 %2394
      %2396 = vrot.lane.b32.xlu0 %v2307, 8
      %v2397 = vpop.permute.xlu0 %2396
      %2398 = vrot.lane.b32.xlu0 %v2308, 8
      %v2399 = vpop.permute.xlu0 %2398
      %2400 = vrot.lane.b32.xlu0 %v2309, 8
      %v2401 = vpop.permute.xlu0 %2400
      %2402 = vrot.lane.b32.xlu0 %v2310, 8
      %v2403 = vpop.permute.xlu0 %2402
      %2404 = vrot.lane.b32.xlu0 %v2311, 8
      %v2405 = vpop.permute.xlu0 %2404
      %2406 = vrot.lane.b32.xlu0 %v2312, 8
      %v2407 = vpop.permute.xlu0 %2406
      %2408 = vrot.lane.b32.xlu0 %v2313, 8
      %v2409 = vpop.permute.xlu0 %2408
      %v2442 = vadd.f32 %v1834, %v2347
      %v2443 = vadd.f32 %v1837, %v2349
      %v2444 = vadd.f32 %v1842, %v2351
      %v2445 = vadd.f32 %v1845, %v2353
      %v2446 = vadd.f32 %v1850, %v2355
      %v2447 = vadd.f32 %v1853, %v2357
      %v2448 = vadd.f32 %v1858, %v2359
      %v2449 = vadd.f32 %v1861, %v2361
      %v2450 = vadd.f32 %v1866, %v2363
      %v2451 = vadd.f32 %v1869, %v2365
      %v2452 = vadd.f32 %v1874, %v2367
      %v2453 = vadd.f32 %v1877, %v2369
      %v2454 = vadd.f32 %v1882, %v2371
      %v2455 = vadd.f32 %v1885, %v2373
      %v2456 = vadd.f32 %v1890, %v2375
      %v2457 = vadd.f32 %v1893, %v2377
      %v2458 = vadd.f32 %v1898, %v2379
      %v2459 = vadd.f32 %v1901, %v2381
      %v2460 = vadd.f32 %v1906, %v2383
      %v2461 = vadd.f32 %v1909, %v2385
      %v2462 = vadd.f32 %v1914, %v2387
      %v2463 = vadd.f32 %v1917, %v2389
      %v2464 = vadd.f32 %v1922, %v2391
      %v2465 = vadd.f32 %v1925, %v2393
      %v2466 = vadd.f32 %v1930, %v2395
      %v2467 = vadd.f32 %v1933, %v2397
      %v2468 = vadd.f32 %v1938, %v2399
      %v2469 = vadd.f32 %v1941, %v2401
      %v2470 = vadd.f32 %v1946, %v2403
      %v2471 = vadd.f32 %v1949, %v2405
      %v2472 = vadd.f32 %v1954, %v2407
      %v2473 = vadd.f32 %v1957, %v2409
      %v2474 = vmul.f32 %v2442, 0.5
      %v2475 = vmul.f32 %v2443, 0.5
      %v2476 = vmul.f32 %v2444, 0.5
      %v2477 = vmul.f32 %v2445, 0.5
      %v2478 = vmul.f32 %v2446, 0.5
      %v2479 = vmul.f32 %v2447, 0.5
      %v2480 = vmul.f32 %v2448, 0.5
      %v2481 = vmul.f32 %v2449, 0.5
      %v2482 = vmul.f32 %v2450, 0.5
      %v2483 = vmul.f32 %v2451, 0.5
      %v2484 = vmul.f32 %v2452, 0.5
      %v2485 = vmul.f32 %v2453, 0.5
      %v2486 = vmul.f32 %v2454, 0.5
      %v2487 = vmul.f32 %v2455, 0.5
      %v2488 = vmul.f32 %v2456, 0.5
      %v2489 = vmul.f32 %v2457, 0.5
      %v2490 = vmul.f32 %v2458, 0.5
      %v2491 = vmul.f32 %v2459, 0.5
      %v2492 = vmul.f32 %v2460, 0.5
      %v2493 = vmul.f32 %v2461, 0.5
      %v2494 = vmul.f32 %v2462, 0.5
      %v2495 = vmul.f32 %v2463, 0.5
      %v2496 = vmul.f32 %v2464, 0.5
      %v2497 = vmul.f32 %v2465, 0.5
      %v2498 = vmul.f32 %v2466, 0.5
      %v2499 = vmul.f32 %v2467, 0.5
      %v2500 = vmul.f32 %v2468, 0.5
      %v2501 = vmul.f32 %v2469, 0.5
      %v2502 = vmul.f32 %v2470, 0.5
      %v2503 = vmul.f32 %v2471, 0.5
      %v2504 = vmul.f32 %v2472, 0.5
      %v2505 = vmul.f32 %v2473, 0.5
      %v2506 = vtanh.pop %v2474
      %v2507 = vtanh.pop %v2475
      %v2508 = vtanh.pop %v2476
      %v2509 = vtanh.pop %v2477
      %v2510 = vtanh.pop %v2478
      %v2511 = vtanh.pop %v2479
      %v2512 = vtanh.pop %v2480
      %v2513 = vtanh.pop %v2481
      %v2514 = vtanh.pop %v2482
      %v2515 = vtanh.pop %v2483
      %v2516 = vtanh.pop %v2484
      %v2517 = vtanh.pop %v2485
      %v2518 = vtanh.pop %v2486
      %v2519 = vtanh.pop %v2487
      %v2520 = vtanh.pop %v2488
      %v2521 = vtanh.pop %v2489
      %v2522 = vtanh.pop %v2490
      %v2523 = vtanh.pop %v2491
      %v2524 = vtanh.pop %v2492
      %v2525 = vtanh.pop %v2493
      %v2526 = vtanh.pop %v2494
      %v2527 = vtanh.pop %v2495
      %v2528 = vtanh.pop %v2496
      %v2529 = vtanh.pop %v2497
      %v2530 = vtanh.pop %v2498
      %v2531 = vtanh.pop %v2499
      %v2532 = vtanh.pop %v2500
      %v2533 = vtanh.pop %v2501
      %v2534 = vtanh.pop %v2502
      %v2535 = vtanh.pop %v2503
      %v2536 = vtanh.pop %v2504
      %v2537 = vtanh.pop %v2505
      %v2538 = vmul.f32 %v2506, 0.5
      %v2539 = vmul.f32 %v2507, 0.5
      %v2540 = vmul.f32 %v2508, 0.5
      %v2541 = vmul.f32 %v2509, 0.5
      %v2542 = vmul.f32 %v2510, 0.5
      %v2543 = vmul.f32 %v2511, 0.5
      %v2544 = vmul.f32 %v2512, 0.5
      %v2545 = vmul.f32 %v2513, 0.5
      %v2546 = vmul.f32 %v2514, 0.5
      %v2547 = vmul.f32 %v2515, 0.5
      %v2548 = vmul.f32 %v2516, 0.5
      %v2549 = vmul.f32 %v2517, 0.5
      %v2550 = vmul.f32 %v2518, 0.5
      %v2551 = vmul.f32 %v2519, 0.5
      %v2552 = vmul.f32 %v2520, 0.5
      %v2553 = vmul.f32 %v2521, 0.5
      %v2554 = vmul.f32 %v2522, 0.5
      %v2555 = vmul.f32 %v2523, 0.5
      %v2556 = vmul.f32 %v2524, 0.5
      %v2557 = vmul.f32 %v2525, 0.5
      %v2558 = vmul.f32 %v2526, 0.5
      %v2559 = vmul.f32 %v2527, 0.5
      %v2560 = vmul.f32 %v2528, 0.5
      %v2561 = vmul.f32 %v2529, 0.5
      %v2562 = vmul.f32 %v2530, 0.5
      %v2563 = vmul.f32 %v2531, 0.5
      %v2564 = vmul.f32 %v2532, 0.5
      %v2565 = vmul.f32 %v2533, 0.5
      %v2566 = vmul.f32 %v2534, 0.5
      %v2567 = vmul.f32 %v2535, 0.5
      %v2568 = vmul.f32 %v2536, 0.5
      %v2569 = vmul.f32 %v2537, 0.5
      %v2570 = vadd.f32 %v2538, 0.5
      %v2571 = vadd.f32 %v2539, 0.5
      %v2572 = vadd.f32 %v2540, 0.5
      %v2573 = vadd.f32 %v2541, 0.5
      %v2574 = vadd.f32 %v2542, 0.5
      %v2575 = vadd.f32 %v2543, 0.5
      %v2576 = vadd.f32 %v2544, 0.5
      %v2577 = vadd.f32 %v2545, 0.5
      %v2578 = vadd.f32 %v2546, 0.5
      %v2579 = vadd.f32 %v2547, 0.5
      %v2580 = vadd.f32 %v2548, 0.5
      %v2581 = vadd.f32 %v2549, 0.5
      %v2582 = vadd.f32 %v2550, 0.5
      %v2583 = vadd.f32 %v2551, 0.5
      %v2584 = vadd.f32 %v2552, 0.5
      %v2585 = vadd.f32 %v2553, 0.5
      %v2586 = vadd.f32 %v2554, 0.5
      %v2587 = vadd.f32 %v2555, 0.5
      %v2588 = vadd.f32 %v2556, 0.5
      %v2589 = vadd.f32 %v2557, 0.5
      %v2590 = vadd.f32 %v2558, 0.5
      %v2591 = vadd.f32 %v2559, 0.5
      %v2592 = vadd.f32 %v2560, 0.5
      %v2593 = vadd.f32 %v2561, 0.5
      %v2594 = vadd.f32 %v2562, 0.5
      %v2595 = vadd.f32 %v2563, 0.5
      %v2596 = vadd.f32 %v2564, 0.5
      %v2597 = vadd.f32 %v2565, 0.5
      %v2598 = vadd.f32 %v2566, 0.5
      %v2599 = vadd.f32 %v2567, 0.5
      %v2600 = vadd.f32 %v2568, 0.5
      %v2601 = vadd.f32 %v2569, 0.5
      %2634 = vrot.lane.b32.xlu0 %v1960, 8
      %v2635 = vpop.permute.xlu0 %2634
      %2636 = vrot.lane.b32.xlu0 %v1961, 8
      %v2637 = vpop.permute.xlu0 %2636
      %2638 = vrot.lane.b32.xlu0 %v1962, 8
      %v2639 = vpop.permute.xlu0 %2638
      %2640 = vrot.lane.b32.xlu0 %v1963, 8
      %v2641 = vpop.permute.xlu0 %2640
      %2642 = vrot.lane.b32.xlu0 %v1964, 8
      %v2643 = vpop.permute.xlu0 %2642
      %2644 = vrot.lane.b32.xlu0 %v1965, 8
      %v2645 = vpop.permute.xlu0 %2644
      %2646 = vrot.lane.b32.xlu0 %v1966, 8
      %v2647 = vpop.permute.xlu0 %2646
      %2648 = vrot.lane.b32.xlu0 %v1967, 8
      %v2649 = vpop.permute.xlu0 %2648
      %2650 = vrot.lane.b32.xlu0 %v1968, 8
      %v2651 = vpop.permute.xlu0 %2650
      %2652 = vrot.lane.b32.xlu0 %v1969, 8
      %v2653 = vpop.permute.xlu0 %2652
      %2654 = vrot.lane.b32.xlu0 %v1970, 8
      %v2655 = vpop.permute.xlu0 %2654
      %2656 = vrot.lane.b32.xlu0 %v1971, 8
      %v2657 = vpop.permute.xlu0 %2656
      %2658 = vrot.lane.b32.xlu0 %v1972, 8
      %v2659 = vpop.permute.xlu0 %2658
      %2660 = vrot.lane.b32.xlu0 %v1973, 8
      %v2661 = vpop.permute.xlu0 %2660
      %2662 = vrot.lane.b32.xlu0 %v1974, 8
      %v2663 = vpop.permute.xlu0 %2662
      %2664 = vrot.lane.b32.xlu0 %v1975, 8
      %v2665 = vpop.permute.xlu0 %2664
      %2666 = vrot.lane.b32.xlu0 %v1976, 8
      %v2667 = vpop.permute.xlu0 %2666
      %2668 = vrot.lane.b32.xlu0 %v1977, 8
      %v2669 = vpop.permute.xlu0 %2668
      %2670 = vrot.lane.b32.xlu0 %v1978, 8
      %v2671 = vpop.permute.xlu0 %2670
      %2672 = vrot.lane.b32.xlu0 %v1979, 8
      %v2673 = vpop.permute.xlu0 %2672
      %2674 = vrot.lane.b32.xlu0 %v1980, 8
      %v2675 = vpop.permute.xlu0 %2674
      %2676 = vrot.lane.b32.xlu0 %v1981, 8
      %v2677 = vpop.permute.xlu0 %2676
      %2678 = vrot.lane.b32.xlu0 %v1982, 8
      %v2679 = vpop.permute.xlu0 %2678
      %2680 = vrot.lane.b32.xlu0 %v1983, 8
      %v2681 = vpop.permute.xlu0 %2680
      %2682 = vrot.lane.b32.xlu0 %v1984, 8
      %v2683 = vpop.permute.xlu0 %2682
      %2684 = vrot.lane.b32.xlu0 %v1985, 8
      %v2685 = vpop.permute.xlu0 %2684
      %2686 = vrot.lane.b32.xlu0 %v1986, 8
      %v2687 = vpop.permute.xlu0 %2686
      %2688 = vrot.lane.b32.xlu0 %v1987, 8
      %v2689 = vpop.permute.xlu0 %2688
      %2690 = vrot.lane.b32.xlu0 %v1988, 8
      %v2691 = vpop.permute.xlu0 %2690
      %2692 = vrot.lane.b32.xlu0 %v1989, 8
      %v2693 = vpop.permute.xlu0 %2692
      %2694 = vrot.lane.b32.xlu0 %v1990, 8
      %v2695 = vpop.permute.xlu0 %2694
      %2696 = vrot.lane.b32.xlu0 %v1991, 8
      %v2697 = vpop.permute.xlu0 %2696
      %v2730 = vmul.f32 %v2570, %v2635
      %v2731 = vmul.f32 %v2571, %v2637
      %v2732 = vmul.f32 %v2572, %v2639
      %v2733 = vmul.f32 %v2573, %v2641
      %v2734 = vmul.f32 %v2574, %v2643
      %v2735 = vmul.f32 %v2575, %v2645
      %v2736 = vmul.f32 %v2576, %v2647
      %v2737 = vmul.f32 %v2577, %v2649
      %v2738 = vmul.f32 %v2578, %v2651
      %v2739 = vmul.f32 %v2579, %v2653
      %v2740 = vmul.f32 %v2580, %v2655
      %v2741 = vmul.f32 %v2581, %v2657
      %v2742 = vmul.f32 %v2582, %v2659
      %v2743 = vmul.f32 %v2583, %v2661
      %v2744 = vmul.f32 %v2584, %v2663
      %v2745 = vmul.f32 %v2585, %v2665
      %v2746 = vmul.f32 %v2586, %v2667
      %v2747 = vmul.f32 %v2587, %v2669
      %v2748 = vmul.f32 %v2588, %v2671
      %v2749 = vmul.f32 %v2589, %v2673
      %v2750 = vmul.f32 %v2590, %v2675
      %v2751 = vmul.f32 %v2591, %v2677
      %v2752 = vmul.f32 %v2592, %v2679
      %v2753 = vmul.f32 %v2593, %v2681
      %v2754 = vmul.f32 %v2594, %v2683
      %v2755 = vmul.f32 %v2595, %v2685
      %v2756 = vmul.f32 %v2596, %v2687
      %v2757 = vmul.f32 %v2597, %v2689
      %v2758 = vmul.f32 %v2598, %v2691
      %v2759 = vmul.f32 %v2599, %v2693
      %v2760 = vmul.f32 %v2600, %v2695
      %v2761 = vmul.f32 %v2601, %v2697
      %v2762 = vtanh.pop %v1834
      %v2763 = vtanh.pop %v1837
      %v2764 = vtanh.pop %v1842
      %v2765 = vtanh.pop %v1845
      %v2766 = vtanh.pop %v1850
      %v2767 = vtanh.pop %v1853
      %v2768 = vtanh.pop %v1858
      %v2769 = vtanh.pop %v1861
      %v2770 = vtanh.pop %v1866
      %v2771 = vtanh.pop %v1869
      %v2772 = vtanh.pop %v1874
      %v2773 = vtanh.pop %v1877
      %v2774 = vtanh.pop %v1882
      %v2775 = vtanh.pop %v1885
      %v2776 = vtanh.pop %v1890
      %v2777 = vtanh.pop %v1893
      %v2778 = vtanh.pop %v1898
      %v2779 = vtanh.pop %v1901
      %v2780 = vtanh.pop %v1906
      %v2781 = vtanh.pop %v1909
      %v2782 = vtanh.pop %v1914
      %v2783 = vtanh.pop %v1917
      %v2784 = vtanh.pop %v1922
      %v2785 = vtanh.pop %v1925
      %v2786 = vtanh.pop %v1930
      %v2787 = vtanh.pop %v1933
      %v2788 = vtanh.pop %v1938
      %v2789 = vtanh.pop %v1941
      %v2790 = vtanh.pop %v1946
      %v2791 = vtanh.pop %v1949
      %v2792 = vtanh.pop %v1954
      %v2793 = vtanh.pop %v1957
      %2826 = vrot.lane.b32.xlu0 %v2762, 112
      %v2827 = vpop.permute.xlu0 %2826
      %2828 = vrot.lane.b32.xlu0 %v2763, 112
      %v2829 = vpop.permute.xlu0 %2828
      %2830 = vrot.lane.b32.xlu0 %v2764, 112
      %v2831 = vpop.permute.xlu0 %2830
      %2832 = vrot.lane.b32.xlu0 %v2765, 112
      %v2833 = vpop.permute.xlu0 %2832
      %2834 = vrot.lane.b32.xlu0 %v2766, 112
      %v2835 = vpop.permute.xlu0 %2834
      %2836 = vrot.lane.b32.xlu0 %v2767, 112
      %v2837 = vpop.permute.xlu0 %2836
      %2838 = vrot.lane.b32.xlu0 %v2768, 112
      %v2839 = vpop.permute.xlu0 %2838
      %2840 = vrot.lane.b32.xlu0 %v2769, 112
      %v2841 = vpop.permute.xlu0 %2840
      %2842 = vrot.lane.b32.xlu0 %v2770, 112
      %v2843 = vpop.permute.xlu0 %2842
      %2844 = vrot.lane.b32.xlu0 %v2771, 112
      %v2845 = vpop.permute.xlu0 %2844
      %2846 = vrot.lane.b32.xlu0 %v2772, 112
      %v2847 = vpop.permute.xlu0 %2846
      %2848 = vrot.lane.b32.xlu0 %v2773, 112
      %v2849 = vpop.permute.xlu0 %2848
      %2850 = vrot.lane.b32.xlu0 %v2774, 112
      %v2851 = vpop.permute.xlu0 %2850
      %2852 = vrot.lane.b32.xlu0 %v2775, 112
      %v2853 = vpop.permute.xlu0 %2852
      %2854 = vrot.lane.b32.xlu0 %v2776, 112
      %v2855 = vpop.permute.xlu0 %2854
      %2856 = vrot.lane.b32.xlu0 %v2777, 112
      %v2857 = vpop.permute.xlu0 %2856
      %2858 = vrot.lane.b32.xlu0 %v2778, 112
      %v2859 = vpop.permute.xlu0 %2858
      %2860 = vrot.lane.b32.xlu0 %v2779, 112
      %v2861 = vpop.permute.xlu0 %2860
      %2862 = vrot.lane.b32.xlu0 %v2780, 112
      %v2863 = vpop.permute.xlu0 %2862
      %2864 = vrot.lane.b32.xlu0 %v2781, 112
      %v2865 = vpop.permute.xlu0 %2864
      %2866 = vrot.lane.b32.xlu0 %v2782, 112
      %v2867 = vpop.permute.xlu0 %2866
      %2868 = vrot.lane.b32.xlu0 %v2783, 112
      %v2869 = vpop.permute.xlu0 %2868
      %2870 = vrot.lane.b32.xlu0 %v2784, 112
      %v2871 = vpop.permute.xlu0 %2870
      %2872 = vrot.lane.b32.xlu0 %v2785, 112
      %v2873 = vpop.permute.xlu0 %2872
      %2874 = vrot.lane.b32.xlu0 %v2786, 112
      %v2875 = vpop.permute.xlu0 %2874
      %2876 = vrot.lane.b32.xlu0 %v2787, 112
      %v2877 = vpop.permute.xlu0 %2876
      %2878 = vrot.lane.b32.xlu0 %v2788, 112
      %v2879 = vpop.permute.xlu0 %2878
      %2880 = vrot.lane.b32.xlu0 %v2789, 112
      %v2881 = vpop.permute.xlu0 %2880
      %2882 = vrot.lane.b32.xlu0 %v2790, 112
      %v2883 = vpop.permute.xlu0 %2882
      %2884 = vrot.lane.b32.xlu0 %v2791, 112
      %v2885 = vpop.permute.xlu0 %2884
      %2886 = vrot.lane.b32.xlu0 %v2792, 112
      %v2887 = vpop.permute.xlu0 %2886
      %2888 = vrot.lane.b32.xlu0 %v2793, 112
      %v2889 = vpop.permute.xlu0 %2888
      %v2922 = vmul.f32 %v2250, %v2827
      %v2923 = vmul.f32 %v2251, %v2829
      %v2924 = vmul.f32 %v2252, %v2831
      %v2925 = vmul.f32 %v2253, %v2833
      %v2926 = vmul.f32 %v2254, %v2835
      %v2927 = vmul.f32 %v2255, %v2837
      %v2928 = vmul.f32 %v2256, %v2839
      %v2929 = vmul.f32 %v2257, %v2841
      %v2930 = vmul.f32 %v2258, %v2843
      %v2931 = vmul.f32 %v2259, %v2845
      %v2932 = vmul.f32 %v2260, %v2847
      %v2933 = vmul.f32 %v2261, %v2849
      %v2934 = vmul.f32 %v2262, %v2851
      %v2935 = vmul.f32 %v2263, %v2853
      %v2936 = vmul.f32 %v2264, %v2855
      %v2937 = vmul.f32 %v2265, %v2857
      %v2938 = vmul.f32 %v2266, %v2859
      %v2939 = vmul.f32 %v2267, %v2861
      %v2940 = vmul.f32 %v2268, %v2863
      %v2941 = vmul.f32 %v2269, %v2865
      %v2942 = vmul.f32 %v2270, %v2867
      %v2943 = vmul.f32 %v2271, %v2869
      %v2944 = vmul.f32 %v2272, %v2871
      %v2945 = vmul.f32 %v2273, %v2873
      %v2946 = vmul.f32 %v2274, %v2875
      %v2947 = vmul.f32 %v2275, %v2877
      %v2948 = vmul.f32 %v2276, %v2879
      %v2949 = vmul.f32 %v2277, %v2881
      %v2950 = vmul.f32 %v2278, %v2883
      %v2951 = vmul.f32 %v2279, %v2885
      %v2952 = vmul.f32 %v2280, %v2887
      %v2953 = vmul.f32 %v2281, %v2889
      %2986 = vrot.lane.b32.xlu0 %v2922, 8
      %v2987 = vpop.permute.xlu0 %2986
      %2988 = vrot.lane.b32.xlu0 %v2923, 8
      %v2989 = vpop.permute.xlu0 %2988
      %2990 = vrot.lane.b32.xlu0 %v2924, 8
      %v2991 = vpop.permute.xlu0 %2990
      %2992 = vrot.lane.b32.xlu0 %v2925, 8
      %v2993 = vpop.permute.xlu0 %2992
      %2994 = vrot.lane.b32.xlu0 %v2926, 8
      %v2995 = vpop.permute.xlu0 %2994
      %2996 = vrot.lane.b32.xlu0 %v2927, 8
      %v2997 = vpop.permute.xlu0 %2996
      %2998 = vrot.lane.b32.xlu0 %v2928, 8
      %v2999 = vpop.permute.xlu0 %2998
      %3000 = vrot.lane.b32.xlu0 %v2929, 8
      %v3001 = vpop.permute.xlu0 %3000
      %3002 = vrot.lane.b32.xlu0 %v2930, 8
      %v3003 = vpop.permute.xlu0 %3002
      %3004 = vrot.lane.b32.xlu0 %v2931, 8
      %v3005 = vpop.permute.xlu0 %3004
      %3006 = vrot.lane.b32.xlu0 %v2932, 8
      %v3007 = vpop.permute.xlu0 %3006
      %3008 = vrot.lane.b32.xlu0 %v2933, 8
      %v3009 = vpop.permute.xlu0 %3008
      %3010 = vrot.lane.b32.xlu0 %v2934, 8
      %v3011 = vpop.permute.xlu0 %3010
      %3012 = vrot.lane.b32.xlu0 %v2935, 8
      %v3013 = vpop.permute.xlu0 %3012
      %3014 = vrot.lane.b32.xlu0 %v2936, 8
      %v3015 = vpop.permute.xlu0 %3014
      %3016 = vrot.lane.b32.xlu0 %v2937, 8
      %v3017 = vpop.permute.xlu0 %3016
      %3018 = vrot.lane.b32.xlu0 %v2938, 8
      %v3019 = vpop.permute.xlu0 %3018
      %3020 = vrot.lane.b32.xlu0 %v2939, 8
      %v3021 = vpop.permute.xlu0 %3020
      %3022 = vrot.lane.b32.xlu0 %v2940, 8
      %v3023 = vpop.permute.xlu0 %3022
      %3024 = vrot.lane.b32.xlu0 %v2941, 8
      %v3025 = vpop.permute.xlu0 %3024
      %3026 = vrot.lane.b32.xlu0 %v2942, 8
      %v3027 = vpop.permute.xlu0 %3026
      %3028 = vrot.lane.b32.xlu0 %v2943, 8
      %v3029 = vpop.permute.xlu0 %3028
      %3030 = vrot.lane.b32.xlu0 %v2944, 8
      %v3031 = vpop.permute.xlu0 %3030
      %3032 = vrot.lane.b32.xlu0 %v2945, 8
      %v3033 = vpop.permute.xlu0 %3032
      %3034 = vrot.lane.b32.xlu0 %v2946, 8
      %v3035 = vpop.permute.xlu0 %3034
      %3036 = vrot.lane.b32.xlu0 %v2947, 8
      %v3037 = vpop.permute.xlu0 %3036
      %3038 = vrot.lane.b32.xlu0 %v2948, 8
      %v3039 = vpop.permute.xlu0 %3038
      %3040 = vrot.lane.b32.xlu0 %v2949, 8
      %v3041 = vpop.permute.xlu0 %3040
      %3042 = vrot.lane.b32.xlu0 %v2950, 8
      %v3043 = vpop.permute.xlu0 %3042
      %3044 = vrot.lane.b32.xlu0 %v2951, 8
      %v3045 = vpop.permute.xlu0 %3044
      %3046 = vrot.lane.b32.xlu0 %v2952, 8
      %v3047 = vpop.permute.xlu0 %3046
      %3048 = vrot.lane.b32.xlu0 %v2953, 8
      %v3049 = vpop.permute.xlu0 %3048
      %v3082 = vadd.f32 %v2730, %v2987
      %v3083 = vadd.f32 %v2731, %v2989
      %v3084 = vadd.f32 %v2732, %v2991
      %v3085 = vadd.f32 %v2733, %v2993
      %v3086 = vadd.f32 %v2734, %v2995
      %v3087 = vadd.f32 %v2735, %v2997
      %v3088 = vadd.f32 %v2736, %v2999
      %v3089 = vadd.f32 %v2737, %v3001
      %v3090 = vadd.f32 %v2738, %v3003
      %v3091 = vadd.f32 %v2739, %v3005
      %v3092 = vadd.f32 %v2740, %v3007
      %v3093 = vadd.f32 %v2741, %v3009
      %v3094 = vadd.f32 %v2742, %v3011
      %v3095 = vadd.f32 %v2743, %v3013
      %v3096 = vadd.f32 %v2744, %v3015
      %v3097 = vadd.f32 %v2745, %v3017
      %v3098 = vadd.f32 %v2746, %v3019
      %v3099 = vadd.f32 %v2747, %v3021
      %v3100 = vadd.f32 %v2748, %v3023
      %v3101 = vadd.f32 %v2749, %v3025
      %v3102 = vadd.f32 %v2750, %v3027
      %v3103 = vadd.f32 %v2751, %v3029
      %v3104 = vadd.f32 %v2752, %v3031
      %v3105 = vadd.f32 %v2753, %v3033
      %v3106 = vadd.f32 %v2754, %v3035
      %v3107 = vadd.f32 %v2755, %v3037
      %v3108 = vadd.f32 %v2756, %v3039
      %v3109 = vadd.f32 %v2757, %v3041
      %v3110 = vadd.f32 %v2758, %v3043
      %v3111 = vadd.f32 %v2759, %v3045
      %v3112 = vadd.f32 %v2760, %v3047
      %v3113 = vadd.f32 %v2761, %v3049
      %3146 = vrot.lane.b32.xlu0 %v2058, 8
      %v3147 = vpop.permute.xlu0 %3146
      %3148 = vrot.lane.b32.xlu0 %v2059, 8
      %v3149 = vpop.permute.xlu0 %3148
      %3150 = vrot.lane.b32.xlu0 %v2060, 8
      %v3151 = vpop.permute.xlu0 %3150
      %3152 = vrot.lane.b32.xlu0 %v2061, 8
      %v3153 = vpop.permute.xlu0 %3152
      %3154 = vrot.lane.b32.xlu0 %v2062, 8
      %v3155 = vpop.permute.xlu0 %3154
      %3156 = vrot.lane.b32.xlu0 %v2063, 8
      %v3157 = vpop.permute.xlu0 %3156
      %3158 = vrot.lane.b32.xlu0 %v2064, 8
      %v3159 = vpop.permute.xlu0 %3158
      %3160 = vrot.lane.b32.xlu0 %v2065, 8
      %v3161 = vpop.permute.xlu0 %3160
      %3162 = vrot.lane.b32.xlu0 %v2066, 8
      %v3163 = vpop.permute.xlu0 %3162
      %3164 = vrot.lane.b32.xlu0 %v2067, 8
      %v3165 = vpop.permute.xlu0 %3164
      %3166 = vrot.lane.b32.xlu0 %v2068, 8
      %v3167 = vpop.permute.xlu0 %3166
      %3168 = vrot.lane.b32.xlu0 %v2069, 8
      %v3169 = vpop.permute.xlu0 %3168
      %3170 = vrot.lane.b32.xlu0 %v2070, 8
      %v3171 = vpop.permute.xlu0 %3170
      %3172 = vrot.lane.b32.xlu0 %v2071, 8
      %v3173 = vpop.permute.xlu0 %3172
      %3174 = vrot.lane.b32.xlu0 %v2072, 8
      %v3175 = vpop.permute.xlu0 %3174
      %3176 = vrot.lane.b32.xlu0 %v2073, 8
      %v3177 = vpop.permute.xlu0 %3176
      %3178 = vrot.lane.b32.xlu0 %v2074, 8
      %v3179 = vpop.permute.xlu0 %3178
      %3180 = vrot.lane.b32.xlu0 %v2075, 8
      %v3181 = vpop.permute.xlu0 %3180
      %3182 = vrot.lane.b32.xlu0 %v2076, 8
      %v3183 = vpop.permute.xlu0 %3182
      %3184 = vrot.lane.b32.xlu0 %v2077, 8
      %v3185 = vpop.permute.xlu0 %3184
      %3186 = vrot.lane.b32.xlu0 %v2078, 8
      %v3187 = vpop.permute.xlu0 %3186
      %3188 = vrot.lane.b32.xlu0 %v2079, 8
      %v3189 = vpop.permute.xlu0 %3188
      %3190 = vrot.lane.b32.xlu0 %v2080, 8
      %v3191 = vpop.permute.xlu0 %3190
      %3192 = vrot.lane.b32.xlu0 %v2081, 8
      %v3193 = vpop.permute.xlu0 %3192
      %3194 = vrot.lane.b32.xlu0 %v2082, 8
      %v3195 = vpop.permute.xlu0 %3194
      %3196 = vrot.lane.b32.xlu0 %v2083, 8
      %v3197 = vpop.permute.xlu0 %3196
      %3198 = vrot.lane.b32.xlu0 %v2084, 8
      %v3199 = vpop.permute.xlu0 %3198
      %3200 = vrot.lane.b32.xlu0 %v2085, 8
      %v3201 = vpop.permute.xlu0 %3200
      %3202 = vrot.lane.b32.xlu0 %v2086, 8
      %v3203 = vpop.permute.xlu0 %3202
      %3204 = vrot.lane.b32.xlu0 %v2087, 8
      %v3205 = vpop.permute.xlu0 %3204
      %3206 = vrot.lane.b32.xlu0 %v2088, 8
      %v3207 = vpop.permute.xlu0 %3206
      %3208 = vrot.lane.b32.xlu0 %v2089, 8
      %v3209 = vpop.permute.xlu0 %3208
      %v3242 = vmul.f32 %v3082, %v3147
      %v3243 = vmul.f32 %v3083, %v3149
      %v3244 = vmul.f32 %v3084, %v3151
      %v3245 = vmul.f32 %v3085, %v3153
      %v3246 = vmul.f32 %v3086, %v3155
      %v3247 = vmul.f32 %v3087, %v3157
      %v3248 = vmul.f32 %v3088, %v3159
      %v3249 = vmul.f32 %v3089, %v3161
      %v3250 = vmul.f32 %v3090, %v3163
      %v3251 = vmul.f32 %v3091, %v3165
      %v3252 = vmul.f32 %v3092, %v3167
      %v3253 = vmul.f32 %v3093, %v3169
      %v3254 = vmul.f32 %v3094, %v3171
      %v3255 = vmul.f32 %v3095, %v3173
      %v3256 = vmul.f32 %v3096, %v3175
      %v3257 = vmul.f32 %v3097, %v3177
      %v3258 = vmul.f32 %v3098, %v3179
      %v3259 = vmul.f32 %v3099, %v3181
      %v3260 = vmul.f32 %v3100, %v3183
      %v3261 = vmul.f32 %v3101, %v3185
      %v3262 = vmul.f32 %v3102, %v3187
      %v3263 = vmul.f32 %v3103, %v3189
      %v3264 = vmul.f32 %v3104, %v3191
      %v3265 = vmul.f32 %v3105, %v3193
      %v3266 = vmul.f32 %v3106, %v3195
      %v3267 = vmul.f32 %v3107, %v3197
      %v3268 = vmul.f32 %v3108, %v3199
      %v3269 = vmul.f32 %v3109, %v3201
      %v3270 = vmul.f32 %v3110, %v3203
      %v3271 = vmul.f32 %v3111, %v3205
      %v3272 = vmul.f32 %v3112, %v3207
      %v3273 = vmul.f32 %v3113, %v3209
      %3306 = vrot.lane.b32.xlu0 %v3242, 16
      %v3307 = vpop.permute.xlu0 %3306
      %3308 = vrot.lane.b32.xlu0 %v3243, 16
      %v3309 = vpop.permute.xlu0 %3308
      %3310 = vrot.lane.b32.xlu0 %v3244, 16
      %v3311 = vpop.permute.xlu0 %3310
      %3312 = vrot.lane.b32.xlu0 %v3245, 16
      %v3313 = vpop.permute.xlu0 %3312
      %3314 = vrot.lane.b32.xlu0 %v3246, 16
      %v3315 = vpop.permute.xlu0 %3314
      %3316 = vrot.lane.b32.xlu0 %v3247, 16
      %v3317 = vpop.permute.xlu0 %3316
      %3318 = vrot.lane.b32.xlu0 %v3248, 16
      %v3319 = vpop.permute.xlu0 %3318
      %3320 = vrot.lane.b32.xlu0 %v3249, 16
      %v3321 = vpop.permute.xlu0 %3320
      %3322 = vrot.lane.b32.xlu0 %v3250, 16
      %v3323 = vpop.permute.xlu0 %3322
      %3324 = vrot.lane.b32.xlu0 %v3251, 16
      %v3325 = vpop.permute.xlu0 %3324
      %3326 = vrot.lane.b32.xlu0 %v3252, 16
      %v3327 = vpop.permute.xlu0 %3326
      %3328 = vrot.lane.b32.xlu0 %v3253, 16
      %v3329 = vpop.permute.xlu0 %3328
      %3330 = vrot.lane.b32.xlu0 %v3254, 16
      %v3331 = vpop.permute.xlu0 %3330
      %3332 = vrot.lane.b32.xlu0 %v3255, 16
      %v3333 = vpop.permute.xlu0 %3332
      %3334 = vrot.lane.b32.xlu0 %v3256, 16
      %v3335 = vpop.permute.xlu0 %3334
      %3336 = vrot.lane.b32.xlu0 %v3257, 16
      %v3337 = vpop.permute.xlu0 %3336
      %3338 = vrot.lane.b32.xlu0 %v3258, 16
      %v3339 = vpop.permute.xlu0 %3338
      %3340 = vrot.lane.b32.xlu0 %v3259, 16
      %v3341 = vpop.permute.xlu0 %3340
      %3342 = vrot.lane.b32.xlu0 %v3260, 16
      %v3343 = vpop.permute.xlu0 %3342
      %3344 = vrot.lane.b32.xlu0 %v3261, 16
      %v3345 = vpop.permute.xlu0 %3344
      %3346 = vrot.lane.b32.xlu0 %v3262, 16
      %v3347 = vpop.permute.xlu0 %3346
      %3348 = vrot.lane.b32.xlu0 %v3263, 16
      %v3349 = vpop.permute.xlu0 %3348
      %3350 = vrot.lane.b32.xlu0 %v3264, 16
      %v3351 = vpop.permute.xlu0 %3350
      %3352 = vrot.lane.b32.xlu0 %v3265, 16
      %v3353 = vpop.permute.xlu0 %3352
      %3354 = vrot.lane.b32.xlu0 %v3266, 16
      %v3355 = vpop.permute.xlu0 %3354
      %3356 = vrot.lane.b32.xlu0 %v3267, 16
      %v3357 = vpop.permute.xlu0 %3356
      %3358 = vrot.lane.b32.xlu0 %v3268, 16
      %v3359 = vpop.permute.xlu0 %3358
      %3360 = vrot.lane.b32.xlu0 %v3269, 16
      %v3361 = vpop.permute.xlu0 %3360
      %3362 = vrot.lane.b32.xlu0 %v3270, 16
      %v3363 = vpop.permute.xlu0 %3362
      %3364 = vrot.lane.b32.xlu0 %v3271, 16
      %v3365 = vpop.permute.xlu0 %3364
      %3366 = vrot.lane.b32.xlu0 %v3272, 16
      %v3367 = vpop.permute.xlu0 %3366
      %3368 = vrot.lane.b32.xlu0 %v3273, 16
      %v3369 = vpop.permute.xlu0 %3368
      %v3402 = vadd.f32 %v1834, %v3307
      %v3403 = vadd.f32 %v1837, %v3309
      %v3404 = vadd.f32 %v1842, %v3311
      %v3405 = vadd.f32 %v1845, %v3313
      %v3406 = vadd.f32 %v1850, %v3315
      %v3407 = vadd.f32 %v1853, %v3317
      %v3408 = vadd.f32 %v1858, %v3319
      %v3409 = vadd.f32 %v1861, %v3321
      %v3410 = vadd.f32 %v1866, %v3323
      %v3411 = vadd.f32 %v1869, %v3325
      %v3412 = vadd.f32 %v1874, %v3327
      %v3413 = vadd.f32 %v1877, %v3329
      %v3414 = vadd.f32 %v1882, %v3331
      %v3415 = vadd.f32 %v1885, %v3333
      %v3416 = vadd.f32 %v1890, %v3335
      %v3417 = vadd.f32 %v1893, %v3337
      %v3418 = vadd.f32 %v1898, %v3339
      %v3419 = vadd.f32 %v1901, %v3341
      %v3420 = vadd.f32 %v1906, %v3343
      %v3421 = vadd.f32 %v1909, %v3345
      %v3422 = vadd.f32 %v1914, %v3347
      %v3423 = vadd.f32 %v1917, %v3349
      %v3424 = vadd.f32 %v1922, %v3351
      %v3425 = vadd.f32 %v1925, %v3353
      %v3426 = vadd.f32 %v1930, %v3355
      %v3427 = vadd.f32 %v1933, %v3357
      %v3428 = vadd.f32 %v1938, %v3359
      %v3429 = vadd.f32 %v1941, %v3361
      %v3430 = vadd.f32 %v1946, %v3363
      %v3431 = vadd.f32 %v1949, %v3365
      %v3432 = vadd.f32 %v1954, %v3367
      %v3433 = vadd.f32 %v1957, %v3369
      %v3434 = vmul.f32 %v3402, 0.5
      %v3435 = vmul.f32 %v3403, 0.5
      %v3436 = vmul.f32 %v3404, 0.5
      %v3437 = vmul.f32 %v3405, 0.5
      %v3438 = vmul.f32 %v3406, 0.5
      %v3439 = vmul.f32 %v3407, 0.5
      %v3440 = vmul.f32 %v3408, 0.5
      %v3441 = vmul.f32 %v3409, 0.5
      %v3442 = vmul.f32 %v3410, 0.5
      %v3443 = vmul.f32 %v3411, 0.5
      %v3444 = vmul.f32 %v3412, 0.5
      %v3445 = vmul.f32 %v3413, 0.5
      %v3446 = vmul.f32 %v3414, 0.5
      %v3447 = vmul.f32 %v3415, 0.5
      %v3448 = vmul.f32 %v3416, 0.5
      %v3449 = vmul.f32 %v3417, 0.5
      %v3450 = vmul.f32 %v3418, 0.5
      %v3451 = vmul.f32 %v3419, 0.5
      %v3452 = vmul.f32 %v3420, 0.5
      %v3453 = vmul.f32 %v3421, 0.5
      %v3454 = vmul.f32 %v3422, 0.5
      %v3455 = vmul.f32 %v3423, 0.5
      %v3456 = vmul.f32 %v3424, 0.5
      %v3457 = vmul.f32 %v3425, 0.5
      %v3458 = vmul.f32 %v3426, 0.5
      %v3459 = vmul.f32 %v3427, 0.5
      %v3460 = vmul.f32 %v3428, 0.5
      %v3461 = vmul.f32 %v3429, 0.5
      %v3462 = vmul.f32 %v3430, 0.5
      %v3463 = vmul.f32 %v3431, 0.5
      %v3464 = vmul.f32 %v3432, 0.5
      %v3465 = vmul.f32 %v3433, 0.5
      %v3466 = vtanh.pop %v3434
      %v3467 = vtanh.pop %v3435
      %v3468 = vtanh.pop %v3436
      %v3469 = vtanh.pop %v3437
      %v3470 = vtanh.pop %v3438
      %v3471 = vtanh.pop %v3439
      %v3472 = vtanh.pop %v3440
      %v3473 = vtanh.pop %v3441
      %v3474 = vtanh.pop %v3442
      %v3475 = vtanh.pop %v3443
      %v3476 = vtanh.pop %v3444
      %v3477 = vtanh.pop %v3445
      %v3478 = vtanh.pop %v3446
      %v3479 = vtanh.pop %v3447
      %v3480 = vtanh.pop %v3448
      %v3481 = vtanh.pop %v3449
      %v3482 = vtanh.pop %v3450
      %v3483 = vtanh.pop %v3451
      %v3484 = vtanh.pop %v3452
      %v3485 = vtanh.pop %v3453
      %v3486 = vtanh.pop %v3454
      %v3487 = vtanh.pop %v3455
      %v3488 = vtanh.pop %v3456
      %v3489 = vtanh.pop %v3457
      %v3490 = vtanh.pop %v3458
      %v3491 = vtanh.pop %v3459
      %v3492 = vtanh.pop %v3460
      %v3493 = vtanh.pop %v3461
      %v3494 = vtanh.pop %v3462
      %v3495 = vtanh.pop %v3463
      %v3496 = vtanh.pop %v3464
      %v3497 = vtanh.pop %v3465
      %v3498 = vmul.f32 %v3466, 0.5
      %v3499 = vmul.f32 %v3467, 0.5
      %v3500 = vmul.f32 %v3468, 0.5
      %v3501 = vmul.f32 %v3469, 0.5
      %v3502 = vmul.f32 %v3470, 0.5
      %v3503 = vmul.f32 %v3471, 0.5
      %v3504 = vmul.f32 %v3472, 0.5
      %v3505 = vmul.f32 %v3473, 0.5
      %v3506 = vmul.f32 %v3474, 0.5
      %v3507 = vmul.f32 %v3475, 0.5
      %v3508 = vmul.f32 %v3476, 0.5
      %v3509 = vmul.f32 %v3477, 0.5
      %v3510 = vmul.f32 %v3478, 0.5
      %v3511 = vmul.f32 %v3479, 0.5
      %v3512 = vmul.f32 %v3480, 0.5
      %v3513 = vmul.f32 %v3481, 0.5
      %v3514 = vmul.f32 %v3482, 0.5
      %v3515 = vmul.f32 %v3483, 0.5
      %v3516 = vmul.f32 %v3484, 0.5
      %v3517 = vmul.f32 %v3485, 0.5
      %v3518 = vmul.f32 %v3486, 0.5
      %v3519 = vmul.f32 %v3487, 0.5
      %v3520 = vmul.f32 %v3488, 0.5
      %v3521 = vmul.f32 %v3489, 0.5
      %v3522 = vmul.f32 %v3490, 0.5
      %v3523 = vmul.f32 %v3491, 0.5
      %v3524 = vmul.f32 %v3492, 0.5
      %v3525 = vmul.f32 %v3493, 0.5
      %v3526 = vmul.f32 %v3494, 0.5
      %v3527 = vmul.f32 %v3495, 0.5
      %v3528 = vmul.f32 %v3496, 0.5
      %v3529 = vmul.f32 %v3497, 0.5
      %v3530 = vadd.f32 %v3498, 0.5
      %v3531 = vadd.f32 %v3499, 0.5
      %v3532 = vadd.f32 %v3500, 0.5
      %v3533 = vadd.f32 %v3501, 0.5
      %v3534 = vadd.f32 %v3502, 0.5
      %v3535 = vadd.f32 %v3503, 0.5
      %v3536 = vadd.f32 %v3504, 0.5
      %v3537 = vadd.f32 %v3505, 0.5
      %v3538 = vadd.f32 %v3506, 0.5
      %v3539 = vadd.f32 %v3507, 0.5
      %v3540 = vadd.f32 %v3508, 0.5
      %v3541 = vadd.f32 %v3509, 0.5
      %v3542 = vadd.f32 %v3510, 0.5
      %v3543 = vadd.f32 %v3511, 0.5
      %v3544 = vadd.f32 %v3512, 0.5
      %v3545 = vadd.f32 %v3513, 0.5
      %v3546 = vadd.f32 %v3514, 0.5
      %v3547 = vadd.f32 %v3515, 0.5
      %v3548 = vadd.f32 %v3516, 0.5
      %v3549 = vadd.f32 %v3517, 0.5
      %v3550 = vadd.f32 %v3518, 0.5
      %v3551 = vadd.f32 %v3519, 0.5
      %v3552 = vadd.f32 %v3520, 0.5
      %v3553 = vadd.f32 %v3521, 0.5
      %v3554 = vadd.f32 %v3522, 0.5
      %v3555 = vadd.f32 %v3523, 0.5
      %v3556 = vadd.f32 %v3524, 0.5
      %v3557 = vadd.f32 %v3525, 0.5
      %v3558 = vadd.f32 %v3526, 0.5
      %v3559 = vadd.f32 %v3527, 0.5
      %v3560 = vadd.f32 %v3528, 0.5
      %v3561 = vadd.f32 %v3529, 0.5
      %v3562 = vtanh.pop %v3082
      %v3563 = vtanh.pop %v3083
      %v3564 = vtanh.pop %v3084
      %v3565 = vtanh.pop %v3085
      %v3566 = vtanh.pop %v3086
      %v3567 = vtanh.pop %v3087
      %v3568 = vtanh.pop %v3088
      %v3569 = vtanh.pop %v3089
      %v3570 = vtanh.pop %v3090
      %v3571 = vtanh.pop %v3091
      %v3572 = vtanh.pop %v3092
      %v3573 = vtanh.pop %v3093
      %v3574 = vtanh.pop %v3094
      %v3575 = vtanh.pop %v3095
      %v3576 = vtanh.pop %v3096
      %v3577 = vtanh.pop %v3097
      %v3578 = vtanh.pop %v3098
      %v3579 = vtanh.pop %v3099
      %v3580 = vtanh.pop %v3100
      %v3581 = vtanh.pop %v3101
      %v3582 = vtanh.pop %v3102
      %v3583 = vtanh.pop %v3103
      %v3584 = vtanh.pop %v3104
      %v3585 = vtanh.pop %v3105
      %v3586 = vtanh.pop %v3106
      %v3587 = vtanh.pop %v3107
      %v3588 = vtanh.pop %v3108
      %v3589 = vtanh.pop %v3109
      %v3590 = vtanh.pop %v3110
      %v3591 = vtanh.pop %v3111
      %v3592 = vtanh.pop %v3112
      %v3593 = vtanh.pop %v3113
      %3626 = vrot.lane.b32.xlu0 %v3562, 16
      %v3627 = vpop.permute.xlu0 %3626
      %3628 = vrot.lane.b32.xlu0 %v3563, 16
      %v3629 = vpop.permute.xlu0 %3628
      %3630 = vrot.lane.b32.xlu0 %v3564, 16
      %v3631 = vpop.permute.xlu0 %3630
      %3632 = vrot.lane.b32.xlu0 %v3565, 16
      %v3633 = vpop.permute.xlu0 %3632
      %3634 = vrot.lane.b32.xlu0 %v3566, 16
      %v3635 = vpop.permute.xlu0 %3634
      %3636 = vrot.lane.b32.xlu0 %v3567, 16
      %v3637 = vpop.permute.xlu0 %3636
      %3638 = vrot.lane.b32.xlu0 %v3568, 16
      %v3639 = vpop.permute.xlu0 %3638
      %3640 = vrot.lane.b32.xlu0 %v3569, 16
      %v3641 = vpop.permute.xlu0 %3640
      %3642 = vrot.lane.b32.xlu0 %v3570, 16
      %v3643 = vpop.permute.xlu0 %3642
      %3644 = vrot.lane.b32.xlu0 %v3571, 16
      %v3645 = vpop.permute.xlu0 %3644
      %3646 = vrot.lane.b32.xlu0 %v3572, 16
      %v3647 = vpop.permute.xlu0 %3646
      %3648 = vrot.lane.b32.xlu0 %v3573, 16
      %v3649 = vpop.permute.xlu0 %3648
      %3650 = vrot.lane.b32.xlu0 %v3574, 16
      %v3651 = vpop.permute.xlu0 %3650
      %3652 = vrot.lane.b32.xlu0 %v3575, 16
      %v3653 = vpop.permute.xlu0 %3652
      %3654 = vrot.lane.b32.xlu0 %v3576, 16
      %v3655 = vpop.permute.xlu0 %3654
      %3656 = vrot.lane.b32.xlu0 %v3577, 16
      %v3657 = vpop.permute.xlu0 %3656
      %3658 = vrot.lane.b32.xlu0 %v3578, 16
      %v3659 = vpop.permute.xlu0 %3658
      %3660 = vrot.lane.b32.xlu0 %v3579, 16
      %v3661 = vpop.permute.xlu0 %3660
      %3662 = vrot.lane.b32.xlu0 %v3580, 16
      %v3663 = vpop.permute.xlu0 %3662
      %3664 = vrot.lane.b32.xlu0 %v3581, 16
      %v3665 = vpop.permute.xlu0 %3664
      %3666 = vrot.lane.b32.xlu0 %v3582, 16
      %v3667 = vpop.permute.xlu0 %3666
      %3668 = vrot.lane.b32.xlu0 %v3583, 16
      %v3669 = vpop.permute.xlu0 %3668
      %3670 = vrot.lane.b32.xlu0 %v3584, 16
      %v3671 = vpop.permute.xlu0 %3670
      %3672 = vrot.lane.b32.xlu0 %v3585, 16
      %v3673 = vpop.permute.xlu0 %3672
      %3674 = vrot.lane.b32.xlu0 %v3586, 16
      %v3675 = vpop.permute.xlu0 %3674
      %3676 = vrot.lane.b32.xlu0 %v3587, 16
      %v3677 = vpop.permute.xlu0 %3676
      %3678 = vrot.lane.b32.xlu0 %v3588, 16
      %v3679 = vpop.permute.xlu0 %3678
      %3680 = vrot.lane.b32.xlu0 %v3589, 16
      %v3681 = vpop.permute.xlu0 %3680
      %3682 = vrot.lane.b32.xlu0 %v3590, 16
      %v3683 = vpop.permute.xlu0 %3682
      %3684 = vrot.lane.b32.xlu0 %v3591, 16
      %v3685 = vpop.permute.xlu0 %3684
      %3686 = vrot.lane.b32.xlu0 %v3592, 16
      %v3687 = vpop.permute.xlu0 %3686
      %3688 = vrot.lane.b32.xlu0 %v3593, 16
      %v3689 = vpop.permute.xlu0 %3688
      %v3722 = vmul.f32 %v3530, %v3627
      %v3723 = vmul.f32 %v3531, %v3629
      %v3724 = vmul.f32 %v3532, %v3631
      %v3725 = vmul.f32 %v3533, %v3633
      %v3726 = vmul.f32 %v3534, %v3635
      %v3727 = vmul.f32 %v3535, %v3637
      %v3728 = vmul.f32 %v3536, %v3639
      %v3729 = vmul.f32 %v3537, %v3641
      %v3730 = vmul.f32 %v3538, %v3643
      %v3731 = vmul.f32 %v3539, %v3645
      %v3732 = vmul.f32 %v3540, %v3647
      %v3733 = vmul.f32 %v3541, %v3649
      %v3734 = vmul.f32 %v3542, %v3651
      %v3735 = vmul.f32 %v3543, %v3653
      %v3736 = vmul.f32 %v3544, %v3655
      %v3737 = vmul.f32 %v3545, %v3657
      %v3738 = vmul.f32 %v3546, %v3659
      %v3739 = vmul.f32 %v3547, %v3661
      %v3740 = vmul.f32 %v3548, %v3663
      %v3741 = vmul.f32 %v3549, %v3665
      %v3742 = vmul.f32 %v3550, %v3667
      %v3743 = vmul.f32 %v3551, %v3669
      %v3744 = vmul.f32 %v3552, %v3671
      %v3745 = vmul.f32 %v3553, %v3673
      %v3746 = vmul.f32 %v3554, %v3675
      %v3747 = vmul.f32 %v3555, %v3677
      %v3748 = vmul.f32 %v3556, %v3679
      %v3749 = vmul.f32 %v3557, %v3681
      %v3750 = vmul.f32 %v3558, %v3683
      %v3751 = vmul.f32 %v3559, %v3685
      %v3752 = vmul.f32 %v3560, %v3687
      %v3753 = vmul.f32 %v3561, %v3689
      %3786 = vrot.lane.b32.xlu0 %v3722, 104
      %v3787 = vpop.permute.xlu0 %3786
      %3788 = vrot.lane.b32.xlu0 %v3723, 104
      %v3789 = vpop.permute.xlu0 %3788
      %3790 = vrot.lane.b32.xlu0 %v3724, 104
      %v3791 = vpop.permute.xlu0 %3790
      %3792 = vrot.lane.b32.xlu0 %v3725, 104
      %v3793 = vpop.permute.xlu0 %3792
      %3794 = vrot.lane.b32.xlu0 %v3726, 104
      %v3795 = vpop.permute.xlu0 %3794
      %3796 = vrot.lane.b32.xlu0 %v3727, 104
      %v3797 = vpop.permute.xlu0 %3796
      %3798 = vrot.lane.b32.xlu0 %v3728, 104
      %v3799 = vpop.permute.xlu0 %3798
      %3800 = vrot.lane.b32.xlu0 %v3729, 104
      %v3801 = vpop.permute.xlu0 %3800
      %3802 = vrot.lane.b32.xlu0 %v3730, 104
      %v3803 = vpop.permute.xlu0 %3802
      %3804 = vrot.lane.b32.xlu0 %v3731, 104
      %v3805 = vpop.permute.xlu0 %3804
      %3806 = vrot.lane.b32.xlu0 %v3732, 104
      %v3807 = vpop.permute.xlu0 %3806
      %3808 = vrot.lane.b32.xlu0 %v3733, 104
      %v3809 = vpop.permute.xlu0 %3808
      %3810 = vrot.lane.b32.xlu0 %v3734, 104
      %v3811 = vpop.permute.xlu0 %3810
      %3812 = vrot.lane.b32.xlu0 %v3735, 104
      %v3813 = vpop.permute.xlu0 %3812
      %3814 = vrot.lane.b32.xlu0 %v3736, 104
      %v3815 = vpop.permute.xlu0 %3814
      %3816 = vrot.lane.b32.xlu0 %v3737, 104
      %v3817 = vpop.permute.xlu0 %3816
      %3818 = vrot.lane.b32.xlu0 %v3738, 104
      %v3819 = vpop.permute.xlu0 %3818
      %3820 = vrot.lane.b32.xlu0 %v3739, 104
      %v3821 = vpop.permute.xlu0 %3820
      %3822 = vrot.lane.b32.xlu0 %v3740, 104
      %v3823 = vpop.permute.xlu0 %3822
      %3824 = vrot.lane.b32.xlu0 %v3741, 104
      %v3825 = vpop.permute.xlu0 %3824
      %3826 = vrot.lane.b32.xlu0 %v3742, 104
      %v3827 = vpop.permute.xlu0 %3826
      %3828 = vrot.lane.b32.xlu0 %v3743, 104
      %v3829 = vpop.permute.xlu0 %3828
      %3830 = vrot.lane.b32.xlu0 %v3744, 104
      %v3831 = vpop.permute.xlu0 %3830
      %3832 = vrot.lane.b32.xlu0 %v3745, 104
      %v3833 = vpop.permute.xlu0 %3832
      %3834 = vrot.lane.b32.xlu0 %v3746, 104
      %v3835 = vpop.permute.xlu0 %3834
      %3836 = vrot.lane.b32.xlu0 %v3747, 104
      %v3837 = vpop.permute.xlu0 %3836
      %3838 = vrot.lane.b32.xlu0 %v3748, 104
      %v3839 = vpop.permute.xlu0 %3838
      %3840 = vrot.lane.b32.xlu0 %v3749, 104
      %v3841 = vpop.permute.xlu0 %3840
      %3842 = vrot.lane.b32.xlu0 %v3750, 104
      %v3843 = vpop.permute.xlu0 %3842
      %3844 = vrot.lane.b32.xlu0 %v3751, 104
      %v3845 = vpop.permute.xlu0 %3844
      %3846 = vrot.lane.b32.xlu0 %v3752, 104
      %v3847 = vpop.permute.xlu0 %3846
      %3848 = vrot.lane.b32.xlu0 %v3753, 104
      %v3849 = vpop.permute.xlu0 %3848
      %vm3882 = vcmask 64512
      %3883 = vst.msk [vmem:[%s279] sm:$0xff] %vm3882, %v3787
      %3884 = vst.msk [vmem:[%s279 + $0x8] sm:$0xff] %vm3882, %v3789
      %3885 = vst.msk [vmem:[%s279 + $0x10] sm:$0xff] %vm3882, %v3791
      %3886 = vst.msk [vmem:[%s279 + $0x18] sm:$0xff] %vm3882, %v3793
      %3887 = vst.msk [vmem:[%s279 + $0x20] sm:$0xff] %vm3882, %v3795
      %3888 = vst.msk [vmem:[%s279 + $0x28] sm:$0xff] %vm3882, %v3797
      %3889 = vst.msk [vmem:[%s279 + $0x30] sm:$0xff] %vm3882, %v3799
      %3890 = vst.msk [vmem:[%s279 + $0x38] sm:$0xff] %vm3882, %v3801
      %3891 = vst.msk [vmem:[%s279 + $0x40] sm:$0xff] %vm3882, %v3803
      %3892 = vst.msk [vmem:[%s279 + $0x48] sm:$0xff] %vm3882, %v3805
      %3893 = vst.msk [vmem:[%s279 + $0x50] sm:$0xff] %vm3882, %v3807
      %3894 = vst.msk [vmem:[%s279 + $0x58] sm:$0xff] %vm3882, %v3809
      %3895 = vst.msk [vmem:[%s279 + $0x60] sm:$0xff] %vm3882, %v3811
      %3896 = vst.msk [vmem:[%s279 + $0x68] sm:$0xff] %vm3882, %v3813
      %3897 = vst.msk [vmem:[%s279 + $0x70] sm:$0xff] %vm3882, %v3815
      %3898 = vst.msk [vmem:[%s279 + $0x78] sm:$0xff] %vm3882, %v3817
      %3899 = vst.msk [vmem:[%s279 + $0x80] sm:$0xff] %vm3882, %v3819
      %3900 = vst.msk [vmem:[%s279 + $0x88] sm:$0xff] %vm3882, %v3821
      %3901 = vst.msk [vmem:[%s279 + $0x90] sm:$0xff] %vm3882, %v3823
      %3902 = vst.msk [vmem:[%s279 + $0x98] sm:$0xff] %vm3882, %v3825
      %3903 = vst.msk [vmem:[%s279 + $0xa0] sm:$0xff] %vm3882, %v3827
      %3904 = vst.msk [vmem:[%s279 + $0xa8] sm:$0xff] %vm3882, %v3829
      %3905 = vst.msk [vmem:[%s279 + $0xb0] sm:$0xff] %vm3882, %v3831
      %3906 = vst.msk [vmem:[%s279 + $0xb8] sm:$0xff] %vm3882, %v3833
      %3907 = vst.msk [vmem:[%s279 + $0xc0] sm:$0xff] %vm3882, %v3835
      %3908 = vst.msk [vmem:[%s279 + $0xc8] sm:$0xff] %vm3882, %v3837
      %3909 = vst.msk [vmem:[%s279 + $0xd0] sm:$0xff] %vm3882, %v3839
      %3910 = vst.msk [vmem:[%s279 + $0xd8] sm:$0xff] %vm3882, %v3841
      %3911 = vst.msk [vmem:[%s279 + $0xe0] sm:$0xff] %vm3882, %v3843
      %3912 = vst.msk [vmem:[%s279 + $0xe8] sm:$0xff] %vm3882, %v3845
      %3913 = vst.msk [vmem:[%s279 + $0xf0] sm:$0xff] %vm3882, %v3847
      %3914 = vst.msk [vmem:[%s279 + $0xf8] sm:$0xff] %vm3882, %v3849
      %3947 = vrot.lane.b32.xlu0 %v3082, 120
      %v3948 = vpop.permute.xlu0 %3947
      %3949 = vrot.lane.b32.xlu0 %v3083, 120
      %v3950 = vpop.permute.xlu0 %3949
      %3951 = vrot.lane.b32.xlu0 %v3084, 120
      %v3952 = vpop.permute.xlu0 %3951
      %3953 = vrot.lane.b32.xlu0 %v3085, 120
      %v3954 = vpop.permute.xlu0 %3953
      %3955 = vrot.lane.b32.xlu0 %v3086, 120
      %v3956 = vpop.permute.xlu0 %3955
      %3957 = vrot.lane.b32.xlu0 %v3087, 120
      %v3958 = vpop.permute.xlu0 %3957
      %3959 = vrot.lane.b32.xlu0 %v3088, 120
      %v3960 = vpop.permute.xlu0 %3959
      %3961 = vrot.lane.b32.xlu0 %v3089, 120
      %v3962 = vpop.permute.xlu0 %3961
      %3963 = vrot.lane.b32.xlu0 %v3090, 120
      %v3964 = vpop.permute.xlu0 %3963
      %3965 = vrot.lane.b32.xlu0 %v3091, 120
      %v3966 = vpop.permute.xlu0 %3965
      %3967 = vrot.lane.b32.xlu0 %v3092, 120
      %v3968 = vpop.permute.xlu0 %3967
      %3969 = vrot.lane.b32.xlu0 %v3093, 120
      %v3970 = vpop.permute.xlu0 %3969
      %3971 = vrot.lane.b32.xlu0 %v3094, 120
      %v3972 = vpop.permute.xlu0 %3971
      %3973 = vrot.lane.b32.xlu0 %v3095, 120
      %v3974 = vpop.permute.xlu0 %3973
      %3975 = vrot.lane.b32.xlu0 %v3096, 120
      %v3976 = vpop.permute.xlu0 %3975
      %3977 = vrot.lane.b32.xlu0 %v3097, 120
      %v3978 = vpop.permute.xlu0 %3977
      %3979 = vrot.lane.b32.xlu0 %v3098, 120
      %v3980 = vpop.permute.xlu0 %3979
      %3981 = vrot.lane.b32.xlu0 %v3099, 120
      %v3982 = vpop.permute.xlu0 %3981
      %3983 = vrot.lane.b32.xlu0 %v3100, 120
      %v3984 = vpop.permute.xlu0 %3983
      %3985 = vrot.lane.b32.xlu0 %v3101, 120
      %v3986 = vpop.permute.xlu0 %3985
      %3987 = vrot.lane.b32.xlu0 %v3102, 120
      %v3988 = vpop.permute.xlu0 %3987
      %3989 = vrot.lane.b32.xlu0 %v3103, 120
      %v3990 = vpop.permute.xlu0 %3989
      %3991 = vrot.lane.b32.xlu0 %v3104, 120
      %v3992 = vpop.permute.xlu0 %3991
      %3993 = vrot.lane.b32.xlu0 %v3105, 120
      %v3994 = vpop.permute.xlu0 %3993
      %3995 = vrot.lane.b32.xlu0 %v3106, 120
      %v3996 = vpop.permute.xlu0 %3995
      %3997 = vrot.lane.b32.xlu0 %v3107, 120
      %v3998 = vpop.permute.xlu0 %3997
      %3999 = vrot.lane.b32.xlu0 %v3108, 120
      %v4000 = vpop.permute.xlu0 %3999
      %4001 = vrot.lane.b32.xlu0 %v3109, 120
      %v4002 = vpop.permute.xlu0 %4001
      %4003 = vrot.lane.b32.xlu0 %v3110, 120
      %v4004 = vpop.permute.xlu0 %4003
      %4005 = vrot.lane.b32.xlu0 %v3111, 120
      %v4006 = vpop.permute.xlu0 %4005
      %4007 = vrot.lane.b32.xlu0 %v3112, 120
      %v4008 = vpop.permute.xlu0 %4007
      %4009 = vrot.lane.b32.xlu0 %v3113, 120
      %v4010 = vpop.permute.xlu0 %4009
      %4043 = vst.msk [vmem:[%s284] sm:$0xff] %vm3882, %v3948
      %4044 = vst.msk [vmem:[%s284 + $0x8] sm:$0xff] %vm3882, %v3950
      %4045 = vst.msk [vmem:[%s284 + $0x10] sm:$0xff] %vm3882, %v3952
      %4046 = vst.msk [vmem:[%s284 + $0x18] sm:$0xff] %vm3882, %v3954
      %4047 = vst.msk [vmem:[%s284 + $0x20] sm:$0xff] %vm3882, %v3956
      %4048 = vst.msk [vmem:[%s284 + $0x28] sm:$0xff] %vm3882, %v3958
      %4049 = vst.msk [vmem:[%s284 + $0x30] sm:$0xff] %vm3882, %v3960
      %4050 = vst.msk [vmem:[%s284 + $0x38] sm:$0xff] %vm3882, %v3962
      %4051 = vst.msk [vmem:[%s284 + $0x40] sm:$0xff] %vm3882, %v3964
      %4052 = vst.msk [vmem:[%s284 + $0x48] sm:$0xff] %vm3882, %v3966
      %4053 = vst.msk [vmem:[%s284 + $0x50] sm:$0xff] %vm3882, %v3968
      %4054 = vst.msk [vmem:[%s284 + $0x58] sm:$0xff] %vm3882, %v3970
      %4055 = vst.msk [vmem:[%s284 + $0x60] sm:$0xff] %vm3882, %v3972
      %4056 = vst.msk [vmem:[%s284 + $0x68] sm:$0xff] %vm3882, %v3974
      %4057 = vst.msk [vmem:[%s284 + $0x70] sm:$0xff] %vm3882, %v3976
      %4058 = vst.msk [vmem:[%s284 + $0x78] sm:$0xff] %vm3882, %v3978
      %4059 = vst.msk [vmem:[%s284 + $0x80] sm:$0xff] %vm3882, %v3980
      %4060 = vst.msk [vmem:[%s284 + $0x88] sm:$0xff] %vm3882, %v3982
      %4061 = vst.msk [vmem:[%s284 + $0x90] sm:$0xff] %vm3882, %v3984
      %4062 = vst.msk [vmem:[%s284 + $0x98] sm:$0xff] %vm3882, %v3986
      %4063 = vst.msk [vmem:[%s284 + $0xa0] sm:$0xff] %vm3882, %v3988
      %4064 = vst.msk [vmem:[%s284 + $0xa8] sm:$0xff] %vm3882, %v3990
      %4065 = vst.msk [vmem:[%s284 + $0xb0] sm:$0xff] %vm3882, %v3992
      %4066 = vst.msk [vmem:[%s284 + $0xb8] sm:$0xff] %vm3882, %v3994
      %4067 = vst.msk [vmem:[%s284 + $0xc0] sm:$0xff] %vm3882, %v3996
      %4068 = vst.msk [vmem:[%s284 + $0xc8] sm:$0xff] %vm3882, %v3998
      %4069 = vst.msk [vmem:[%s284 + $0xd0] sm:$0xff] %vm3882, %v4000
      %4070 = vst.msk [vmem:[%s284 + $0xd8] sm:$0xff] %vm3882, %v4002
      %4071 = vst.msk [vmem:[%s284 + $0xe0] sm:$0xff] %vm3882, %v4004
      %4072 = vst.msk [vmem:[%s284 + $0xe8] sm:$0xff] %vm3882, %v4006
      %4073 = vst.msk [vmem:[%s284 + $0xf0] sm:$0xff] %vm3882, %v4008
      %4074 = vst.msk [vmem:[%s284 + $0xf8] sm:$0xff] %vm3882, %v4010
      %p4075 = scmp.lt.s32.totalorder %s18, 1
      %s4076 = scalar_select %p4075, %s18, 1
      %s4077 = smul.addr %s4076, 32
      %s4078 = smul.addr %s4077, 8
      %s4079 = scalar_lea.vmem %s5, %s4078
      %p4080 = scmp.lt.s32.totalorder %s18, 1
      %s4081 = scalar_select %p4080, %s18, 1
      %s4082 = smul.addr %s4081, 32
      %s4083 = smul.addr %s4082, 8
      %s4084 = scalar_lea.vmem %s6, %s4083
      // Predicated region
      $region41: #{tpu_custom_call.1} parent=39 // pred_check
        %p4085 = pneg %p151
      $region42: #{tpu_custom_call.1} parent=39 // pred_check_branch
        %4087 = sbr.rel (%p4085) target = $region44
      $region43: #{tpu_custom_call.1} parent=39 // pred_region
        _
      $region44: #{tpu_custom_call.1} parent=39 // pred_fallthru
        _
      // Predicated region
      $region45: #{tpu_custom_call.1} parent=39 // pred_check
        %p4088 = pneg %p177
      $region46: #{tpu_custom_call.1} parent=39 // pred_check_branch
        %4090 = sbr.rel (%p4088) target = $region48
      $region47: #{tpu_custom_call.1} parent=39 // pred_region
        _
      $region48: #{tpu_custom_call.1} parent=39 // pred_fallthru
        _
    $region40: #{tpu_custom_call.1} parent=5 // pred_fallthru
      _
    %p4091 = scmp.le.s32.totalorder 2, %s13
    // Predicated region
    $region49: #{tpu_custom_call.1} parent=5 // pred_check
      %p4092 = pneg %p4091
    $region50: #{tpu_custom_call.1} parent=5 // pred_check_branch
      %4094 = sbr.rel (%p4092) target = $region52
    $region51: #{tpu_custom_call.1} parent=5 // pred_region
      %s4095 = ssub.s32 %s13, 2
      // Predicated region
      $region53: #{tpu_custom_call.1} parent=51 // pred_check
        %p4096 = pneg %p157
      $region54: #{tpu_custom_call.1} parent=51 // pred_check_branch
        %4098 = sbr.rel (%p4096) target = $region56
      $region55: #{tpu_custom_call.1} parent=51 // pred_region
        %p4099 = scmp.lt.s32.totalorder %s19, 1
        %s4100 = scalar_select %p4099, %s19, 1
        %s4101 = smul.addr %s4100, 32
        %s4102 = smul.addr %s4101, 8
        %s4103 = scalar_lea.vmem %s5, %s4102
      $region56: #{tpu_custom_call.1} parent=51 // pred_fallthru
        _
      // Predicated region
      $region57: #{tpu_custom_call.1} parent=51 // pred_check
        %p4104 = pneg %p183
      $region58: #{tpu_custom_call.1} parent=51 // pred_check_branch
        %4106 = sbr.rel (%p4104) target = $region60
      $region59: #{tpu_custom_call.1} parent=51 // pred_region
        %p4107 = scmp.lt.s32.totalorder %s19, 1
        %s4108 = scalar_select %p4107, %s19, 1
        %s4109 = smul.addr %s4108, 32
        %s4110 = smul.addr %s4109, 8
        %s4111 = scalar_lea.vmem %s6, %s4110
      $region60: #{tpu_custom_call.1} parent=51 // pred_fallthru
        _
    $region52: #{tpu_custom_call.1} parent=5 // pred_fallthru
      _
  $region6: #{tpu_custom_call.1} parent=0 // loop_footer
    %s17 = sadd.s32 1, %s13
  $region7: #{tpu_custom_call.1} parent=0 // loop_footer_branch
    %12 = sbr.rel target = $region3
  $region8: #{tpu_custom_call.1} parent=0 // loop_exit
    _

</llo_original>
